<compile_context>
chip_gen: v7x
topology: tpu7x:2x2x1
jax: 0.10.0
libtpu: 0.0.40
codegen_flags: <defaults>
</compile_context>

<pallas_src>
import functools

import jax
import jax.numpy as jnp
from jax.experimental import pallas as pl
from jax.experimental.pallas import tpu as pltpu

LANE = 128  # lane width; output-channel padding target for lane-dense stores


def _round_up(x, m):
    return (x + m - 1) // m * m


def _leaky(y, slope):
    # valid for 0 <= slope < 1 (DCGAN uses 0.2): cheaper than cmp+select+mul
    return jnp.maximum(y, slope * y)


# ----------------------------- Pallas kernels -----------------------------

def _conv_lrelu_kernel(x_ref, w_ref, o_ref, *, slope):
    """o = leaky_relu(x @ w).  x:[tm,K] bf16, w:[K,Cp] bf16, o:[tm,Cp] bf16."""
    acc = jnp.dot(x_ref[...], w_ref[...], preferred_element_type=jnp.float32)
    o_ref[...] = _leaky(acc, slope).astype(o_ref.dtype)


def _conv_bn_lrelu_kernel(x_ref, w_ref, g_ref, b_ref, o_ref, *, slope, inv_m, eps):
    """Fully fused conv-matmul -> batch-stats BN -> LeakyReLU (single block).

    Padded rows of x are zero, so they add nothing to sum/sumsq; inv_m uses the
    real row count.  Stats / apply are f32, store is bf16."""
    acc = jnp.dot(x_ref[...], w_ref[...], preferred_element_type=jnp.float32)
    mean = jnp.sum(acc, axis=0, keepdims=True) * inv_m
    var = jnp.sum(acc * acc, axis=0, keepdims=True) * inv_m - mean * mean
    var = jnp.maximum(var, 0.0)                       # guard 1-pass cancellation
    scale = g_ref[...] * jax.lax.rsqrt(var + eps)
    shift = b_ref[...] - mean * scale
    y = acc * scale + shift
    o_ref[...] = _leaky(y, slope).astype(o_ref.dtype)


def _conv_bn_lrelu_head_kernel(x_ref, w_ref, g_ref, b_ref, w5_ref, pool_ref,
                               o_ref, *, slope, inv_m, eps):
    """conv4 matmul -> BN -> LeakyReLU -> conv5 (full-field dot) -> sigmoid.

    w5_ref:[Mp,Cp] holds the conv5 weight replicated per spatial row,
    pool_ref:[N,Mp] sums the 16 spatial rows of each image.  Output [N,1]."""
    acc = jnp.dot(x_ref[...], w_ref[...], preferred_element_type=jnp.float32)
    mean = jnp.sum(acc, axis=0, keepdims=True) * inv_m
    var = jnp.sum(acc * acc, axis=0, keepdims=True) * inv_m - mean * mean
    var = jnp.maximum(var, 0.0)
    scale = g_ref[...] * jax.lax.rsqrt(var + eps)
    shift = b_ref[...] - mean * scale
    y = _leaky(acc * scale + shift, slope)            # [Mp, Cp] f32 (VMEM only)

    z = y * w5_ref[...]                               # conv5 partial products
    v = jnp.dot(pool_ref[...], z, preferred_element_type=jnp.float32)  # [N, Cp]
    v = jnp.sum(v, axis=1, keepdims=True)             # [N, 1]
    o_ref[...] = 1.0 / (1.0 + jnp.exp(-v))            # sigmoid


# ------------------------------ Pallas wrappers ----------------------------

def conv_lrelu(patches, w_flat, slope):
    """[M,K]bf16 @ [K,Cp]bf16 with fused LeakyReLU.  Returns [M,Cp] bf16."""
    m, k = patches.shape
    cp = w_flat.shape[1]
    mp = _round_up(m, 16)
    xp = jnp.pad(patches, ((0, mp - m), (0, 0)))
    # 2 parallel steps when M is large (feeds both v7x TCs); otherwise 1 step
    n_tiles = 2 if (mp >= 2048 and mp % 32 == 0) else 1
    tm = mp // n_tiles
    out = pl.pallas_call(
        functools.partial(_conv_lrelu_kernel, slope=slope),
        out_shape=jax.ShapeDtypeStruct((mp, cp), jnp.bfloat16),
        grid=(n_tiles,),
        in_specs=[pl.BlockSpec((tm, k), lambda i: (i, 0)),
                  pl.BlockSpec((k, cp), lambda i: (0, 0))],   # VMEM-resident
        out_specs=pl.BlockSpec((tm, cp), lambda i: (i, 0)),
        compiler_params=pltpu.CompilerParams(
            dimension_semantics=("parallel",)),
    )(xp, w_flat)
    return out[:m]


def conv_bn_lrelu(patches, w_flat, gamma_p, beta_p, slope, eps):
    """Single-block fused conv + BN(batch stats) + LeakyReLU.  bf16 out."""
    m, k = patches.shape
    cp = w_flat.shape[1]
    mp = _round_up(m, 16)
    xp = jnp.pad(patches, ((0, mp - m), (0, 0)))
    assert mp * cp * 4 <= 8 << 20, "BN layer too large for single-block fusion"
    out = pl.pallas_call(
        functools.partial(_conv_bn_lrelu_kernel, slope=slope,
                          inv_m=1.0 / float(m), eps=eps),
        out_shape=jax.ShapeDtypeStruct((mp, cp), jnp.bfloat16),
        grid=(1,),
        in_specs=[pl.BlockSpec((mp, k), lambda i: (0, 0)),
                  pl.BlockSpec((k, cp), lambda i: (0, 0)),
                  pl.BlockSpec((1, cp), lambda i: (0, 0)),
                  pl.BlockSpec((1, cp), lambda i: (0, 0))],
        out_specs=pl.BlockSpec((mp, cp), lambda i: (0, 0)),
        compiler_params=pltpu.CompilerParams(
            dimension_semantics=("arbitrary",)),
    )(xp, w_flat, gamma_p, beta_p)
    return out[:m]


def conv_bn_lrelu_conv5_sigmoid(patches, w_flat, gamma_p, beta_p, w5_full, pool,
                                slope, eps):
    """Single-block fused conv4 + BN + LeakyReLU + conv5 + sigmoid. [N,1] f32."""
    m, k = patches.shape
    cp = w_flat.shape[1]
    n = pool.shape[0]
    mp = _round_up(m, 16)
    xp = jnp.pad(patches, ((0, mp - m), (0, 0)))
    w5_p = jnp.pad(w5_full, ((0, mp - m), (0, 0)))
    pool_p = jnp.pad(pool, ((0, 0), (0, mp - m)))
    return pl.pallas_call(
        functools.partial(_conv_bn_lrelu_head_kernel, slope=slope,
                          inv_m=1.0 / float(m), eps=eps),
        out_shape=jax.ShapeDtypeStruct((n, 1), jnp.float32),
        grid=(1,),
        in_specs=[pl.BlockSpec((mp, k), lambda i: (0, 0)),
                  pl.BlockSpec((k, cp), lambda i: (0, 0)),
                  pl.BlockSpec((1, cp), lambda i: (0, 0)),
                  pl.BlockSpec((1, cp), lambda i: (0, 0)),
                  pl.BlockSpec((mp, cp), lambda i: (0, 0)),
                  pl.BlockSpec((n, mp), lambda i: (0, 0))],
        out_specs=pl.BlockSpec((n, 1), lambda i: (0, 0)),
        compiler_params=pltpu.CompilerParams(
            dimension_semantics=("arbitrary",)),
    )(xp, w_flat, gamma_p, beta_p, w5_p, pool_p)


# ------------------------------- JAX glue ----------------------------------

def im2col_nhwc(x, k, stride, pad):
    """x: [N,H,W,C] (bf16) -> patches [N*Ho*Wo, k*k*C] in (kh, kw, C) order."""
    n, h, w, c = x.shape
    xp = jnp.pad(x, ((0, 0), (pad, pad), (pad, pad), (0, 0)))
    ho = (h + 2 * pad - k) // stride + 1
    wo = (w + 2 * pad - k) // stride + 1
    cols = []
    for i in range(k):
        for j in range(k):
            cols.append(xp[:, i:i + stride * ho:stride,
                              j:j + stride * wo:stride, :])     # [n, ho, wo, c]
    col = jnp.stack(cols, axis=3)                                # [n,ho,wo,k*k,c]
    return col.reshape(n * ho * wo, k * k * c), ho, wo


def flatten_weight(w_oikk, c_pad):
    """torch [C_out,C_in,kh,kw] -> bf16 [kh*kw*C_in, C_pad] (zero-padded cols)."""
    c_out, c_in, kh, kw = w_oikk.shape
    w = jnp.transpose(w_oikk, (2, 3, 1, 0)).reshape(kh * kw * c_in, c_out)
    return jnp.pad(w, ((0, 0), (0, c_pad - c_out))).astype(jnp.bfloat16)


def conv_lrelu_layer(x_nhwc, w_oikk, slope):
    n = x_nhwc.shape[0]
    c_out, _, k, _ = w_oikk.shape
    patches, ho, wo = im2col_nhwc(x_nhwc, k, 2, 1)
    cp = _round_up(c_out, LANE)
    out = conv_lrelu(patches, flatten_weight(w_oikk, cp), slope)
    return out[:, :c_out].reshape(n, ho, wo, c_out)


def conv_bn_lrelu_layer(x_nhwc, w_oikk, gamma, beta, slope, eps=1e-5):
    n = x_nhwc.shape[0]
    c_out, _, k, _ = w_oikk.shape
    patches, ho, wo = im2col_nhwc(x_nhwc, k, 2, 1)
    cp = _round_up(c_out, LANE)
    gamma_p = jnp.pad(gamma, ((0, 0), (0, cp - c_out)))
    beta_p = jnp.pad(beta, ((0, 0), (0, cp - c_out)))
    out = conv_bn_lrelu(patches, flatten_weight(w_oikk, cp), gamma_p, beta_p,
                        slope, eps)
    return out[:, :c_out].reshape(n, ho, wo, c_out)


def conv_bn_lrelu_conv5_head(x_nhwc, w_oikk, gamma, beta, w5_oikk, slope,
                             eps=1e-5):
    """conv4 -> BN3 -> LeakyReLU -> conv5(k4,s1,p0) -> sigmoid, one kernel."""
    n = x_nhwc.shape[0]
    c_out, _, k, _ = w_oikk.shape
    patches, ho, wo = im2col_nhwc(x_nhwc, k, 2, 1)
    assert ho == 4 and wo == 4, "fused head expects 64x64 input (conv4 out 4x4)"
    cp = _round_up(c_out, LANE)
    gamma_p = jnp.pad(gamma, ((0, 0), (0, cp - c_out)))
    beta_p = jnp.pad(beta, ((0, 0), (0, cp - c_out)))

    # conv5 weight [1,C,4,4] -> [16,C] in (kh,kw) row order, padded lanes,
    # replicated per image so row r of the conv4 output pairs with w5[r % 16].
    w5_mat = jnp.transpose(w5_oikk[0], (1, 2, 0)).reshape(16, c_out)
    w5_mat = jnp.pad(w5_mat, ((0, 0), (0, cp - c_out))).astype(jnp.float32)
    w5_full = jnp.tile(w5_mat, (n, 1))                              # [n*16, cp]
    pool = jnp.repeat(jnp.eye(n, dtype=jnp.float32), 16, axis=1)    # [n, n*16]

    return conv_bn_lrelu_conv5_sigmoid(patches, flatten_weight(w_oikk, cp),
                                       gamma_p, beta_p, w5_full, pool, slope, eps)


# ----------------------------- Discriminator -------------------------------

class Config:
    relu_slope = 0.2
    input_channels = 3
    num_filt_d = 8


def init_params(key, cfg):
    """DCGAN weights_init: conv ~ N(0,0.02); BN gamma ~ N(1,0.02), beta=0."""
    nf = cfg.num_filt_d
    ks = jax.random.split(key, 8)

    def conv_w(k, c_out, c_in):
        return 0.02 * jax.random.normal(k, (c_out, c_in, 4, 4), jnp.float32)

    def bn_g(k, c):
        return 1.0 + 0.02 * jax.random.normal(k, (1, c), jnp.float32)

    return {
        "conv1": conv_w(ks[0], nf, cfg.input_channels),
        "conv2": conv_w(ks[1], nf * 2, nf),
        "conv3": conv_w(ks[2], nf * 4, nf * 2),
        "conv4": conv_w(ks[3], nf * 8, nf * 4),
        "conv5": conv_w(ks[4], 1, nf * 8),
        "bn1_g": bn_g(ks[5], nf * 2), "bn1_b": jnp.zeros((1, nf * 2), jnp.float32),
        "bn2_g": bn_g(ks[6], nf * 4), "bn2_b": jnp.zeros((1, nf * 4), jnp.float32),
        "bn3_g": bn_g(ks[7], nf * 8), "bn3_b": jnp.zeros((1, nf * 8), jnp.float32),
    }


def discriminator_forward(params, x_nchw, cfg):
    slope = cfg.relu_slope

    # single layout change + single bf16 cast at the boundary (NCHW -> NHWC)
    x = jnp.transpose(x_nchw, (0, 2, 3, 1)).astype(jnp.bfloat16)

    # conv1 + LeakyReLU (one kernel)
    x = conv_lrelu_layer(x, params["conv1"], slope)

    # conv2/3 -> BN -> LeakyReLU: one fully-fused kernel each
    x = conv_bn_lrelu_layer(x, params["conv2"], params["bn1_g"], params["bn1_b"], slope)
    x = conv_bn_lrelu_layer(x, params["conv3"], params["bn2_g"], params["bn2_b"], slope)

    # conv4 -> BN -> LeakyReLU -> conv5 -> sigmoid: one fused kernel, [N,1] out
    out = conv_bn_lrelu_conv5_head(x, params["conv4"], params["bn3_g"],
                                   params["bn3_b"], params["conv5"], slope)

    return out.reshape(-1, 1).squeeze(1)            # == .view(-1,1).squeeze(1)


if __name__ == "__main__":
    cfg = Config()
    key = jax.random.PRNGKey(0)
    k_param, k_x = jax.random.split(key)

    params = init_params(k_param, cfg)
    # DCGAN discriminator needs spatial 64 (four stride-2 convs, then k=4 -> 1x1).
    x = jax.random.normal(k_x, (2, cfg.input_channels, 64, 64), jnp.float32)

    fwd = jax.jit(lambda p, xx: discriminator_forward(p, xx, cfg))
    out = jax.block_until_ready(fwd(params, x))

    assert out.shape == (2,), out.shape
    assert bool(jnp.all((out >= 0.0) & (out <= 1.0)))
    print("KERNEL_OK")
</pallas_src>

<mosaic_0001>
module attributes {stable_mosaic.version = 11 : i64} {
  func.func @_conv_lrelu_kernel(%arg0: i32, %arg1: memref<1024x48xbf16, #tpu.memory_space<vmem>>, %arg2: memref<48x128xbf16, #tpu.memory_space<vmem>>, %arg3: memref<1024x128xbf16, #tpu.memory_space<vmem>>) attributes {dimension_semantics = [#tpu.dimension_semantics<parallel>], iteration_bounds = array<i64: 2>, scalar_prefetch = 0 : i64, scratch_operands = 0 : i64, tpu.core_type = #tpu.core_type<tc>, window_params = [{transform_indices = @transform_0, window_bounds = array<i64: 1024, 48>}, {pipeline_mode = #tpu.pipeline_mode<synchronous>, transform_indices = @transform_1, window_bounds = array<i64: 48, 128>}, {transform_indices = @transform_2, window_bounds = array<i64: 1024, 128>}]} {
    %c0 = arith.constant 0 : index
    %c0_0 = arith.constant 0 : index
    %0 = vector.load %arg1[%c0, %c0_0] : memref<1024x48xbf16, #tpu.memory_space<vmem>>, vector<1024x48xbf16>
    %c0_1 = arith.constant 0 : index
    %c0_2 = arith.constant 0 : index
    %1 = vector.load %arg2[%c0_1, %c0_2] : memref<48x128xbf16, #tpu.memory_space<vmem>>, vector<48x128xbf16>
    %cst = arith.constant dense<0.000000e+00> : vector<1024x128xf32>
    %2 = tpu.matmul %0, %1, %cst {dimension_numbers = #tpu.dot_dimension_numbers<[1], [0], [0], [1], [0, 0, 1, 1], [], []>} : vector<1024x48xbf16>, vector<48x128xbf16>, vector<1024x128xf32> -> vector<1024x128xf32>
    %cst_3 = arith.constant 2.000000e-01 : f32
    %3 = vector.broadcast %cst_3 : f32 to vector<1024x128xf32>
    %4 = arith.mulf %3, %2 : vector<1024x128xf32>
    %5 = arith.maximumf %2, %4 : vector<1024x128xf32>
    %6 = arith.truncf %5 : vector<1024x128xf32> to vector<1024x128xbf16>
    %c0_4 = arith.constant 0 : index
    %c0_5 = arith.constant 0 : index
    %7 = vector.load %arg3[%c0_4, %c0_5] : memref<1024x128xbf16, #tpu.memory_space<vmem>>, vector<1024x128xbf16>
    tpu.vector_store %arg3[%c0_4, %c0_5], %6 {strides = array<i32>} : memref<1024x128xbf16, #tpu.memory_space<vmem>>, vector<1024x128xbf16>,
    return
  }
  func.func @transform_0(%arg0: i32) -> (i32, i32) {
    %c0_i32 = arith.constant 0 : i32
    %c0_i32_0 = arith.constant 0 : i32
    return %arg0, %c0_i32 : i32, i32
  }
  func.func @transform_1(%arg0: i32) -> (i32, i32) {
    %c0_i32 = arith.constant 0 : i32
    %c0_i32_0 = arith.constant 0 : i32
    %c0_i32_1 = arith.constant 0 : i32
    return %c0_i32, %c0_i32_0 : i32, i32
  }
  func.func @transform_2(%arg0: i32) -> (i32, i32) {
    %c0_i32 = arith.constant 0 : i32
    %c0_i32_0 = arith.constant 0 : i32
    return %arg0, %c0_i32 : i32, i32
  }
}

module attributes {stable_mosaic.version = 11 : i64} {
  func.func @_conv_bn_lrelu_kernel(%arg0: i32, %arg1: memref<512x128xbf16, #tpu.memory_space<vmem>>, %arg2: memref<128x128xbf16, #tpu.memory_space<vmem>>, %arg3: memref<1x128xf32, #tpu.memory_space<vmem>>, %arg4: memref<1x128xf32, #tpu.memory_space<vmem>>, %arg5: memref<512x128xbf16, #tpu.memory_space<vmem>>) attributes {dimension_semantics = [#tpu.dimension_semantics<arbitrary>], iteration_bounds = array<i64: 1>, scalar_prefetch = 0 : i64, scratch_operands = 0 : i64, tpu.core_type = #tpu.core_type<tc>, window_params = [{pipeline_mode = #tpu.pipeline_mode<synchronous>, transform_indices = @transform_0, window_bounds = array<i64: 512, 128>}, {pipeline_mode = #tpu.pipeline_mode<synchronous>, transform_indices = @transform_1, window_bounds = array<i64: 128, 128>}, {pipeline_mode = #tpu.pipeline_mode<synchronous>, transform_indices = @transform_2, window_bounds = array<i64: 1, 128>}, {pipeline_mode = #tpu.pipeline_mode<synchronous>, transform_indices = @transform_3, window_bounds = array<i64: 1, 128>}, {pipeline_mode = #tpu.pipeline_mode<synchronous>, transform_indices = @transform_4, window_bounds = array<i64: 512, 128>}]} {
    %c0 = arith.constant 0 : index
    %c0_0 = arith.constant 0 : index
    %0 = vector.load %arg1[%c0, %c0_0] : memref<512x128xbf16, #tpu.memory_space<vmem>>, vector<512x128xbf16>
    %c0_1 = arith.constant 0 : index
    %c0_2 = arith.constant 0 : index
    %1 = vector.load %arg2[%c0_1, %c0_2] : memref<128x128xbf16, #tpu.memory_space<vmem>>, vector<128x128xbf16>
    %cst = arith.constant dense<0.000000e+00> : vector<512x128xf32>
    %2 = tpu.matmul %0, %1, %cst {dimension_numbers = #tpu.dot_dimension_numbers<[1], [0], [0], [1], [0, 0, 1, 1], [], []>} : vector<512x128xbf16>, vector<128x128xbf16>, vector<512x128xf32> -> vector<512x128xf32>
    %cst_3 = arith.constant dense<0.000000e+00> : vector<128xf32>
    %3 = vector.multi_reduction <add>, %2, %cst_3 [0] : vector<512x128xf32> to vector<128xf32>
    %4 = vector.shape_cast %3 : vector<128xf32> to vector<1x128xf32>
    %cst_4 = arith.constant 0.001953125 : f32
    %5 = vector.broadcast %cst_4 : f32 to vector<1x128xf32>
    %6 = arith.mulf %4, %5 : vector<1x128xf32>
    %7 = arith.mulf %2, %2 : vector<512x128xf32>
    %cst_5 = arith.constant dense<0.000000e+00> : vector<128xf32>
    %8 = vector.multi_reduction <add>, %7, %cst_5 [0] : vector<512x128xf32> to vector<128xf32>
    %9 = vector.shape_cast %8 : vector<128xf32> to vector<1x128xf32>
    %cst_6 = arith.constant 0.001953125 : f32
    %10 = vector.broadcast %cst_6 : f32 to vector<1x128xf32>
    %11 = arith.mulf %9, %10 : vector<1x128xf32>
    %12 = arith.mulf %6, %6 : vector<1x128xf32>
    %13 = arith.subf %11, %12 : vector<1x128xf32>
    %cst_7 = arith.constant 0.000000e+00 : f32
    %14 = vector.broadcast %cst_7 : f32 to vector<1x128xf32>
    %15 = arith.maximumf %13, %14 : vector<1x128xf32>
    %c0_8 = arith.constant 0 : index
    %c0_9 = arith.constant 0 : index
    %16 = vector.load %arg3[%c0_8, %c0_9] : memref<1x128xf32, #tpu.memory_space<vmem>>, vector<1x128xf32>
    %cst_10 = arith.constant 9.99999974E-6 : f32
    %17 = vector.broadcast %cst_10 : f32 to vector<1x128xf32>
    %18 = arith.addf %15, %17 : vector<1x128xf32>
    %19 = math.rsqrt %18 : vector<1x128xf32>
    %20 = arith.mulf %16, %19 : vector<1x128xf32>
    %c0_11 = arith.constant 0 : index
    %c0_12 = arith.constant 0 : index
    %21 = vector.load %arg4[%c0_11, %c0_12] : memref<1x128xf32, #tpu.memory_space<vmem>>, vector<1x128xf32>
    %22 = arith.mulf %6, %20 : vector<1x128xf32>
    %23 = arith.subf %21, %22 : vector<1x128xf32>
    %24 = vector.broadcast %20 : vector<1x128xf32> to vector<512x128xf32>
    %25 = arith.mulf %2, %24 : vector<512x128xf32>
    %26 = vector.broadcast %23 : vector<1x128xf32> to vector<512x128xf32>
    %27 = arith.addf %25, %26 : vector<512x128xf32>
    %cst_13 = arith.constant 2.000000e-01 : f32
    %28 = vector.broadcast %cst_13 : f32 to vector<512x128xf32>
    %29 = arith.mulf %28, %27 : vector<512x128xf32>
    %30 = arith.maximumf %27, %29 : vector<512x128xf32>
    %31 = arith.truncf %30 : vector<512x128xf32> to vector<512x128xbf16>
    %c0_14 = arith.constant 0 : index
    %c0_15 = arith.constant 0 : index
    %32 = vector.load %arg5[%c0_14, %c0_15] : memref<512x128xbf16, #tpu.memory_space<vmem>>, vector<512x128xbf16>
    tpu.vector_store %arg5[%c0_14, %c0_15], %31 {strides = array<i32>} : memref<512x128xbf16, #tpu.memory_space<vmem>>, vector<512x128xbf16>,
    return
  }
  func.func @transform_0(%arg0: i32) -> (i32, i32) {
    %c0_i32 = arith.constant 0 : i32
    %c0_i32_0 = arith.constant 0 : i32
    %c0_i32_1 = arith.constant 0 : i32
    return %c0_i32, %c0_i32_0 : i32, i32
  }
  func.func @transform_1(%arg0: i32) -> (i32, i32) {
    %c0_i32 = arith.constant 0 : i32
    %c0_i32_0 = arith.constant 0 : i32
    %c0_i32_1 = arith.constant 0 : i32
    return %c0_i32, %c0_i32_0 : i32, i32
  }
  func.func @transform_2(%arg0: i32) -> (i32, i32) {
    %c0_i32 = arith.constant 0 : i32
    %c0_i32_0 = arith.constant 0 : i32
    %c0_i32_1 = arith.constant 0 : i32
    return %c0_i32, %c0_i32_0 : i32, i32
  }
  func.func @transform_3(%arg0: i32) -> (i32, i32) {
    %c0_i32 = arith.constant 0 : i32
    %c0_i32_0 = arith.constant 0 : i32
    %c0_i32_1 = arith.constant 0 : i32
    return %c0_i32, %c0_i32_0 : i32, i32
  }
  func.func @transform_4(%arg0: i32) -> (i32, i32) {
    %c0_i32 = arith.constant 0 : i32
    %c0_i32_0 = arith.constant 0 : i32
    %c0_i32_1 = arith.constant 0 : i32
    return %c0_i32, %c0_i32_0 : i32, i32
  }
}

module attributes {stable_mosaic.version = 11 : i64} {
  func.func @_conv_bn_lrelu_kernel(%arg0: i32, %arg1: memref<128x256xbf16, #tpu.memory_space<vmem>>, %arg2: memref<256x128xbf16, #tpu.memory_space<vmem>>, %arg3: memref<1x128xf32, #tpu.memory_space<vmem>>, %arg4: memref<1x128xf32, #tpu.memory_space<vmem>>, %arg5: memref<128x128xbf16, #tpu.memory_space<vmem>>) attributes {dimension_semantics = [#tpu.dimension_semantics<arbitrary>], iteration_bounds = array<i64: 1>, scalar_prefetch = 0 : i64, scratch_operands = 0 : i64, tpu.core_type = #tpu.core_type<tc>, window_params = [{pipeline_mode = #tpu.pipeline_mode<synchronous>, transform_indices = @transform_0, window_bounds = array<i64: 128, 256>}, {pipeline_mode = #tpu.pipeline_mode<synchronous>, transform_indices = @transform_1, window_bounds = array<i64: 256, 128>}, {pipeline_mode = #tpu.pipeline_mode<synchronous>, transform_indices = @transform_2, window_bounds = array<i64: 1, 128>}, {pipeline_mode = #tpu.pipeline_mode<synchronous>, transform_indices = @transform_3, window_bounds = array<i64: 1, 128>}, {pipeline_mode = #tpu.pipeline_mode<synchronous>, transform_indices = @transform_4, window_bounds = array<i64: 128, 128>}]} {
    %c0 = arith.constant 0 : index
    %c0_0 = arith.constant 0 : index
    %0 = vector.load %arg1[%c0, %c0_0] : memref<128x256xbf16, #tpu.memory_space<vmem>>, vector<128x256xbf16>
    %c0_1 = arith.constant 0 : index
    %c0_2 = arith.constant 0 : index
    %1 = vector.load %arg2[%c0_1, %c0_2] : memref<256x128xbf16, #tpu.memory_space<vmem>>, vector<256x128xbf16>
    %cst = arith.constant dense<0.000000e+00> : vector<128x128xf32>
    %2 = tpu.matmul %0, %1, %cst {dimension_numbers = #tpu.dot_dimension_numbers<[1], [0], [0], [1], [0, 0, 1, 1], [], []>} : vector<128x256xbf16>, vector<256x128xbf16>, vector<128x128xf32> -> vector<128x128xf32>
    %cst_3 = arith.constant dense<0.000000e+00> : vector<128xf32>
    %3 = vector.multi_reduction <add>, %2, %cst_3 [0] : vector<128x128xf32> to vector<128xf32>
    %4 = vector.shape_cast %3 : vector<128xf32> to vector<1x128xf32>
    %cst_4 = arith.constant 7.812500e-03 : f32
    %5 = vector.broadcast %cst_4 : f32 to vector<1x128xf32>
    %6 = arith.mulf %4, %5 : vector<1x128xf32>
    %7 = arith.mulf %2, %2 : vector<128x128xf32>
    %cst_5 = arith.constant dense<0.000000e+00> : vector<128xf32>
    %8 = vector.multi_reduction <add>, %7, %cst_5 [0] : vector<128x128xf32> to vector<128xf32>
    %9 = vector.shape_cast %8 : vector<128xf32> to vector<1x128xf32>
    %cst_6 = arith.constant 7.812500e-03 : f32
    %10 = vector.broadcast %cst_6 : f32 to vector<1x128xf32>
    %11 = arith.mulf %9, %10 : vector<1x128xf32>
    %12 = arith.mulf %6, %6 : vector<1x128xf32>
    %13 = arith.subf %11, %12 : vector<1x128xf32>
    %cst_7 = arith.constant 0.000000e+00 : f32
    %14 = vector.broadcast %cst_7 : f32 to vector<1x128xf32>
    %15 = arith.maximumf %13, %14 : vector<1x128xf32>
    %c0_8 = arith.constant 0 : index
    %c0_9 = arith.constant 0 : index
    %16 = vector.load %arg3[%c0_8, %c0_9] : memref<1x128xf32, #tpu.memory_space<vmem>>, vector<1x128xf32>
    %cst_10 = arith.constant 9.99999974E-6 : f32
    %17 = vector.broadcast %cst_10 : f32 to vector<1x128xf32>
    %18 = arith.addf %15, %17 : vector<1x128xf32>
    %19 = math.rsqrt %18 : vector<1x128xf32>
    %20 = arith.mulf %16, %19 : vector<1x128xf32>
    %c0_11 = arith.constant 0 : index
    %c0_12 = arith.constant 0 : index
    %21 = vector.load %arg4[%c0_11, %c0_12] : memref<1x128xf32, #tpu.memory_space<vmem>>, vector<1x128xf32>
    %22 = arith.mulf %6, %20 : vector<1x128xf32>
    %23 = arith.subf %21, %22 : vector<1x128xf32>
    %24 = vector.broadcast %20 : vector<1x128xf32> to vector<128x128xf32>
    %25 = arith.mulf %2, %24 : vector<128x128xf32>
    %26 = vector.broadcast %23 : vector<1x128xf32> to vector<128x128xf32>
    %27 = arith.addf %25, %26 : vector<128x128xf32>
    %cst_13 = arith.constant 2.000000e-01 : f32
    %28 = vector.broadcast %cst_13 : f32 to vector<128x128xf32>
    %29 = arith.mulf %28, %27 : vector<128x128xf32>
    %30 = arith.maximumf %27, %29 : vector<128x128xf32>
    %31 = arith.truncf %30 : vector<128x128xf32> to vector<128x128xbf16>
    %c0_14 = arith.constant 0 : index
    %c0_15 = arith.constant 0 : index
    %32 = vector.load %arg5[%c0_14, %c0_15] : memref<128x128xbf16, #tpu.memory_space<vmem>>, vector<128x128xbf16>
    tpu.vector_store %arg5[%c0_14, %c0_15], %31 {strides = array<i32>} : memref<128x128xbf16, #tpu.memory_space<vmem>>, vector<128x128xbf16>,
    return
  }
  func.func @transform_0(%arg0: i32) -> (i32, i32) {
    %c0_i32 = arith.constant 0 : i32
    %c0_i32_0 = arith.constant 0 : i32
    %c0_i32_1 = arith.constant 0 : i32
    return %c0_i32, %c0_i32_0 : i32, i32
  }
  func.func @transform_1(%arg0: i32) -> (i32, i32) {
    %c0_i32 = arith.constant 0 : i32
    %c0_i32_0 = arith.constant 0 : i32
    %c0_i32_1 = arith.constant 0 : i32
    return %c0_i32, %c0_i32_0 : i32, i32
  }
  func.func @transform_2(%arg0: i32) -> (i32, i32) {
    %c0_i32 = arith.constant 0 : i32
    %c0_i32_0 = arith.constant 0 : i32
    %c0_i32_1 = arith.constant 0 : i32
    return %c0_i32, %c0_i32_0 : i32, i32
  }
  func.func @transform_3(%arg0: i32) -> (i32, i32) {
    %c0_i32 = arith.constant 0 : i32
    %c0_i32_0 = arith.constant 0 : i32
    %c0_i32_1 = arith.constant 0 : i32
    return %c0_i32, %c0_i32_0 : i32, i32
  }
  func.func @transform_4(%arg0: i32) -> (i32, i32) {
    %c0_i32 = arith.constant 0 : i32
    %c0_i32_0 = arith.constant 0 : i32
    %c0_i32_1 = arith.constant 0 : i32
    return %c0_i32, %c0_i32_0 : i32, i32
  }
}

module attributes {stable_mosaic.version = 11 : i64} {
  func.func @_conv_bn_lrelu_head_kernel(%arg0: i32, %arg1: memref<32x512xbf16, #tpu.memory_space<vmem>>, %arg2: memref<512x128xbf16, #tpu.memory_space<vmem>>, %arg3: memref<1x128xf32, #tpu.memory_space<vmem>>, %arg4: memref<1x128xf32, #tpu.memory_space<vmem>>, %arg5: memref<32x128xf32, #tpu.memory_space<vmem>>, %arg6: memref<2x32xf32, #tpu.memory_space<vmem>>, %arg7: memref<2x1xf32, #tpu.memory_space<vmem>>) attributes {dimension_semantics = [#tpu.dimension_semantics<arbitrary>], iteration_bounds = array<i64: 1>, scalar_prefetch = 0 : i64, scratch_operands = 0 : i64, tpu.core_type = #tpu.core_type<tc>, window_params = [{pipeline_mode = #tpu.pipeline_mode<synchronous>, transform_indices = @transform_0, window_bounds = array<i64: 32, 512>}, {pipeline_mode = #tpu.pipeline_mode<synchronous>, transform_indices = @transform_1, window_bounds = array<i64: 512, 128>}, {pipeline_mode = #tpu.pipeline_mode<synchronous>, transform_indices = @transform_2, window_bounds = array<i64: 1, 128>}, {pipeline_mode = #tpu.pipeline_mode<synchronous>, transform_indices = @transform_3, window_bounds = array<i64: 1, 128>}, {pipeline_mode = #tpu.pipeline_mode<synchronous>, transform_indices = @transform_4, window_bounds = array<i64: 32, 128>}, {pipeline_mode = #tpu.pipeline_mode<synchronous>, transform_indices = @transform_5, window_bounds = array<i64: 2, 32>}, {pipeline_mode = #tpu.pipeline_mode<synchronous>, transform_indices = @transform_6, window_bounds = array<i64: 2, 1>}]} {
    %c0 = arith.constant 0 : index
    %c0_0 = arith.constant 0 : index
    %0 = vector.load %arg1[%c0, %c0_0] : memref<32x512xbf16, #tpu.memory_space<vmem>>, vector<32x512xbf16>
    %c0_1 = arith.constant 0 : index
    %c0_2 = arith.constant 0 : index
    %1 = vector.load %arg2[%c0_1, %c0_2] : memref<512x128xbf16, #tpu.memory_space<vmem>>, vector<512x128xbf16>
    %cst = arith.constant dense<0.000000e+00> : vector<32x128xf32>
    %2 = tpu.matmul %0, %1, %cst {dimension_numbers = #tpu.dot_dimension_numbers<[1], [0], [0], [1], [0, 0, 1, 1], [], []>} : vector<32x512xbf16>, vector<512x128xbf16>, vector<32x128xf32> -> vector<32x128xf32>
    %cst_3 = arith.constant dense<0.000000e+00> : vector<128xf32>
    %3 = vector.multi_reduction <add>, %2, %cst_3 [0] : vector<32x128xf32> to vector<128xf32>
    %4 = vector.shape_cast %3 : vector<128xf32> to vector<1x128xf32>
    %cst_4 = arith.constant 3.125000e-02 : f32
    %5 = vector.broadcast %cst_4 : f32 to vector<1x128xf32>
    %6 = arith.mulf %4, %5 : vector<1x128xf32>
    %7 = arith.mulf %2, %2 : vector<32x128xf32>
    %cst_5 = arith.constant dense<0.000000e+00> : vector<128xf32>
    %8 = vector.multi_reduction <add>, %7, %cst_5 [0] : vector<32x128xf32> to vector<128xf32>
    %9 = vector.shape_cast %8 : vector<128xf32> to vector<1x128xf32>
    %cst_6 = arith.constant 3.125000e-02 : f32
    %10 = vector.broadcast %cst_6 : f32 to vector<1x128xf32>
    %11 = arith.mulf %9, %10 : vector<1x128xf32>
    %12 = arith.mulf %6, %6 : vector<1x128xf32>
    %13 = arith.subf %11, %12 : vector<1x128xf32>
    %cst_7 = arith.constant 0.000000e+00 : f32
    %14 = vector.broadcast %cst_7 : f32 to vector<1x128xf32>
    %15 = arith.maximumf %13, %14 : vector<1x128xf32>
    %c0_8 = arith.constant 0 : index
    %c0_9 = arith.constant 0 : index
    %16 = vector.load %arg3[%c0_8, %c0_9] : memref<1x128xf32, #tpu.memory_space<vmem>>, vector<1x128xf32>
    %cst_10 = arith.constant 9.99999974E-6 : f32
    %17 = vector.broadcast %cst_10 : f32 to vector<1x128xf32>
    %18 = arith.addf %15, %17 : vector<1x128xf32>
    %19 = math.rsqrt %18 : vector<1x128xf32>
    %20 = arith.mulf %16, %19 : vector<1x128xf32>
    %c0_11 = arith.constant 0 : index
    %c0_12 = arith.constant 0 : index
    %21 = vector.load %arg4[%c0_11, %c0_12] : memref<1x128xf32, #tpu.memory_space<vmem>>, vector<1x128xf32>
    %22 = arith.mulf %6, %20 : vector<1x128xf32>
    %23 = arith.subf %21, %22 : vector<1x128xf32>
    %24 = vector.broadcast %20 : vector<1x128xf32> to vector<32x128xf32>
    %25 = arith.mulf %2, %24 : vector<32x128xf32>
    %26 = vector.broadcast %23 : vector<1x128xf32> to vector<32x128xf32>
    %27 = arith.addf %25, %26 : vector<32x128xf32>
    %cst_13 = arith.constant 2.000000e-01 : f32
    %28 = vector.broadcast %cst_13 : f32 to vector<32x128xf32>
    %29 = arith.mulf %28, %27 : vector<32x128xf32>
    %30 = arith.maximumf %27, %29 : vector<32x128xf32>
    %c0_14 = arith.constant 0 : index
    %c0_15 = arith.constant 0 : index
    %31 = vector.load %arg5[%c0_14, %c0_15] : memref<32x128xf32, #tpu.memory_space<vmem>>, vector<32x128xf32>
    %32 = arith.mulf %30, %31 : vector<32x128xf32>
    %c0_16 = arith.constant 0 : index
    %c0_17 = arith.constant 0 : index
    %33 = vector.load %arg6[%c0_16, %c0_17] : memref<2x32xf32, #tpu.memory_space<vmem>>, vector<2x32xf32>
    %cst_18 = arith.constant dense<0.000000e+00> : vector<2x128xf32>
    %34 = tpu.matmul %33, %32, %cst_18 {dimension_numbers = #tpu.dot_dimension_numbers<[1], [0], [0], [1], [0, 0, 1, 1], [], []>} : vector<2x32xf32>, vector<32x128xf32>, vector<2x128xf32> -> vector<2x128xf32>
    %cst_19 = arith.constant dense<0.000000e+00> : vector<2xf32>
    %35 = vector.multi_reduction <add>, %34, %cst_19 [1] : vector<2x128xf32> to vector<2xf32>
    %36 = vector.shape_cast %35 : vector<2xf32> to vector<2x1xf32>
    %cst_20 = arith.constant 0.000000e+00 : f32
    %37 = vector.broadcast %cst_20 : f32 to vector<2x1xf32>
    %38 = arith.subf %37, %36 : vector<2x1xf32>
    %39 = math.exp %38 : vector<2x1xf32>
    %cst_21 = arith.constant 1.000000e+00 : f32
    %40 = vector.broadcast %cst_21 : f32 to vector<2x1xf32>
    %41 = arith.addf %40, %39 : vector<2x1xf32>
    %cst_22 = arith.constant 1.000000e+00 : f32
    %42 = vector.broadcast %cst_22 : f32 to vector<2x1xf32>
    %43 = arith.divf %42, %41 : vector<2x1xf32>
    %c0_23 = arith.constant 0 : index
    %c0_24 = arith.constant 0 : index
    %44 = vector.load %arg7[%c0_23, %c0_24] : memref<2x1xf32, #tpu.memory_space<vmem>>, vector<2x1xf32>
    tpu.vector_store %arg7[%c0_23, %c0_24], %43 {strides = array<i32>} : memref<2x1xf32, #tpu.memory_space<vmem>>, vector<2x1xf32>,
    return
  }
  func.func @transform_0(%arg0: i32) -> (i32, i32) {
    %c0_i32 = arith.constant 0 : i32
    %c0_i32_0 = arith.constant 0 : i32
    %c0_i32_1 = arith.constant 0 : i32
    return %c0_i32, %c0_i32_0 : i32, i32
  }
  func.func @transform_1(%arg0: i32) -> (i32, i32) {
    %c0_i32 = arith.constant 0 : i32
    %c0_i32_0 = arith.constant 0 : i32
    %c0_i32_1 = arith.constant 0 : i32
    return %c0_i32, %c0_i32_0 : i32, i32
  }
  func.func @transform_2(%arg0: i32) -> (i32, i32) {
    %c0_i32 = arith.constant 0 : i32
    %c0_i32_0 = arith.constant 0 : i32
    %c0_i32_1 = arith.constant 0 : i32
    return %c0_i32, %c0_i32_0 : i32, i32
  }
  func.func @transform_3(%arg0: i32) -> (i32, i32) {
    %c0_i32 = arith.constant 0 : i32
    %c0_i32_0 = arith.constant 0 : i32
    %c0_i32_1 = arith.constant 0 : i32
    return %c0_i32, %c0_i32_0 : i32, i32
  }
  func.func @transform_4(%arg0: i32) -> (i32, i32) {
    %c0_i32 = arith.constant 0 : i32
    %c0_i32_0 = arith.constant 0 : i32
    %c0_i32_1 = arith.constant 0 : i32
    return %c0_i32, %c0_i32_0 : i32, i32
  }
  func.func @transform_5(%arg0: i32) -> (i32, i32) {
    %c0_i32 = arith.constant 0 : i32
    %c0_i32_0 = arith.constant 0 : i32
    %c0_i32_1 = arith.constant 0 : i32
    return %c0_i32, %c0_i32_0 : i32, i32
  }
  func.func @transform_6(%arg0: i32) -> (i32, i32) {
    %c0_i32 = arith.constant 0 : i32
    %c0_i32_0 = arith.constant 0 : i32
    %c0_i32_1 = arith.constant 0 : i32
    return %c0_i32, %c0_i32_0 : i32, i32
  }
}

</mosaic_0001>

<llo_original>
// kernel: _lambda_.4
$region0: #{_lambda_.4}
  #allocation0 [shape = 'u32[]', space=smem, size = 0x4, offset = 0x4, fixed_abs, tag = 'smem constant byte address 0x4 - core index']
  #allocation1 [shape = 'u32[144,128]{1,0:T(1,128)}', space=vmem, size = 0x12000, scoped, tag = 'internal scratch']
  %s0 = inlined_call_operand.vmem [shape: bf16[2048,48], index: 0, kind: input, shape index: {}]
  %s1 = inlined_call_operand.vmem [shape: bf16[48,128], index: 1, kind: input, shape index: {}]
  %s2 = inlined_call_operand.vmem [shape: bf16[2048,128], index: 2, kind: output, shape index: {}]
  %s3 = sld [smem:[#allocation0]]
  $region41: #{_lambda_.4} parent=0
    _
  %s5 = ssub.s32 1, %s3
  %s6 = scalar_select 0, %s5, %s3
  loop: start=0, step=1, limit=4
  $region2: #{_lambda_.4} parent=0 // loop_pre_header
    _
  $region3: #{_lambda_.4} parent=0 // loop_header
    %s8 = sphi 0, %s12
    %p9 = scmp.ge.s32.totalorder %s8, 4
    %s18 = sphi 0, %s20
    %s21 = sphi 0, %s18
    %s22 = sphi 0, %s21
    %s38 = sphi 0, %s22
    %s42 = sphi 0, %s42
    %s44 = sphi 0, %s42
    %s45 = sphi 0, %s44
    %s59 = sphi 0, %s45
    %s65 = sphi 0, %s67
    %s68 = sphi 0, %s65
    %s69 = sphi 0, %s68
    %s85 = sphi 0, %s69
  $region4: #{_lambda_.4} parent=0 // loop_header_branch
    %11 = sbr.rel (%p9) target = $region8
  $region5: #{_lambda_.4} parent=0 // loop_body
    %s13 = ssub.s32 %s8, 1
    %s14 = ssub.s32 %s8, 2
    %s15 = sadd.s32 %s8, 1
    %s16 = ssub.s32 %s8, %s15
    %p17 = scmp.eq.s32.totalorder %s16, 0
    %s19 = sadd.s32 %s18, 1
    %s20 = scalar_select %p17, %s18, %s19
    %p23 = pneg %p17
    %p24 = scmp.eq.s32.totalorder %s8, 1
    %p25 = por %p23, %p24
    %p26 = scmp.ne.s32.totalorder %s18, %s21
    %p27 = scmp.eq.s32.totalorder %s8, 0
    %p28 = por %p26, %p27
    %p29 = scmp.ne.s32.totalorder %s18, %s21
    %p30 = scmp.eq.s32.totalorder %s13, 1
    %p31 = por %p29, %p30
    %p32 = scmp.ne.s32.totalorder %s21, %s22
    %p33 = scmp.eq.s32.totalorder %s13, 0
    %p34 = por %p32, %p33
    %p35 = scmp.ne.s32.totalorder %s21, %s22
    %p36 = scmp.eq.s32.totalorder %s14, 1
    %p37 = por %p35, %p36
    %p39 = scmp.ne.s32.totalorder %s22, %s38
    %p40 = scmp.eq.s32.totalorder %s14, 0
    %p41 = por %p39, %p40
    %s43 = sadd.s32 %s42, 1
    %p46 = scmp.eq.s32.totalorder %s8, 1
    %p47 = scmp.ne.s32.totalorder %s42, %s44
    %p48 = scmp.eq.s32.totalorder %s8, 0
    %p49 = por %p47, %p48
    %p50 = scmp.ne.s32.totalorder %s42, %s44
    %p51 = scmp.eq.s32.totalorder %s13, 1
    %p52 = por %p50, %p51
    %p53 = scmp.ne.s32.totalorder %s44, %s45
    %p54 = scmp.eq.s32.totalorder %s13, 0
    %p55 = por %p53, %p54
    %p56 = scmp.ne.s32.totalorder %s44, %s45
    %p57 = scmp.eq.s32.totalorder %s14, 1
    %p58 = por %p56, %p57
    %p60 = scmp.ne.s32.totalorder %s45, %s59
    %p61 = scmp.eq.s32.totalorder %s14, 0
    %p62 = por %p60, %p61
    %s63 = ssub.s32 %s8, %s15
    %p64 = scmp.eq.s32.totalorder %s63, 0
    %s66 = sadd.s32 %s65, 1
    %s67 = scalar_select %p64, %s65, %s66
    %p70 = pneg %p64
    %p71 = scmp.eq.s32.totalorder %s8, 1
    %p72 = por %p70, %p71
    %p73 = scmp.ne.s32.totalorder %s65, %s68
    %p74 = scmp.eq.s32.totalorder %s8, 0
    %p75 = por %p73, %p74
    %p76 = scmp.ne.s32.totalorder %s65, %s68
    %p77 = scmp.eq.s32.totalorder %s13, 1
    %p78 = por %p76, %p77
    %p79 = scmp.ne.s32.totalorder %s68, %s69
    %p80 = scmp.eq.s32.totalorder %s13, 0
    %p81 = por %p79, %p80
    %p82 = scmp.ne.s32.totalorder %s68, %s69
    %p83 = scmp.eq.s32.totalorder %s14, 1
    %p84 = por %p82, %p83
    %p86 = scmp.ne.s32.totalorder %s69, %s85
    %p87 = scmp.eq.s32.totalorder %s14, 0
    %p88 = por %p86, %p87
    %p89 = scmp.le.s32.totalorder 1, %s8
    %p90 = scmp.lt.s32.totalorder %s8, 3
    %p91 = pnand %p89, %p90
    %p92 = pneg %p91
    // Predicated region
    $region9: #{_lambda_.4} parent=5 // pred_check
      _
    $region10: #{_lambda_.4} parent=5 // pred_check_branch
      %94 = sbr.rel (%p91) target = $region12
    $region11: #{_lambda_.4} parent=5 // pred_region
      %s95 = ssub.s32 %s8, 1
      // Predicated region
      $region13: #{_lambda_.4} parent=11 // pred_check
        %p96 = pneg %p55
      $region14: #{_lambda_.4} parent=11 // pred_check_branch
        %98 = sbr.rel (%p96) target = $region16
      $region15: #{_lambda_.4} parent=11 // pred_region
        _
      $region16: #{_lambda_.4} parent=11 // pred_fallthru
        _
    $region12: #{_lambda_.4} parent=5 // pred_fallthru
      _
    %p99 = scmp.lt.s32.totalorder %s8, 2
    // Predicated region
    $region17: #{_lambda_.4} parent=5 // pred_check
      %p100 = pneg %p99
    $region18: #{_lambda_.4} parent=5 // pred_check_branch
      %102 = sbr.rel (%p100) target = $region20
    $region19: #{_lambda_.4} parent=5 // pred_region
      // Predicated region
      $region21: #{_lambda_.4} parent=19 // pred_check
        %p103 = pneg %p28
      $region22: #{_lambda_.4} parent=19 // pred_check_branch
        %105 = sbr.rel (%p103) target = $region24
      $region23: #{_lambda_.4} parent=19 // pred_region
        %s106 = smul.u32 128, %s8
        %p107 = scmp.lt.s32.totalorder %s106, 255
        %s108 = scalar_select %p107, %s106, 255
        %s109 = smul.addr %s108, 4
        %s110 = scalar_lea.vmem %s0, %s109
        %s111 = smul.u32 128, %s8
      $region24: #{_lambda_.4} parent=19 // pred_fallthru
        _
    $region20: #{_lambda_.4} parent=5 // pred_fallthru
      _
    %p112 = scmp.le.s32.totalorder 1, %s8
    %p113 = scmp.lt.s32.totalorder %s8, 3
    %p114 = pnand %p112, %p113
    %p115 = pneg %p114
    // Predicated region
    $region25: #{_lambda_.4} parent=5 // pred_check
      _
    $region26: #{_lambda_.4} parent=5 // pred_check_branch
      %117 = sbr.rel (%p114) target = $region28
    $region27: #{_lambda_.4} parent=5 // pred_region
      %s118 = ssub.s32 %s8, 1
      %s119 = smul.u32 128, %s13
      %p120 = scmp.lt.s32.totalorder %s119, 255
      %s121 = scalar_select %p120, %s119, 255
      %s122 = smul.addr %s121, 4
      %s123 = scalar_lea.vmem %s0, %s122
      %p124 = pneg %p34
      %p125 = pneg %p31
      %p126 = pneg %p55
      %p127 = pneg %p52
      %p128 = pneg %p81
      %p129 = pneg %p78
      %s130 = smul.u32 128, %s13
      %p131 = scmp.lt.s32.totalorder %s130, 255
      %s132 = scalar_select %p131, %s130, 255
      %s133 = smul.addr %s132, 4
      %s134 = scalar_lea.vmem %s2, %s133
      %s135 = smul.u32 128, %s13
      %p136 = scmp.lt.s32.totalorder %s135, 255
      %s137 = scalar_select %p136, %s135, 255
      %s138 = smul.addr %s137, 4
      %s139 = scalar_lea.vmem %s0, %s138
      %s140 = smul.u32 128, %s13
      %s141 = smul.u32 128, %s13
      %p142 = scmp.lt.s32.totalorder %s141, 255
      %s143 = scalar_select %p142, %s141, 255
      %s144 = smul.addr %s143, 4
      %s145 = scalar_lea.vmem %s2, %s144
      %s146 = smul.u32 128, %s13
      %v148 = vld [vmem:[%s139] sm:$0xf]
      %v149 = vld [vmem:[%s139 + $0x4] sm:$0xf]
      %v150 = vld [vmem:[%s139 + $0x8] sm:$0xf]
      %v151 = vld [vmem:[%s139 + $0xc] sm:$0xf]
      %v152 = vld [vmem:[%s139 + $0x10] sm:$0xf]
      %v153 = vld [vmem:[%s139 + $0x14] sm:$0xf]
      %v154 = vld [vmem:[%s139 + $0x18] sm:$0xf]
      %v155 = vld [vmem:[%s139 + $0x1c] sm:$0xf]
      %v156 = vld [vmem:[%s139 + $0x20] sm:$0xf]
      %v157 = vld [vmem:[%s139 + $0x24] sm:$0xf]
      %v158 = vld [vmem:[%s139 + $0x28] sm:$0xf]
      %v159 = vld [vmem:[%s139 + $0x2c] sm:$0xf]
      %v160 = vld [vmem:[%s139 + $0x30] sm:$0xf]
      %v161 = vld [vmem:[%s139 + $0x34] sm:$0xf]
      %v162 = vld [vmem:[%s139 + $0x38] sm:$0xf]
      %v163 = vld [vmem:[%s139 + $0x3c] sm:$0xf]
      %v164 = vld [vmem:[%s139 + $0x40] sm:$0xf]
      %v165 = vld [vmem:[%s139 + $0x44] sm:$0xf]
      %v166 = vld [vmem:[%s139 + $0x48] sm:$0xf]
      %v167 = vld [vmem:[%s139 + $0x4c] sm:$0xf]
      %v168 = vld [vmem:[%s139 + $0x50] sm:$0xf]
      %v169 = vld [vmem:[%s139 + $0x54] sm:$0xf]
      %v170 = vld [vmem:[%s139 + $0x58] sm:$0xf]
      %v171 = vld [vmem:[%s139 + $0x5c] sm:$0xf]
      %v172 = vld [vmem:[%s139 + $0x60] sm:$0xf]
      %v173 = vld [vmem:[%s139 + $0x64] sm:$0xf]
      %v174 = vld [vmem:[%s139 + $0x68] sm:$0xf]
      %v175 = vld [vmem:[%s139 + $0x6c] sm:$0xf]
      %v176 = vld [vmem:[%s139 + $0x70] sm:$0xf]
      %v177 = vld [vmem:[%s139 + $0x74] sm:$0xf]
      %v178 = vld [vmem:[%s139 + $0x78] sm:$0xf]
      %v179 = vld [vmem:[%s139 + $0x7c] sm:$0xf]
      %v180 = vld [vmem:[%s139 + $0x80] sm:$0xf]
      %v181 = vld [vmem:[%s139 + $0x84] sm:$0xf]
      %v182 = vld [vmem:[%s139 + $0x88] sm:$0xf]
      %v183 = vld [vmem:[%s139 + $0x8c] sm:$0xf]
      %v184 = vld [vmem:[%s139 + $0x90] sm:$0xf]
      %v185 = vld [vmem:[%s139 + $0x94] sm:$0xf]
      %v186 = vld [vmem:[%s139 + $0x98] sm:$0xf]
      %v187 = vld [vmem:[%s139 + $0x9c] sm:$0xf]
      %v188 = vld [vmem:[%s139 + $0xa0] sm:$0xf]
      %v189 = vld [vmem:[%s139 + $0xa4] sm:$0xf]
      %v190 = vld [vmem:[%s139 + $0xa8] sm:$0xf]
      %v191 = vld [vmem:[%s139 + $0xac] sm:$0xf]
      %v192 = vld [vmem:[%s139 + $0xb0] sm:$0xf]
      %v193 = vld [vmem:[%s139 + $0xb4] sm:$0xf]
      %v194 = vld [vmem:[%s139 + $0xb8] sm:$0xf]
      %v195 = vld [vmem:[%s139 + $0xbc] sm:$0xf]
      %v196 = vld [vmem:[%s139 + $0xc0] sm:$0xf]
      %v197 = vld [vmem:[%s139 + $0xc4] sm:$0xf]
      %v198 = vld [vmem:[%s139 + $0xc8] sm:$0xf]
      %v199 = vld [vmem:[%s139 + $0xcc] sm:$0xf]
      %v200 = vld [vmem:[%s139 + $0xd0] sm:$0xf]
      %v201 = vld [vmem:[%s139 + $0xd4] sm:$0xf]
      %v202 = vld [vmem:[%s139 + $0xd8] sm:$0xf]
      %v203 = vld [vmem:[%s139 + $0xdc] sm:$0xf]
      %v204 = vld [vmem:[%s139 + $0xe0] sm:$0xf]
      %v205 = vld [vmem:[%s139 + $0xe4] sm:$0xf]
      %v206 = vld [vmem:[%s139 + $0xe8] sm:$0xf]
      %v207 = vld [vmem:[%s139 + $0xec] sm:$0xf]
      %v208 = vld [vmem:[%s139 + $0xf0] sm:$0xf]
      %v209 = vld [vmem:[%s139 + $0xf4] sm:$0xf]
      %v210 = vld [vmem:[%s139 + $0xf8] sm:$0xf]
      %v211 = vld [vmem:[%s139 + $0xfc] sm:$0xf]
      %v212 = vld [vmem:[%s139 + $0x100] sm:$0xf]
      %v213 = vld [vmem:[%s139 + $0x104] sm:$0xf]
      %v214 = vld [vmem:[%s139 + $0x108] sm:$0xf]
      %v215 = vld [vmem:[%s139 + $0x10c] sm:$0xf]
      %v216 = vld [vmem:[%s139 + $0x110] sm:$0xf]
      %v217 = vld [vmem:[%s139 + $0x114] sm:$0xf]
      %v218 = vld [vmem:[%s139 + $0x118] sm:$0xf]
      %v219 = vld [vmem:[%s139 + $0x11c] sm:$0xf]
      %v220 = vld [vmem:[%s139 + $0x120] sm:$0xf]
      %v221 = vld [vmem:[%s139 + $0x124] sm:$0xf]
      %v222 = vld [vmem:[%s139 + $0x128] sm:$0xf]
      %v223 = vld [vmem:[%s139 + $0x12c] sm:$0xf]
      %v224 = vld [vmem:[%s139 + $0x130] sm:$0xf]
      %v225 = vld [vmem:[%s139 + $0x134] sm:$0xf]
      %v226 = vld [vmem:[%s139 + $0x138] sm:$0xf]
      %v227 = vld [vmem:[%s139 + $0x13c] sm:$0xf]
      %v228 = vld [vmem:[%s139 + $0x140] sm:$0xf]
      %v229 = vld [vmem:[%s139 + $0x144] sm:$0xf]
      %v230 = vld [vmem:[%s139 + $0x148] sm:$0xf]
      %v231 = vld [vmem:[%s139 + $0x14c] sm:$0xf]
      %v232 = vld [vmem:[%s139 + $0x150] sm:$0xf]
      %v233 = vld [vmem:[%s139 + $0x154] sm:$0xf]
      %v234 = vld [vmem:[%s139 + $0x158] sm:$0xf]
      %v235 = vld [vmem:[%s139 + $0x15c] sm:$0xf]
      %v236 = vld [vmem:[%s139 + $0x160] sm:$0xf]
      %v237 = vld [vmem:[%s139 + $0x164] sm:$0xf]
      %v238 = vld [vmem:[%s139 + $0x168] sm:$0xf]
      %v239 = vld [vmem:[%s139 + $0x16c] sm:$0xf]
      %v240 = vld [vmem:[%s139 + $0x170] sm:$0xf]
      %v241 = vld [vmem:[%s139 + $0x174] sm:$0xf]
      %v242 = vld [vmem:[%s139 + $0x178] sm:$0xf]
      %v243 = vld [vmem:[%s139 + $0x17c] sm:$0xf]
      %v244 = vld [vmem:[%s139 + $0x180] sm:$0xf]
      %v245 = vld [vmem:[%s139 + $0x184] sm:$0xf]
      %v246 = vld [vmem:[%s139 + $0x188] sm:$0xf]
      %v247 = vld [vmem:[%s139 + $0x18c] sm:$0xf]
      %v248 = vld [vmem:[%s139 + $0x190] sm:$0xf]
      %v249 = vld [vmem:[%s139 + $0x194] sm:$0xf]
      %v250 = vld [vmem:[%s139 + $0x198] sm:$0xf]
      %v251 = vld [vmem:[%s139 + $0x19c] sm:$0xf]
      %v252 = vld [vmem:[%s139 + $0x1a0] sm:$0xf]
      %v253 = vld [vmem:[%s139 + $0x1a4] sm:$0xf]
      %v254 = vld [vmem:[%s139 + $0x1a8] sm:$0xf]
      %v255 = vld [vmem:[%s139 + $0x1ac] sm:$0xf]
      %v256 = vld [vmem:[%s139 + $0x1b0] sm:$0xf]
      %v257 = vld [vmem:[%s139 + $0x1b4] sm:$0xf]
      %v258 = vld [vmem:[%s139 + $0x1b8] sm:$0xf]
      %v259 = vld [vmem:[%s139 + $0x1bc] sm:$0xf]
      %v260 = vld [vmem:[%s139 + $0x1c0] sm:$0xf]
      %v261 = vld [vmem:[%s139 + $0x1c4] sm:$0xf]
      %v262 = vld [vmem:[%s139 + $0x1c8] sm:$0xf]
      %v263 = vld [vmem:[%s139 + $0x1cc] sm:$0xf]
      %v264 = vld [vmem:[%s139 + $0x1d0] sm:$0xf]
      %v265 = vld [vmem:[%s139 + $0x1d4] sm:$0xf]
      %v266 = vld [vmem:[%s139 + $0x1d8] sm:$0xf]
      %v267 = vld [vmem:[%s139 + $0x1dc] sm:$0xf]
      %v268 = vld [vmem:[%s139 + $0x1e0] sm:$0xf]
      %v269 = vld [vmem:[%s139 + $0x1e4] sm:$0xf]
      %v270 = vld [vmem:[%s139 + $0x1e8] sm:$0xf]
      %v271 = vld [vmem:[%s139 + $0x1ec] sm:$0xf]
      %v272 = vld [vmem:[%s139 + $0x1f0] sm:$0xf]
      %v273 = vld [vmem:[%s139 + $0x1f4] sm:$0xf]
      %v274 = vld [vmem:[%s139 + $0x1f8] sm:$0xf]
      %v275 = vld [vmem:[%s139 + $0x1fc] sm:$0xf]
      %v276 = vld [vmem:[%s1] sm:$0xf]
      %v277 = vld [vmem:[%s1 + $0x4] sm:$0xf]
      %v278 = vld [vmem:[%s1 + $0x8] sm:$0xf]
      %v279 = vld [vmem:[%s1 + $0xc] sm:$0xf]
      %v280 = vld [vmem:[%s1 + $0x10] sm:$0xf]
      %v281 = vld [vmem:[%s1 + $0x14] sm:$0xf]
      %v410 = vunpack.c.l.b16 %v148
      %v411 = vunpack.c.l.b16 %v149
      %v412 = vunpack.c.l.b16 %v150
      %v413 = vunpack.c.l.b16 %v151
      %v414 = vunpack.c.l.b16 %v152
      %v415 = vunpack.c.l.b16 %v153
      %v416 = vunpack.c.l.b16 %v154
      %v417 = vunpack.c.l.b16 %v155
      %v418 = vunpack.c.l.b16 %v156
      %v419 = vunpack.c.l.b16 %v157
      %v420 = vunpack.c.l.b16 %v158
      %v421 = vunpack.c.l.b16 %v159
      %v422 = vunpack.c.l.b16 %v160
      %v423 = vunpack.c.l.b16 %v161
      %v424 = vunpack.c.l.b16 %v162
      %v425 = vunpack.c.l.b16 %v163
      %v426 = vunpack.c.l.b16 %v164
      %v427 = vunpack.c.l.b16 %v165
      %v428 = vunpack.c.l.b16 %v166
      %v429 = vunpack.c.l.b16 %v167
      %v430 = vunpack.c.l.b16 %v168
      %v431 = vunpack.c.l.b16 %v169
      %v432 = vunpack.c.l.b16 %v170
      %v433 = vunpack.c.l.b16 %v171
      %v434 = vunpack.c.l.b16 %v172
      %v435 = vunpack.c.l.b16 %v173
      %v436 = vunpack.c.l.b16 %v174
      %v437 = vunpack.c.l.b16 %v175
      %v438 = vunpack.c.l.b16 %v176
      %v439 = vunpack.c.l.b16 %v177
      %v440 = vunpack.c.l.b16 %v178
      %v441 = vunpack.c.l.b16 %v179
      %v442 = vunpack.c.l.b16 %v180
      %v443 = vunpack.c.l.b16 %v181
      %v444 = vunpack.c.l.b16 %v182
      %v445 = vunpack.c.l.b16 %v183
      %v446 = vunpack.c.l.b16 %v184
      %v447 = vunpack.c.l.b16 %v185
      %v448 = vunpack.c.l.b16 %v186
      %v449 = vunpack.c.l.b16 %v187
      %v450 = vunpack.c.l.b16 %v188
      %v451 = vunpack.c.l.b16 %v189
      %v452 = vunpack.c.l.b16 %v190
      %v453 = vunpack.c.l.b16 %v191
      %v454 = vunpack.c.l.b16 %v192
      %v455 = vunpack.c.l.b16 %v193
      %v456 = vunpack.c.l.b16 %v194
      %v457 = vunpack.c.l.b16 %v195
      %v458 = vunpack.c.l.b16 %v196
      %v459 = vunpack.c.l.b16 %v197
      %v460 = vunpack.c.l.b16 %v198
      %v461 = vunpack.c.l.b16 %v199
      %v462 = vunpack.c.l.b16 %v200
      %v463 = vunpack.c.l.b16 %v201
      %v464 = vunpack.c.l.b16 %v202
      %v465 = vunpack.c.l.b16 %v203
      %v466 = vunpack.c.l.b16 %v204
      %v467 = vunpack.c.l.b16 %v205
      %v468 = vunpack.c.l.b16 %v206
      %v469 = vunpack.c.l.b16 %v207
      %v470 = vunpack.c.l.b16 %v208
      %v471 = vunpack.c.l.b16 %v209
      %v472 = vunpack.c.l.b16 %v210
      %v473 = vunpack.c.l.b16 %v211
      %v474 = vunpack.c.l.b16 %v212
      %v475 = vunpack.c.l.b16 %v213
      %v476 = vunpack.c.l.b16 %v214
      %v477 = vunpack.c.l.b16 %v215
      %v478 = vunpack.c.l.b16 %v216
      %v479 = vunpack.c.l.b16 %v217
      %v480 = vunpack.c.l.b16 %v218
      %v481 = vunpack.c.l.b16 %v219
      %v482 = vunpack.c.l.b16 %v220
      %v483 = vunpack.c.l.b16 %v221
      %v484 = vunpack.c.l.b16 %v222
      %v485 = vunpack.c.l.b16 %v223
      %v486 = vunpack.c.l.b16 %v224
      %v487 = vunpack.c.l.b16 %v225
      %v488 = vunpack.c.l.b16 %v226
      %v489 = vunpack.c.l.b16 %v227
      %v490 = vunpack.c.l.b16 %v228
      %v491 = vunpack.c.l.b16 %v229
      %v492 = vunpack.c.l.b16 %v230
      %v493 = vunpack.c.l.b16 %v231
      %v494 = vunpack.c.l.b16 %v232
      %v495 = vunpack.c.l.b16 %v233
      %v496 = vunpack.c.l.b16 %v234
      %v497 = vunpack.c.l.b16 %v235
      %v498 = vunpack.c.l.b16 %v236
      %v499 = vunpack.c.l.b16 %v237
      %v500 = vunpack.c.l.b16 %v238
      %v501 = vunpack.c.l.b16 %v239
      %v502 = vunpack.c.l.b16 %v240
      %v503 = vunpack.c.l.b16 %v241
      %v504 = vunpack.c.l.b16 %v242
      %v505 = vunpack.c.l.b16 %v243
      %v506 = vunpack.c.l.b16 %v244
      %v507 = vunpack.c.l.b16 %v245
      %v508 = vunpack.c.l.b16 %v246
      %v509 = vunpack.c.l.b16 %v247
      %v510 = vunpack.c.l.b16 %v248
      %v511 = vunpack.c.l.b16 %v249
      %v512 = vunpack.c.l.b16 %v250
      %v513 = vunpack.c.l.b16 %v251
      %v514 = vunpack.c.l.b16 %v252
      %v515 = vunpack.c.l.b16 %v253
      %v516 = vunpack.c.l.b16 %v254
      %v517 = vunpack.c.l.b16 %v255
      %v518 = vunpack.c.l.b16 %v256
      %v519 = vunpack.c.l.b16 %v257
      %v520 = vunpack.c.l.b16 %v258
      %v521 = vunpack.c.l.b16 %v259
      %v522 = vunpack.c.l.b16 %v260
      %v523 = vunpack.c.l.b16 %v261
      %v524 = vunpack.c.l.b16 %v262
      %v525 = vunpack.c.l.b16 %v263
      %v526 = vunpack.c.l.b16 %v264
      %v527 = vunpack.c.l.b16 %v265
      %v528 = vunpack.c.l.b16 %v266
      %v529 = vunpack.c.l.b16 %v267
      %v530 = vunpack.c.l.b16 %v268
      %v531 = vunpack.c.l.b16 %v269
      %v532 = vunpack.c.l.b16 %v270
      %v533 = vunpack.c.l.b16 %v271
      %v534 = vunpack.c.l.b16 %v272
      %v535 = vunpack.c.l.b16 %v273
      %v536 = vunpack.c.l.b16 %v274
      %v537 = vunpack.c.l.b16 %v275
      %v538 = vpack.c.b16 %v411, %v410
      %v539 = vpack.c.b16 %v413, %v412
      %v540 = vpack.c.b16 %v415, %v414
      %v541 = vpack.c.b16 %v417, %v416
      %v542 = vpack.c.b16 %v419, %v418
      %v543 = vpack.c.b16 %v421, %v420
      %v544 = vpack.c.b16 %v423, %v422
      %v545 = vpack.c.b16 %v425, %v424
      %v546 = vpack.c.b16 %v427, %v426
      %v547 = vpack.c.b16 %v429, %v428
      %v548 = vpack.c.b16 %v431, %v430
      %v549 = vpack.c.b16 %v433, %v432
      %v550 = vpack.c.b16 %v435, %v434
      %v551 = vpack.c.b16 %v437, %v436
      %v552 = vpack.c.b16 %v439, %v438
      %v553 = vpack.c.b16 %v441, %v440
      %v554 = vpack.c.b16 %v443, %v442
      %v555 = vpack.c.b16 %v445, %v444
      %v556 = vpack.c.b16 %v447, %v446
      %v557 = vpack.c.b16 %v449, %v448
      %v558 = vpack.c.b16 %v451, %v450
      %v559 = vpack.c.b16 %v453, %v452
      %v560 = vpack.c.b16 %v455, %v454
      %v561 = vpack.c.b16 %v457, %v456
      %v562 = vpack.c.b16 %v459, %v458
      %v563 = vpack.c.b16 %v461, %v460
      %v564 = vpack.c.b16 %v463, %v462
      %v565 = vpack.c.b16 %v465, %v464
      %v566 = vpack.c.b16 %v467, %v466
      %v567 = vpack.c.b16 %v469, %v468
      %v568 = vpack.c.b16 %v471, %v470
      %v569 = vpack.c.b16 %v473, %v472
      %v570 = vpack.c.b16 %v475, %v474
      %v571 = vpack.c.b16 %v477, %v476
      %v572 = vpack.c.b16 %v479, %v478
      %v573 = vpack.c.b16 %v481, %v480
      %v574 = vpack.c.b16 %v483, %v482
      %v575 = vpack.c.b16 %v485, %v484
      %v576 = vpack.c.b16 %v487, %v486
      %v577 = vpack.c.b16 %v489, %v488
      %v578 = vpack.c.b16 %v491, %v490
      %v579 = vpack.c.b16 %v493, %v492
      %v580 = vpack.c.b16 %v495, %v494
      %v581 = vpack.c.b16 %v497, %v496
      %v582 = vpack.c.b16 %v499, %v498
      %v583 = vpack.c.b16 %v501, %v500
      %v584 = vpack.c.b16 %v503, %v502
      %v585 = vpack.c.b16 %v505, %v504
      %v586 = vpack.c.b16 %v507, %v506
      %v587 = vpack.c.b16 %v509, %v508
      %v588 = vpack.c.b16 %v511, %v510
      %v589 = vpack.c.b16 %v513, %v512
      %v590 = vpack.c.b16 %v515, %v514
      %v591 = vpack.c.b16 %v517, %v516
      %v592 = vpack.c.b16 %v519, %v518
      %v593 = vpack.c.b16 %v521, %v520
      %v594 = vpack.c.b16 %v523, %v522
      %v595 = vpack.c.b16 %v525, %v524
      %v596 = vpack.c.b16 %v527, %v526
      %v597 = vpack.c.b16 %v529, %v528
      %v598 = vpack.c.b16 %v531, %v530
      %v599 = vpack.c.b16 %v533, %v532
      %v600 = vpack.c.b16 %v535, %v534
      %v601 = vpack.c.b16 %v537, %v536
      %v608 = vunpack.c.l.b16 %v276
      %v609 = vunpack.c.l.b16 %v277
      %v610 = vunpack.c.l.b16 %v278
      %v611 = vunpack.c.l.b16 %v279
      %v612 = vunpack.c.l.b16 %v280
      %v613 = vunpack.c.l.b16 %v281
      %v614 = vpack.c.b16 %v609, %v608
      %v615 = vpack.c.b16 %v611, %v610
      %v616 = vpack.c.b16 %v613, %v612
      %vm620 = vcmask 392192
      %v622 = vsel %vm620, %v538, 0
      %v625 = vsel %vm620, %v539, 0
      %v628 = vsel %vm620, %v540, 0
      %v631 = vsel %vm620, %v541, 0
      %v634 = vsel %vm620, %v542, 0
      %v637 = vsel %vm620, %v543, 0
      %v640 = vsel %vm620, %v544, 0
      %v643 = vsel %vm620, %v545, 0
      %v646 = vsel %vm620, %v546, 0
      %v649 = vsel %vm620, %v547, 0
      %v652 = vsel %vm620, %v548, 0
      %v655 = vsel %vm620, %v549, 0
      %v658 = vsel %vm620, %v550, 0
      %v661 = vsel %vm620, %v551, 0
      %v664 = vsel %vm620, %v552, 0
      %v667 = vsel %vm620, %v553, 0
      %v670 = vsel %vm620, %v554, 0
      %v673 = vsel %vm620, %v555, 0
      %v676 = vsel %vm620, %v556, 0
      %v679 = vsel %vm620, %v557, 0
      %v682 = vsel %vm620, %v558, 0
      %v685 = vsel %vm620, %v559, 0
      %v688 = vsel %vm620, %v560, 0
      %v691 = vsel %vm620, %v561, 0
      %v694 = vsel %vm620, %v562, 0
      %v697 = vsel %vm620, %v563, 0
      %v700 = vsel %vm620, %v564, 0
      %v703 = vsel %vm620, %v565, 0
      %v706 = vsel %vm620, %v566, 0
      %v709 = vsel %vm620, %v567, 0
      %v712 = vsel %vm620, %v568, 0
      %v715 = vsel %vm620, %v569, 0
      %v718 = vsel %vm620, %v570, 0
      %v721 = vsel %vm620, %v571, 0
      %v724 = vsel %vm620, %v572, 0
      %v727 = vsel %vm620, %v573, 0
      %v730 = vsel %vm620, %v574, 0
      %v733 = vsel %vm620, %v575, 0
      %v736 = vsel %vm620, %v576, 0
      %v739 = vsel %vm620, %v577, 0
      %v742 = vsel %vm620, %v578, 0
      %v745 = vsel %vm620, %v579, 0
      %v748 = vsel %vm620, %v580, 0
      %v751 = vsel %vm620, %v581, 0
      %v754 = vsel %vm620, %v582, 0
      %v757 = vsel %vm620, %v583, 0
      %v760 = vsel %vm620, %v584, 0
      %v763 = vsel %vm620, %v585, 0
      %v766 = vsel %vm620, %v586, 0
      %v769 = vsel %vm620, %v587, 0
      %v772 = vsel %vm620, %v588, 0
      %v775 = vsel %vm620, %v589, 0
      %v778 = vsel %vm620, %v590, 0
      %v781 = vsel %vm620, %v591, 0
      %v784 = vsel %vm620, %v592, 0
      %v787 = vsel %vm620, %v593, 0
      %v790 = vsel %vm620, %v594, 0
      %v793 = vsel %vm620, %v595, 0
      %v796 = vsel %vm620, %v596, 0
      %v799 = vsel %vm620, %v597, 0
      %v802 = vsel %vm620, %v598, 0
      %v805 = vsel %vm620, %v599, 0
      %v808 = vsel %vm620, %v600, 0
      %v811 = vsel %vm620, %v601, 0
      %813 = vmatprep.subr.bf16.mxu0 0
      %814 = vmatpush1.bf16.msra.mxu0 %v614
      %815 = vmatprep.subr.bf16.mxu0 0
      %816 = vmatpush1.bf16.msra.mxu0 %v615
      %817 = vmatprep.subr.bf16.mxu0 0
      %818 = vmatpush1.bf16.msra.mxu0 %v616
      %819 = vmatprep.subr.bf16.mxu0 0
      %820 = vmatpush1.bf16.msra.mxu0 0
      %821 = vmatprep.subr.bf16.mxu0 0
      %822 = vmatpush1.bf16.msra.mxu0 0
      %823 = vmatprep.subr.bf16.mxu0 0
      %824 = vmatpush1.bf16.msra.mxu0 0
      %825 = vmatprep.subr.bf16.mxu0 0
      %826 = vmatpush1.bf16.msra.mxu0 0
      %827 = vmatprep.subr.bf16.mxu0 0
      %828 = vmatpush1.bf16.msra.mxu0 0
      %829 = vmatprep.subr.bf16.mxu0 0
      %830 = vmatpush1.bf16.msra.mxu0 0
      %831 = vmatprep.subr.bf16.mxu0 0
      %832 = vmatpush1.bf16.msra.mxu0 0
      %833 = vmatprep.subr.bf16.mxu0 0
      %834 = vmatpush1.bf16.msra.mxu0 0
      %835 = vmatprep.subr.bf16.mxu0 0
      %836 = vmatpush1.bf16.msra.mxu0 0
      %837 = vmatprep.subr.bf16.mxu0 0
      %838 = vmatpush1.bf16.msra.mxu0 0
      %839 = vmatprep.subr.bf16.mxu0 0
      %840 = vmatpush1.bf16.msra.mxu0 0
      %841 = vmatprep.subr.bf16.mxu0 0
      %842 = vmatpush1.bf16.msra.mxu0 0
      %843 = vmatprep.subr.bf16.mxu0 0
      %844 = vmatpush1.bf16.msra.mxu0 0
      %845 = vmatprep.mubr.bf16.mxu0 0
      %846 = vmatmul.mubr.bf16.gmra.mrb[0].mxu0 %v622
      %v847 = vpop.f32.mrb[0].mxu0
      %v848 = vadd.f32 0.0, %v847
      %v849 = vpop.f32.mrb[0].mxu0
      %v850 = vpop.f32.mrb[0].mxu0
      %v851 = vadd.f32 0.0, %v850
      %v852 = vpop.f32.mrb[0].mxu0
      %853 = vmatprep.mubr.bf16.mxu0 0
      %854 = vmatmul.mubr.bf16.gmra.mrb[0].mxu0 %v625
      %v855 = vpop.f32.mrb[0].mxu0
      %v856 = vadd.f32 0.0, %v855
      %v857 = vpop.f32.mrb[0].mxu0
      %v858 = vpop.f32.mrb[0].mxu0
      %v859 = vadd.f32 0.0, %v858
      %v860 = vpop.f32.mrb[0].mxu0
      %861 = vmatprep.mubr.bf16.mxu0 0
      %862 = vmatmul.mubr.bf16.gmra.mrb[0].mxu0 %v628
      %v863 = vpop.f32.mrb[0].mxu0
      %v864 = vadd.f32 0.0, %v863
      %v865 = vpop.f32.mrb[0].mxu0
      %v866 = vpop.f32.mrb[0].mxu0
      %v867 = vadd.f32 0.0, %v866
      %v868 = vpop.f32.mrb[0].mxu0
      %869 = vmatprep.mubr.bf16.mxu0 0
      %870 = vmatmul.mubr.bf16.gmra.mrb[0].mxu0 %v631
      %v871 = vpop.f32.mrb[0].mxu0
      %v872 = vadd.f32 0.0, %v871
      %v873 = vpop.f32.mrb[0].mxu0
      %v874 = vpop.f32.mrb[0].mxu0
      %v875 = vadd.f32 0.0, %v874
      %v876 = vpop.f32.mrb[0].mxu0
      %877 = vmatprep.mubr.bf16.mxu0 0
      %878 = vmatmul.mubr.bf16.gmra.mrb[0].mxu0 %v634
      %v879 = vpop.f32.mrb[0].mxu0
      %v880 = vadd.f32 0.0, %v879
      %v881 = vpop.f32.mrb[0].mxu0
      %v882 = vpop.f32.mrb[0].mxu0
      %v883 = vadd.f32 0.0, %v882
      %v884 = vpop.f32.mrb[0].mxu0
      %885 = vmatprep.mubr.bf16.mxu0 0
      %886 = vmatmul.mubr.bf16.gmra.mrb[0].mxu0 %v637
      %v887 = vpop.f32.mrb[0].mxu0
      %v888 = vadd.f32 0.0, %v887
      %v889 = vpop.f32.mrb[0].mxu0
      %v890 = vpop.f32.mrb[0].mxu0
      %v891 = vadd.f32 0.0, %v890
      %v892 = vpop.f32.mrb[0].mxu0
      %893 = vmatprep.mubr.bf16.mxu0 0
      %894 = vmatmul.mubr.bf16.gmra.mrb[0].mxu0 %v640
      %v895 = vpop.f32.mrb[0].mxu0
      %v896 = vadd.f32 0.0, %v895
      %v897 = vpop.f32.mrb[0].mxu0
      %v898 = vpop.f32.mrb[0].mxu0
      %v899 = vadd.f32 0.0, %v898
      %v900 = vpop.f32.mrb[0].mxu0
      %901 = vmatprep.mubr.bf16.mxu0 0
      %902 = vmatmul.mubr.bf16.gmra.mrb[0].mxu0 %v643
      %v903 = vpop.f32.mrb[0].mxu0
      %v904 = vadd.f32 0.0, %v903
      %v905 = vpop.f32.mrb[0].mxu0
      %v906 = vpop.f32.mrb[0].mxu0
      %v907 = vadd.f32 0.0, %v906
      %v908 = vpop.f32.mrb[0].mxu0
      %909 = vmatprep.mubr.bf16.mxu0 0
      %910 = vmatmul.mubr.bf16.gmra.mrb[0].mxu0 %v646
      %v911 = vpop.f32.mrb[0].mxu0
      %v912 = vadd.f32 0.0, %v911
      %v913 = vpop.f32.mrb[0].mxu0
      %v914 = vpop.f32.mrb[0].mxu0
      %v915 = vadd.f32 0.0, %v914
      %v916 = vpop.f32.mrb[0].mxu0
      %917 = vmatprep.mubr.bf16.mxu0 0
      %918 = vmatmul.mubr.bf16.gmra.mrb[0].mxu0 %v649
      %v919 = vpop.f32.mrb[0].mxu0
      %v920 = vadd.f32 0.0, %v919
      %v921 = vpop.f32.mrb[0].mxu0
      %v922 = vpop.f32.mrb[0].mxu0
      %v923 = vadd.f32 0.0, %v922
      %v924 = vpop.f32.mrb[0].mxu0
      %925 = vmatprep.mubr.bf16.mxu0 0
      %926 = vmatmul.mubr.bf16.gmra.mrb[0].mxu0 %v652
      %v927 = vpop.f32.mrb[0].mxu0
      %v928 = vadd.f32 0.0, %v927
      %v929 = vpop.f32.mrb[0].mxu0
      %v930 = vpop.f32.mrb[0].mxu0
      %v931 = vadd.f32 0.0, %v930
      %v932 = vpop.f32.mrb[0].mxu0
      %933 = vmatprep.mubr.bf16.mxu0 0
      %934 = vmatmul.mubr.bf16.gmra.mrb[0].mxu0 %v655
      %v935 = vpop.f32.mrb[0].mxu0
      %v936 = vadd.f32 0.0, %v935
      %v937 = vpop.f32.mrb[0].mxu0
      %v938 = vpop.f32.mrb[0].mxu0
      %v939 = vadd.f32 0.0, %v938
      %v940 = vpop.f32.mrb[0].mxu0
      %941 = vmatprep.mubr.bf16.mxu0 0
      %942 = vmatmul.mubr.bf16.gmra.mrb[0].mxu0 %v658
      %v943 = vpop.f32.mrb[0].mxu0
      %v944 = vadd.f32 0.0, %v943
      %v945 = vpop.f32.mrb[0].mxu0
      %v946 = vpop.f32.mrb[0].mxu0
      %v947 = vadd.f32 0.0, %v946
      %v948 = vpop.f32.mrb[0].mxu0
      %949 = vmatprep.mubr.bf16.mxu0 0
      %950 = vmatmul.mubr.bf16.gmra.mrb[0].mxu0 %v661
      %v951 = vpop.f32.mrb[0].mxu0
      %v952 = vadd.f32 0.0, %v951
      %v953 = vpop.f32.mrb[0].mxu0
      %v954 = vpop.f32.mrb[0].mxu0
      %v955 = vadd.f32 0.0, %v954
      %v956 = vpop.f32.mrb[0].mxu0
      %957 = vmatprep.mubr.bf16.mxu0 0
      %958 = vmatmul.mubr.bf16.gmra.mrb[0].mxu0 %v664
      %v959 = vpop.f32.mrb[0].mxu0
      %v960 = vadd.f32 0.0, %v959
      %v961 = vpop.f32.mrb[0].mxu0
      %v962 = vpop.f32.mrb[0].mxu0
      %v963 = vadd.f32 0.0, %v962
      %v964 = vpop.f32.mrb[0].mxu0
      %965 = vmatprep.mubr.bf16.mxu0 0
      %966 = vmatmul.mubr.bf16.gmra.mrb[0].mxu0 %v667
      %v967 = vpop.f32.mrb[0].mxu0
      %v968 = vadd.f32 0.0, %v967
      %v969 = vpop.f32.mrb[0].mxu0
      %v970 = vpop.f32.mrb[0].mxu0
      %v971 = vadd.f32 0.0, %v970
      %v972 = vpop.f32.mrb[0].mxu0
      %973 = vmatprep.mubr.bf16.mxu0 0
      %974 = vmatmul.mubr.bf16.gmra.mrb[0].mxu0 %v670
      %v975 = vpop.f32.mrb[0].mxu0
      %v976 = vadd.f32 0.0, %v975
      %v977 = vpop.f32.mrb[0].mxu0
      %v978 = vpop.f32.mrb[0].mxu0
      %v979 = vadd.f32 0.0, %v978
      %v980 = vpop.f32.mrb[0].mxu0
      %981 = vmatprep.mubr.bf16.mxu0 0
      %982 = vmatmul.mubr.bf16.gmra.mrb[0].mxu0 %v673
      %v983 = vpop.f32.mrb[0].mxu0
      %v984 = vadd.f32 0.0, %v983
      %v985 = vpop.f32.mrb[0].mxu0
      %v986 = vpop.f32.mrb[0].mxu0
      %v987 = vadd.f32 0.0, %v986
      %v988 = vpop.f32.mrb[0].mxu0
      %989 = vmatprep.mubr.bf16.mxu0 0
      %990 = vmatmul.mubr.bf16.gmra.mrb[0].mxu0 %v676
      %v991 = vpop.f32.mrb[0].mxu0
      %v992 = vadd.f32 0.0, %v991
      %v993 = vpop.f32.mrb[0].mxu0
      %v994 = vpop.f32.mrb[0].mxu0
      %v995 = vadd.f32 0.0, %v994
      %v996 = vpop.f32.mrb[0].mxu0
      %997 = vmatprep.mubr.bf16.mxu0 0
      %998 = vmatmul.mubr.bf16.gmra.mrb[0].mxu0 %v679
      %v999 = vpop.f32.mrb[0].mxu0
      %v1000 = vadd.f32 0.0, %v999
      %v1001 = vpop.f32.mrb[0].mxu0
      %v1002 = vpop.f32.mrb[0].mxu0
      %v1003 = vadd.f32 0.0, %v1002
      %v1004 = vpop.f32.mrb[0].mxu0
      %1005 = vmatprep.mubr.bf16.mxu0 0
      %1006 = vmatmul.mubr.bf16.gmra.mrb[0].mxu0 %v682
      %v1007 = vpop.f32.mrb[0].mxu0
      %v1008 = vadd.f32 0.0, %v1007
      %v1009 = vpop.f32.mrb[0].mxu0
      %v1010 = vpop.f32.mrb[0].mxu0
      %v1011 = vadd.f32 0.0, %v1010
      %v1012 = vpop.f32.mrb[0].mxu0
      %1013 = vmatprep.mubr.bf16.mxu0 0
      %1014 = vmatmul.mubr.bf16.gmra.mrb[0].mxu0 %v685
      %v1015 = vpop.f32.mrb[0].mxu0
      %v1016 = vadd.f32 0.0, %v1015
      %v1017 = vpop.f32.mrb[0].mxu0
      %v1018 = vpop.f32.mrb[0].mxu0
      %v1019 = vadd.f32 0.0, %v1018
      %v1020 = vpop.f32.mrb[0].mxu0
      %1021 = vmatprep.mubr.bf16.mxu0 0
      %1022 = vmatmul.mubr.bf16.gmra.mrb[0].mxu0 %v688
      %v1023 = vpop.f32.mrb[0].mxu0
      %v1024 = vadd.f32 0.0, %v1023
      %v1025 = vpop.f32.mrb[0].mxu0
      %v1026 = vpop.f32.mrb[0].mxu0
      %v1027 = vadd.f32 0.0, %v1026
      %v1028 = vpop.f32.mrb[0].mxu0
      %1029 = vmatprep.mubr.bf16.mxu0 0
      %1030 = vmatmul.mubr.bf16.gmra.mrb[0].mxu0 %v691
      %v1031 = vpop.f32.mrb[0].mxu0
      %v1032 = vadd.f32 0.0, %v1031
      %v1033 = vpop.f32.mrb[0].mxu0
      %v1034 = vpop.f32.mrb[0].mxu0
      %v1035 = vadd.f32 0.0, %v1034
      %v1036 = vpop.f32.mrb[0].mxu0
      %1037 = vmatprep.mubr.bf16.mxu0 0
      %1038 = vmatmul.mubr.bf16.gmra.mrb[0].mxu0 %v694
      %v1039 = vpop.f32.mrb[0].mxu0
      %v1040 = vadd.f32 0.0, %v1039
      %v1041 = vpop.f32.mrb[0].mxu0
      %v1042 = vpop.f32.mrb[0].mxu0
      %v1043 = vadd.f32 0.0, %v1042
      %v1044 = vpop.f32.mrb[0].mxu0
      %1045 = vmatprep.mubr.bf16.mxu0 0
      %1046 = vmatmul.mubr.bf16.gmra.mrb[0].mxu0 %v697
      %v1047 = vpop.f32.mrb[0].mxu0
      %v1048 = vadd.f32 0.0, %v1047
      %v1049 = vpop.f32.mrb[0].mxu0
      %v1050 = vpop.f32.mrb[0].mxu0
      %v1051 = vadd.f32 0.0, %v1050
      %v1052 = vpop.f32.mrb[0].mxu0
      %1053 = vmatprep.mubr.bf16.mxu0 0
      %1054 = vmatmul.mubr.bf16.gmra.mrb[0].mxu0 %v700
      %v1055 = vpop.f32.mrb[0].mxu0
      %v1056 = vadd.f32 0.0, %v1055
      %v1057 = vpop.f32.mrb[0].mxu0
      %v1058 = vpop.f32.mrb[0].mxu0
      %v1059 = vadd.f32 0.0, %v1058
      %v1060 = vpop.f32.mrb[0].mxu0
      %1061 = vmatprep.mubr.bf16.mxu0 0
      %1062 = vmatmul.mubr.bf16.gmra.mrb[0].mxu0 %v703
      %v1063 = vpop.f32.mrb[0].mxu0
      %v1064 = vadd.f32 0.0, %v1063
      %v1065 = vpop.f32.mrb[0].mxu0
      %v1066 = vpop.f32.mrb[0].mxu0
      %v1067 = vadd.f32 0.0, %v1066
      %v1068 = vpop.f32.mrb[0].mxu0
      %1069 = vmatprep.mubr.bf16.mxu0 0
      %1070 = vmatmul.mubr.bf16.gmra.mrb[0].mxu0 %v706
      %v1071 = vpop.f32.mrb[0].mxu0
      %v1072 = vadd.f32 0.0, %v1071
      %v1073 = vpop.f32.mrb[0].mxu0
      %v1074 = vpop.f32.mrb[0].mxu0
      %v1075 = vadd.f32 0.0, %v1074
      %v1076 = vpop.f32.mrb[0].mxu0
      %1077 = vmatprep.mubr.bf16.mxu0 0
      %1078 = vmatmul.mubr.bf16.gmra.mrb[0].mxu0 %v709
      %v1079 = vpop.f32.mrb[0].mxu0
      %v1080 = vadd.f32 0.0, %v1079
      %v1081 = vpop.f32.mrb[0].mxu0
      %v1082 = vpop.f32.mrb[0].mxu0
      %v1083 = vadd.f32 0.0, %v1082
      %v1084 = vpop.f32.mrb[0].mxu0
      %1085 = vmatprep.mubr.bf16.mxu0 0
      %1086 = vmatmul.mubr.bf16.gmra.mrb[0].mxu0 %v712
      %v1087 = vpop.f32.mrb[0].mxu0
      %v1088 = vadd.f32 0.0, %v1087
      %v1089 = vpop.f32.mrb[0].mxu0
      %v1090 = vpop.f32.mrb[0].mxu0
      %v1091 = vadd.f32 0.0, %v1090
      %v1092 = vpop.f32.mrb[0].mxu0
      %1093 = vmatprep.mubr.bf16.mxu0 0
      %1094 = vmatmul.mubr.bf16.gmra.mrb[0].mxu0 %v715
      %v1095 = vpop.f32.mrb[0].mxu0
      %v1096 = vadd.f32 0.0, %v1095
      %v1097 = vpop.f32.mrb[0].mxu0
      %v1098 = vpop.f32.mrb[0].mxu0
      %v1099 = vadd.f32 0.0, %v1098
      %v1100 = vpop.f32.mrb[0].mxu0
      %1101 = vmatprep.mubr.bf16.mxu0 0
      %1102 = vmatmul.mubr.bf16.gmra.mrb[0].mxu0 %v718
      %v1103 = vpop.f32.mrb[0].mxu0
      %v1104 = vadd.f32 0.0, %v1103
      %v1105 = vpop.f32.mrb[0].mxu0
      %v1106 = vpop.f32.mrb[0].mxu0
      %v1107 = vadd.f32 0.0, %v1106
      %v1108 = vpop.f32.mrb[0].mxu0
      %1109 = vmatprep.mubr.bf16.mxu0 0
      %1110 = vmatmul.mubr.bf16.gmra.mrb[0].mxu0 %v721
      %v1111 = vpop.f32.mrb[0].mxu0
      %v1112 = vadd.f32 0.0, %v1111
      %v1113 = vpop.f32.mrb[0].mxu0
      %v1114 = vpop.f32.mrb[0].mxu0
      %v1115 = vadd.f32 0.0, %v1114
      %v1116 = vpop.f32.mrb[0].mxu0
      %1117 = vmatprep.mubr.bf16.mxu0 0
      %1118 = vmatmul.mubr.bf16.gmra.mrb[0].mxu0 %v724
      %v1119 = vpop.f32.mrb[0].mxu0
      %v1120 = vadd.f32 0.0, %v1119
      %v1121 = vpop.f32.mrb[0].mxu0
      %v1122 = vpop.f32.mrb[0].mxu0
      %v1123 = vadd.f32 0.0, %v1122
      %v1124 = vpop.f32.mrb[0].mxu0
      %1125 = vmatprep.mubr.bf16.mxu0 0
      %1126 = vmatmul.mubr.bf16.gmra.mrb[0].mxu0 %v727
      %v1127 = vpop.f32.mrb[0].mxu0
      %v1128 = vadd.f32 0.0, %v1127
      %v1129 = vpop.f32.mrb[0].mxu0
      %v1130 = vpop.f32.mrb[0].mxu0
      %v1131 = vadd.f32 0.0, %v1130
      %v1132 = vpop.f32.mrb[0].mxu0
      %1133 = vmatprep.mubr.bf16.mxu0 0
      %1134 = vmatmul.mubr.bf16.gmra.mrb[0].mxu0 %v730
      %v1135 = vpop.f32.mrb[0].mxu0
      %v1136 = vadd.f32 0.0, %v1135
      %v1137 = vpop.f32.mrb[0].mxu0
      %v1138 = vpop.f32.mrb[0].mxu0
      %v1139 = vadd.f32 0.0, %v1138
      %v1140 = vpop.f32.mrb[0].mxu0
      %1141 = vmatprep.mubr.bf16.mxu0 0
      %1142 = vmatmul.mubr.bf16.gmra.mrb[0].mxu0 %v733
      %v1143 = vpop.f32.mrb[0].mxu0
      %v1144 = vadd.f32 0.0, %v1143
      %v1145 = vpop.f32.mrb[0].mxu0
      %v1146 = vpop.f32.mrb[0].mxu0
      %v1147 = vadd.f32 0.0, %v1146
      %v1148 = vpop.f32.mrb[0].mxu0
      %1149 = vmatprep.mubr.bf16.mxu0 0
      %1150 = vmatmul.mubr.bf16.gmra.mrb[0].mxu0 %v736
      %v1151 = vpop.f32.mrb[0].mxu0
      %v1152 = vadd.f32 0.0, %v1151
      %v1153 = vpop.f32.mrb[0].mxu0
      %v1154 = vpop.f32.mrb[0].mxu0
      %v1155 = vadd.f32 0.0, %v1154
      %v1156 = vpop.f32.mrb[0].mxu0
      %1157 = vmatprep.mubr.bf16.mxu0 0
      %1158 = vmatmul.mubr.bf16.gmra.mrb[0].mxu0 %v739
      %v1159 = vpop.f32.mrb[0].mxu0
      %v1160 = vadd.f32 0.0, %v1159
      %v1161 = vpop.f32.mrb[0].mxu0
      %v1162 = vpop.f32.mrb[0].mxu0
      %v1163 = vadd.f32 0.0, %v1162
      %v1164 = vpop.f32.mrb[0].mxu0
      %1165 = vmatprep.mubr.bf16.mxu0 0
      %1166 = vmatmul.mubr.bf16.gmra.mrb[0].mxu0 %v742
      %v1167 = vpop.f32.mrb[0].mxu0
      %v1168 = vadd.f32 0.0, %v1167
      %v1169 = vpop.f32.mrb[0].mxu0
      %v1170 = vpop.f32.mrb[0].mxu0
      %v1171 = vadd.f32 0.0, %v1170
      %v1172 = vpop.f32.mrb[0].mxu0
      %1173 = vmatprep.mubr.bf16.mxu0 0
      %1174 = vmatmul.mubr.bf16.gmra.mrb[0].mxu0 %v745
      %v1175 = vpop.f32.mrb[0].mxu0
      %v1176 = vadd.f32 0.0, %v1175
      %v1177 = vpop.f32.mrb[0].mxu0
      %v1178 = vpop.f32.mrb[0].mxu0
      %v1179 = vadd.f32 0.0, %v1178
      %v1180 = vpop.f32.mrb[0].mxu0
      %1181 = vmatprep.mubr.bf16.mxu0 0
      %1182 = vmatmul.mubr.bf16.gmra.mrb[0].mxu0 %v748
      %v1183 = vpop.f32.mrb[0].mxu0
      %v1184 = vadd.f32 0.0, %v1183
      %v1185 = vpop.f32.mrb[0].mxu0
      %v1186 = vpop.f32.mrb[0].mxu0
      %v1187 = vadd.f32 0.0, %v1186
      %v1188 = vpop.f32.mrb[0].mxu0
      %1189 = vmatprep.mubr.bf16.mxu0 0
      %1190 = vmatmul.mubr.bf16.gmra.mrb[0].mxu0 %v751
      %v1191 = vpop.f32.mrb[0].mxu0
      %v1192 = vadd.f32 0.0, %v1191
      %v1193 = vpop.f32.mrb[0].mxu0
      %v1194 = vpop.f32.mrb[0].mxu0
      %v1195 = vadd.f32 0.0, %v1194
      %v1196 = vpop.f32.mrb[0].mxu0
      %1197 = vmatprep.mubr.bf16.mxu0 0
      %1198 = vmatmul.mubr.bf16.gmra.mrb[0].mxu0 %v754
      %v1199 = vpop.f32.mrb[0].mxu0
      %v1200 = vadd.f32 0.0, %v1199
      %v1201 = vpop.f32.mrb[0].mxu0
      %v1202 = vpop.f32.mrb[0].mxu0
      %v1203 = vadd.f32 0.0, %v1202
      %v1204 = vpop.f32.mrb[0].mxu0
      %1205 = vmatprep.mubr.bf16.mxu0 0
      %1206 = vmatmul.mubr.bf16.gmra.mrb[0].mxu0 %v757
      %v1207 = vpop.f32.mrb[0].mxu0
      %v1208 = vadd.f32 0.0, %v1207
      %v1209 = vpop.f32.mrb[0].mxu0
      %v1210 = vpop.f32.mrb[0].mxu0
      %v1211 = vadd.f32 0.0, %v1210
      %v1212 = vpop.f32.mrb[0].mxu0
      %1213 = vmatprep.mubr.bf16.mxu0 0
      %1214 = vmatmul.mubr.bf16.gmra.mrb[0].mxu0 %v760
      %v1215 = vpop.f32.mrb[0].mxu0
      %v1216 = vadd.f32 0.0, %v1215
      %v1217 = vpop.f32.mrb[0].mxu0
      %v1218 = vpop.f32.mrb[0].mxu0
      %v1219 = vadd.f32 0.0, %v1218
      %v1220 = vpop.f32.mrb[0].mxu0
      %1221 = vmatprep.mubr.bf16.mxu0 0
      %1222 = vmatmul.mubr.bf16.gmra.mrb[0].mxu0 %v763
      %v1223 = vpop.f32.mrb[0].mxu0
      %v1224 = vadd.f32 0.0, %v1223
      %v1225 = vpop.f32.mrb[0].mxu0
      %v1226 = vpop.f32.mrb[0].mxu0
      %v1227 = vadd.f32 0.0, %v1226
      %v1228 = vpop.f32.mrb[0].mxu0
      %1229 = vmatprep.mubr.bf16.mxu0 0
      %1230 = vmatmul.mubr.bf16.gmra.mrb[0].mxu0 %v766
      %v1231 = vpop.f32.mrb[0].mxu0
      %v1232 = vadd.f32 0.0, %v1231
      %v1233 = vpop.f32.mrb[0].mxu0
      %v1234 = vpop.f32.mrb[0].mxu0
      %v1235 = vadd.f32 0.0, %v1234
      %v1236 = vpop.f32.mrb[0].mxu0
      %1237 = vmatprep.mubr.bf16.mxu0 0
      %1238 = vmatmul.mubr.bf16.gmra.mrb[0].mxu0 %v769
      %v1239 = vpop.f32.mrb[0].mxu0
      %v1240 = vadd.f32 0.0, %v1239
      %v1241 = vpop.f32.mrb[0].mxu0
      %v1242 = vpop.f32.mrb[0].mxu0
      %v1243 = vadd.f32 0.0, %v1242
      %v1244 = vpop.f32.mrb[0].mxu0
      %1245 = vmatprep.mubr.bf16.mxu0 0
      %1246 = vmatmul.mubr.bf16.gmra.mrb[0].mxu0 %v772
      %v1247 = vpop.f32.mrb[0].mxu0
      %v1248 = vadd.f32 0.0, %v1247
      %v1249 = vpop.f32.mrb[0].mxu0
      %v1250 = vpop.f32.mrb[0].mxu0
      %v1251 = vadd.f32 0.0, %v1250
      %v1252 = vpop.f32.mrb[0].mxu0
      %1253 = vmatprep.mubr.bf16.mxu0 0
      %1254 = vmatmul.mubr.bf16.gmra.mrb[0].mxu0 %v775
      %v1255 = vpop.f32.mrb[0].mxu0
      %v1256 = vadd.f32 0.0, %v1255
      %v1257 = vpop.f32.mrb[0].mxu0
      %v1258 = vpop.f32.mrb[0].mxu0
      %v1259 = vadd.f32 0.0, %v1258
      %v1260 = vpop.f32.mrb[0].mxu0
      %1261 = vmatprep.mubr.bf16.mxu0 0
      %1262 = vmatmul.mubr.bf16.gmra.mrb[0].mxu0 %v778
      %v1263 = vpop.f32.mrb[0].mxu0
      %v1264 = vadd.f32 0.0, %v1263
      %v1265 = vpop.f32.mrb[0].mxu0
      %v1266 = vpop.f32.mrb[0].mxu0
      %v1267 = vadd.f32 0.0, %v1266
      %v1268 = vpop.f32.mrb[0].mxu0
      %1269 = vmatprep.mubr.bf16.mxu0 0
      %1270 = vmatmul.mubr.bf16.gmra.mrb[0].mxu0 %v781
      %v1271 = vpop.f32.mrb[0].mxu0
      %v1272 = vadd.f32 0.0, %v1271
      %v1273 = vpop.f32.mrb[0].mxu0
      %v1274 = vpop.f32.mrb[0].mxu0
      %v1275 = vadd.f32 0.0, %v1274
      %v1276 = vpop.f32.mrb[0].mxu0
      %1277 = vmatprep.mubr.bf16.mxu0 0
      %1278 = vmatmul.mubr.bf16.gmra.mrb[0].mxu0 %v784
      %v1279 = vpop.f32.mrb[0].mxu0
      %v1280 = vadd.f32 0.0, %v1279
      %v1281 = vpop.f32.mrb[0].mxu0
      %v1282 = vpop.f32.mrb[0].mxu0
      %v1283 = vadd.f32 0.0, %v1282
      %v1284 = vpop.f32.mrb[0].mxu0
      %1285 = vmatprep.mubr.bf16.mxu0 0
      %1286 = vmatmul.mubr.bf16.gmra.mrb[0].mxu0 %v787
      %v1287 = vpop.f32.mrb[0].mxu0
      %v1288 = vadd.f32 0.0, %v1287
      %v1289 = vpop.f32.mrb[0].mxu0
      %v1290 = vpop.f32.mrb[0].mxu0
      %v1291 = vadd.f32 0.0, %v1290
      %v1292 = vpop.f32.mrb[0].mxu0
      %1293 = vmatprep.mubr.bf16.mxu0 0
      %1294 = vmatmul.mubr.bf16.gmra.mrb[0].mxu0 %v790
      %v1295 = vpop.f32.mrb[0].mxu0
      %v1296 = vadd.f32 0.0, %v1295
      %v1297 = vpop.f32.mrb[0].mxu0
      %v1298 = vpop.f32.mrb[0].mxu0
      %v1299 = vadd.f32 0.0, %v1298
      %v1300 = vpop.f32.mrb[0].mxu0
      %1301 = vmatprep.mubr.bf16.mxu0 0
      %1302 = vmatmul.mubr.bf16.gmra.mrb[0].mxu0 %v793
      %v1303 = vpop.f32.mrb[0].mxu0
      %v1304 = vadd.f32 0.0, %v1303
      %v1305 = vpop.f32.mrb[0].mxu0
      %v1306 = vpop.f32.mrb[0].mxu0
      %v1307 = vadd.f32 0.0, %v1306
      %v1308 = vpop.f32.mrb[0].mxu0
      %1309 = vmatprep.mubr.bf16.mxu0 0
      %1310 = vmatmul.mubr.bf16.gmra.mrb[0].mxu0 %v796
      %v1311 = vpop.f32.mrb[0].mxu0
      %v1312 = vadd.f32 0.0, %v1311
      %v1313 = vpop.f32.mrb[0].mxu0
      %v1314 = vpop.f32.mrb[0].mxu0
      %v1315 = vadd.f32 0.0, %v1314
      %v1316 = vpop.f32.mrb[0].mxu0
      %1317 = vmatprep.mubr.bf16.mxu0 0
      %1318 = vmatmul.mubr.bf16.gmra.mrb[0].mxu0 %v799
      %v1319 = vpop.f32.mrb[0].mxu0
      %v1320 = vadd.f32 0.0, %v1319
      %v1321 = vpop.f32.mrb[0].mxu0
      %v1322 = vpop.f32.mrb[0].mxu0
      %v1323 = vadd.f32 0.0, %v1322
      %v1324 = vpop.f32.mrb[0].mxu0
      %1325 = vmatprep.mubr.bf16.mxu0 0
      %1326 = vmatmul.mubr.bf16.gmra.mrb[0].mxu0 %v802
      %v1327 = vpop.f32.mrb[0].mxu0
      %v1328 = vadd.f32 0.0, %v1327
      %v1329 = vpop.f32.mrb[0].mxu0
      %v1330 = vpop.f32.mrb[0].mxu0
      %v1331 = vadd.f32 0.0, %v1330
      %v1332 = vpop.f32.mrb[0].mxu0
      %1333 = vmatprep.mubr.bf16.mxu0 0
      %1334 = vmatmul.mubr.bf16.gmra.mrb[0].mxu0 %v805
      %v1335 = vpop.f32.mrb[0].mxu0
      %v1336 = vadd.f32 0.0, %v1335
      %v1337 = vpop.f32.mrb[0].mxu0
      %v1338 = vpop.f32.mrb[0].mxu0
      %v1339 = vadd.f32 0.0, %v1338
      %v1340 = vpop.f32.mrb[0].mxu0
      %1341 = vmatprep.mubr.bf16.mxu0 0
      %1342 = vmatmul.mubr.bf16.gmra.mrb[0].mxu0 %v808
      %v1343 = vpop.f32.mrb[0].mxu0
      %v1344 = vadd.f32 0.0, %v1343
      %v1345 = vpop.f32.mrb[0].mxu0
      %v1346 = vpop.f32.mrb[0].mxu0
      %v1347 = vadd.f32 0.0, %v1346
      %v1348 = vpop.f32.mrb[0].mxu0
      %1349 = vmatprep.mubr.bf16.mxu0 0
      %1350 = vmatmul.mubr.bf16.gmra.mrb[0].mxu0 %v811
      %v1351 = vpop.f32.mrb[0].mxu0
      %v1352 = vadd.f32 0.0, %v1351
      %v1353 = vpop.f32.mrb[0].mxu0
      %v1354 = vpop.f32.mrb[0].mxu0
      %v1355 = vadd.f32 0.0, %v1354
      %v1356 = vpop.f32.mrb[0].mxu0
      %1357 = vdwg.mxu0
      %v1358 = vmul.f32 %v848, 0.2
      %v1359 = vmul.f32 %v851, 0.2
      %v1360 = vmul.f32 %v856, 0.2
      %v1361 = vmul.f32 %v859, 0.2
      %v1362 = vmul.f32 %v864, 0.2
      %v1363 = vmul.f32 %v867, 0.2
      %v1364 = vmul.f32 %v872, 0.2
      %v1365 = vmul.f32 %v875, 0.2
      %v1366 = vmul.f32 %v880, 0.2
      %v1367 = vmul.f32 %v883, 0.2
      %v1368 = vmul.f32 %v888, 0.2
      %v1369 = vmul.f32 %v891, 0.2
      %v1370 = vmul.f32 %v896, 0.2
      %v1371 = vmul.f32 %v899, 0.2
      %v1372 = vmul.f32 %v904, 0.2
      %v1373 = vmul.f32 %v907, 0.2
      %v1374 = vmul.f32 %v912, 0.2
      %v1375 = vmul.f32 %v915, 0.2
      %v1376 = vmul.f32 %v920, 0.2
      %v1377 = vmul.f32 %v923, 0.2
      %v1378 = vmul.f32 %v928, 0.2
      %v1379 = vmul.f32 %v931, 0.2
      %v1380 = vmul.f32 %v936, 0.2
      %v1381 = vmul.f32 %v939, 0.2
      %v1382 = vmul.f32 %v944, 0.2
      %v1383 = vmul.f32 %v947, 0.2
      %v1384 = vmul.f32 %v952, 0.2
      %v1385 = vmul.f32 %v955, 0.2
      %v1386 = vmul.f32 %v960, 0.2
      %v1387 = vmul.f32 %v963, 0.2
      %v1388 = vmul.f32 %v968, 0.2
      %v1389 = vmul.f32 %v971, 0.2
      %v1390 = vmul.f32 %v976, 0.2
      %v1391 = vmul.f32 %v979, 0.2
      %v1392 = vmul.f32 %v984, 0.2
      %v1393 = vmul.f32 %v987, 0.2
      %v1394 = vmul.f32 %v992, 0.2
      %v1395 = vmul.f32 %v995, 0.2
      %v1396 = vmul.f32 %v1000, 0.2
      %v1397 = vmul.f32 %v1003, 0.2
      %v1398 = vmul.f32 %v1008, 0.2
      %v1399 = vmul.f32 %v1011, 0.2
      %v1400 = vmul.f32 %v1016, 0.2
      %v1401 = vmul.f32 %v1019, 0.2
      %v1402 = vmul.f32 %v1024, 0.2
      %v1403 = vmul.f32 %v1027, 0.2
      %v1404 = vmul.f32 %v1032, 0.2
      %v1405 = vmul.f32 %v1035, 0.2
      %v1406 = vmul.f32 %v1040, 0.2
      %v1407 = vmul.f32 %v1043, 0.2
      %v1408 = vmul.f32 %v1048, 0.2
      %v1409 = vmul.f32 %v1051, 0.2
      %v1410 = vmul.f32 %v1056, 0.2
      %v1411 = vmul.f32 %v1059, 0.2
      %v1412 = vmul.f32 %v1064, 0.2
      %v1413 = vmul.f32 %v1067, 0.2
      %v1414 = vmul.f32 %v1072, 0.2
      %v1415 = vmul.f32 %v1075, 0.2
      %v1416 = vmul.f32 %v1080, 0.2
      %v1417 = vmul.f32 %v1083, 0.2
      %v1418 = vmul.f32 %v1088, 0.2
      %v1419 = vmul.f32 %v1091, 0.2
      %v1420 = vmul.f32 %v1096, 0.2
      %v1421 = vmul.f32 %v1099, 0.2
      %v1422 = vmul.f32 %v1104, 0.2
      %v1423 = vmul.f32 %v1107, 0.2
      %v1424 = vmul.f32 %v1112, 0.2
      %v1425 = vmul.f32 %v1115, 0.2
      %v1426 = vmul.f32 %v1120, 0.2
      %v1427 = vmul.f32 %v1123, 0.2
      %v1428 = vmul.f32 %v1128, 0.2
      %v1429 = vmul.f32 %v1131, 0.2
      %v1430 = vmul.f32 %v1136, 0.2
      %v1431 = vmul.f32 %v1139, 0.2
      %v1432 = vmul.f32 %v1144, 0.2
      %v1433 = vmul.f32 %v1147, 0.2
      %v1434 = vmul.f32 %v1152, 0.2
      %v1435 = vmul.f32 %v1155, 0.2
      %v1436 = vmul.f32 %v1160, 0.2
      %v1437 = vmul.f32 %v1163, 0.2
      %v1438 = vmul.f32 %v1168, 0.2
      %v1439 = vmul.f32 %v1171, 0.2
      %v1440 = vmul.f32 %v1176, 0.2
      %v1441 = vmul.f32 %v1179, 0.2
      %v1442 = vmul.f32 %v1184, 0.2
      %v1443 = vmul.f32 %v1187, 0.2
      %v1444 = vmul.f32 %v1192, 0.2
      %v1445 = vmul.f32 %v1195, 0.2
      %v1446 = vmul.f32 %v1200, 0.2
      %v1447 = vmul.f32 %v1203, 0.2
      %v1448 = vmul.f32 %v1208, 0.2
      %v1449 = vmul.f32 %v1211, 0.2
      %v1450 = vmul.f32 %v1216, 0.2
      %v1451 = vmul.f32 %v1219, 0.2
      %v1452 = vmul.f32 %v1224, 0.2
      %v1453 = vmul.f32 %v1227, 0.2
      %v1454 = vmul.f32 %v1232, 0.2
      %v1455 = vmul.f32 %v1235, 0.2
      %v1456 = vmul.f32 %v1240, 0.2
      %v1457 = vmul.f32 %v1243, 0.2
      %v1458 = vmul.f32 %v1248, 0.2
      %v1459 = vmul.f32 %v1251, 0.2
      %v1460 = vmul.f32 %v1256, 0.2
      %v1461 = vmul.f32 %v1259, 0.2
      %v1462 = vmul.f32 %v1264, 0.2
      %v1463 = vmul.f32 %v1267, 0.2
      %v1464 = vmul.f32 %v1272, 0.2
      %v1465 = vmul.f32 %v1275, 0.2
      %v1466 = vmul.f32 %v1280, 0.2
      %v1467 = vmul.f32 %v1283, 0.2
      %v1468 = vmul.f32 %v1288, 0.2
      %v1469 = vmul.f32 %v1291, 0.2
      %v1470 = vmul.f32 %v1296, 0.2
      %v1471 = vmul.f32 %v1299, 0.2
      %v1472 = vmul.f32 %v1304, 0.2
      %v1473 = vmul.f32 %v1307, 0.2
      %v1474 = vmul.f32 %v1312, 0.2
      %v1475 = vmul.f32 %v1315, 0.2
      %v1476 = vmul.f32 %v1320, 0.2
      %v1477 = vmul.f32 %v1323, 0.2
      %v1478 = vmul.f32 %v1328, 0.2
      %v1479 = vmul.f32 %v1331, 0.2
      %v1480 = vmul.f32 %v1336, 0.2
      %v1481 = vmul.f32 %v1339, 0.2
      %v1482 = vmul.f32 %v1344, 0.2
      %v1483 = vmul.f32 %v1347, 0.2
      %v1484 = vmul.f32 %v1352, 0.2
      %v1485 = vmul.f32 %v1355, 0.2
      %v1486 = vmax.f32 %v848, %v1358
      %v1487 = vmax.f32 %v851, %v1359
      %v1488 = vmax.f32 %v856, %v1360
      %v1489 = vmax.f32 %v859, %v1361
      %v1490 = vmax.f32 %v864, %v1362
      %v1491 = vmax.f32 %v867, %v1363
      %v1492 = vmax.f32 %v872, %v1364
      %v1493 = vmax.f32 %v875, %v1365
      %v1494 = vmax.f32 %v880, %v1366
      %v1495 = vmax.f32 %v883, %v1367
      %v1496 = vmax.f32 %v888, %v1368
      %v1497 = vmax.f32 %v891, %v1369
      %v1498 = vmax.f32 %v896, %v1370
      %v1499 = vmax.f32 %v899, %v1371
      %v1500 = vmax.f32 %v904, %v1372
      %v1501 = vmax.f32 %v907, %v1373
      %v1502 = vmax.f32 %v912, %v1374
      %v1503 = vmax.f32 %v915, %v1375
      %v1504 = vmax.f32 %v920, %v1376
      %v1505 = vmax.f32 %v923, %v1377
      %v1506 = vmax.f32 %v928, %v1378
      %v1507 = vmax.f32 %v931, %v1379
      %v1508 = vmax.f32 %v936, %v1380
      %v1509 = vmax.f32 %v939, %v1381
      %v1510 = vmax.f32 %v944, %v1382
      %v1511 = vmax.f32 %v947, %v1383
      %v1512 = vmax.f32 %v952, %v1384
      %v1513 = vmax.f32 %v955, %v1385
      %v1514 = vmax.f32 %v960, %v1386
      %v1515 = vmax.f32 %v963, %v1387
      %v1516 = vmax.f32 %v968, %v1388
      %v1517 = vmax.f32 %v971, %v1389
      %v1518 = vmax.f32 %v976, %v1390
      %v1519 = vmax.f32 %v979, %v1391
      %v1520 = vmax.f32 %v984, %v1392
      %v1521 = vmax.f32 %v987, %v1393
      %v1522 = vmax.f32 %v992, %v1394
      %v1523 = vmax.f32 %v995, %v1395
      %v1524 = vmax.f32 %v1000, %v1396
      %v1525 = vmax.f32 %v1003, %v1397
      %v1526 = vmax.f32 %v1008, %v1398
      %v1527 = vmax.f32 %v1011, %v1399
      %v1528 = vmax.f32 %v1016, %v1400
      %v1529 = vmax.f32 %v1019, %v1401
      %v1530 = vmax.f32 %v1024, %v1402
      %v1531 = vmax.f32 %v1027, %v1403
      %v1532 = vmax.f32 %v1032, %v1404
      %v1533 = vmax.f32 %v1035, %v1405
      %v1534 = vmax.f32 %v1040, %v1406
      %v1535 = vmax.f32 %v1043, %v1407
      %v1536 = vmax.f32 %v1048, %v1408
      %v1537 = vmax.f32 %v1051, %v1409
      %v1538 = vmax.f32 %v1056, %v1410
      %v1539 = vmax.f32 %v1059, %v1411
      %v1540 = vmax.f32 %v1064, %v1412
      %v1541 = vmax.f32 %v1067, %v1413
      %v1542 = vmax.f32 %v1072, %v1414
      %v1543 = vmax.f32 %v1075, %v1415
      %v1544 = vmax.f32 %v1080, %v1416
      %v1545 = vmax.f32 %v1083, %v1417
      %v1546 = vmax.f32 %v1088, %v1418
      %v1547 = vmax.f32 %v1091, %v1419
      %v1548 = vmax.f32 %v1096, %v1420
      %v1549 = vmax.f32 %v1099, %v1421
      %v1550 = vmax.f32 %v1104, %v1422
      %v1551 = vmax.f32 %v1107, %v1423
      %v1552 = vmax.f32 %v1112, %v1424
      %v1553 = vmax.f32 %v1115, %v1425
      %v1554 = vmax.f32 %v1120, %v1426
      %v1555 = vmax.f32 %v1123, %v1427
      %v1556 = vmax.f32 %v1128, %v1428
      %v1557 = vmax.f32 %v1131, %v1429
      %v1558 = vmax.f32 %v1136, %v1430
      %v1559 = vmax.f32 %v1139, %v1431
      %v1560 = vmax.f32 %v1144, %v1432
      %v1561 = vmax.f32 %v1147, %v1433
      %v1562 = vmax.f32 %v1152, %v1434
      %v1563 = vmax.f32 %v1155, %v1435
      %v1564 = vmax.f32 %v1160, %v1436
      %v1565 = vmax.f32 %v1163, %v1437
      %v1566 = vmax.f32 %v1168, %v1438
      %v1567 = vmax.f32 %v1171, %v1439
      %v1568 = vmax.f32 %v1176, %v1440
      %v1569 = vmax.f32 %v1179, %v1441
      %v1570 = vmax.f32 %v1184, %v1442
      %v1571 = vmax.f32 %v1187, %v1443
      %v1572 = vmax.f32 %v1192, %v1444
      %v1573 = vmax.f32 %v1195, %v1445
      %v1574 = vmax.f32 %v1200, %v1446
      %v1575 = vmax.f32 %v1203, %v1447
      %v1576 = vmax.f32 %v1208, %v1448
      %v1577 = vmax.f32 %v1211, %v1449
      %v1578 = vmax.f32 %v1216, %v1450
      %v1579 = vmax.f32 %v1219, %v1451
      %v1580 = vmax.f32 %v1224, %v1452
      %v1581 = vmax.f32 %v1227, %v1453
      %v1582 = vmax.f32 %v1232, %v1454
      %v1583 = vmax.f32 %v1235, %v1455
      %v1584 = vmax.f32 %v1240, %v1456
      %v1585 = vmax.f32 %v1243, %v1457
      %v1586 = vmax.f32 %v1248, %v1458
      %v1587 = vmax.f32 %v1251, %v1459
      %v1588 = vmax.f32 %v1256, %v1460
      %v1589 = vmax.f32 %v1259, %v1461
      %v1590 = vmax.f32 %v1264, %v1462
      %v1591 = vmax.f32 %v1267, %v1463
      %v1592 = vmax.f32 %v1272, %v1464
      %v1593 = vmax.f32 %v1275, %v1465
      %v1594 = vmax.f32 %v1280, %v1466
      %v1595 = vmax.f32 %v1283, %v1467
      %v1596 = vmax.f32 %v1288, %v1468
      %v1597 = vmax.f32 %v1291, %v1469
      %v1598 = vmax.f32 %v1296, %v1470
      %v1599 = vmax.f32 %v1299, %v1471
      %v1600 = vmax.f32 %v1304, %v1472
      %v1601 = vmax.f32 %v1307, %v1473
      %v1602 = vmax.f32 %v1312, %v1474
      %v1603 = vmax.f32 %v1315, %v1475
      %v1604 = vmax.f32 %v1320, %v1476
      %v1605 = vmax.f32 %v1323, %v1477
      %v1606 = vmax.f32 %v1328, %v1478
      %v1607 = vmax.f32 %v1331, %v1479
      %v1608 = vmax.f32 %v1336, %v1480
      %v1609 = vmax.f32 %v1339, %v1481
      %v1610 = vmax.f32 %v1344, %v1482
      %v1611 = vmax.f32 %v1347, %v1483
      %v1612 = vmax.f32 %v1352, %v1484
      %v1613 = vmax.f32 %v1355, %v1485
      %v1614 = vpack.c.bf16 %v1487, %v1486
      %v1615 = vpack.c.bf16 %v1489, %v1488
      %v1616 = vpack.c.bf16 %v1491, %v1490
      %v1617 = vpack.c.bf16 %v1493, %v1492
      %v1618 = vpack.c.bf16 %v1495, %v1494
      %v1619 = vpack.c.bf16 %v1497, %v1496
      %v1620 = vpack.c.bf16 %v1499, %v1498
      %v1621 = vpack.c.bf16 %v1501, %v1500
      %v1622 = vpack.c.bf16 %v1503, %v1502
      %v1623 = vpack.c.bf16 %v1505, %v1504
      %v1624 = vpack.c.bf16 %v1507, %v1506
      %v1625 = vpack.c.bf16 %v1509, %v1508
      %v1626 = vpack.c.bf16 %v1511, %v1510
      %v1627 = vpack.c.bf16 %v1513, %v1512
      %v1628 = vpack.c.bf16 %v1515, %v1514
      %v1629 = vpack.c.bf16 %v1517, %v1516
      %v1630 = vpack.c.bf16 %v1519, %v1518
      %v1631 = vpack.c.bf16 %v1521, %v1520
      %v1632 = vpack.c.bf16 %v1523, %v1522
      %v1633 = vpack.c.bf16 %v1525, %v1524
      %v1634 = vpack.c.bf16 %v1527, %v1526
      %v1635 = vpack.c.bf16 %v1529, %v1528
      %v1636 = vpack.c.bf16 %v1531, %v1530
      %v1637 = vpack.c.bf16 %v1533, %v1532
      %v1638 = vpack.c.bf16 %v1535, %v1534
      %v1639 = vpack.c.bf16 %v1537, %v1536
      %v1640 = vpack.c.bf16 %v1539, %v1538
      %v1641 = vpack.c.bf16 %v1541, %v1540
      %v1642 = vpack.c.bf16 %v1543, %v1542
      %v1643 = vpack.c.bf16 %v1545, %v1544
      %v1644 = vpack.c.bf16 %v1547, %v1546
      %v1645 = vpack.c.bf16 %v1549, %v1548
      %v1646 = vpack.c.bf16 %v1551, %v1550
      %v1647 = vpack.c.bf16 %v1553, %v1552
      %v1648 = vpack.c.bf16 %v1555, %v1554
      %v1649 = vpack.c.bf16 %v1557, %v1556
      %v1650 = vpack.c.bf16 %v1559, %v1558
      %v1651 = vpack.c.bf16 %v1561, %v1560
      %v1652 = vpack.c.bf16 %v1563, %v1562
      %v1653 = vpack.c.bf16 %v1565, %v1564
      %v1654 = vpack.c.bf16 %v1567, %v1566
      %v1655 = vpack.c.bf16 %v1569, %v1568
      %v1656 = vpack.c.bf16 %v1571, %v1570
      %v1657 = vpack.c.bf16 %v1573, %v1572
      %v1658 = vpack.c.bf16 %v1575, %v1574
      %v1659 = vpack.c.bf16 %v1577, %v1576
      %v1660 = vpack.c.bf16 %v1579, %v1578
      %v1661 = vpack.c.bf16 %v1581, %v1580
      %v1662 = vpack.c.bf16 %v1583, %v1582
      %v1663 = vpack.c.bf16 %v1585, %v1584
      %v1664 = vpack.c.bf16 %v1587, %v1586
      %v1665 = vpack.c.bf16 %v1589, %v1588
      %v1666 = vpack.c.bf16 %v1591, %v1590
      %v1667 = vpack.c.bf16 %v1593, %v1592
      %v1668 = vpack.c.bf16 %v1595, %v1594
      %v1669 = vpack.c.bf16 %v1597, %v1596
      %v1670 = vpack.c.bf16 %v1599, %v1598
      %v1671 = vpack.c.bf16 %v1601, %v1600
      %v1672 = vpack.c.bf16 %v1603, %v1602
      %v1673 = vpack.c.bf16 %v1605, %v1604
      %v1674 = vpack.c.bf16 %v1607, %v1606
      %v1675 = vpack.c.bf16 %v1609, %v1608
      %v1676 = vpack.c.bf16 %v1611, %v1610
      %v1677 = vpack.c.bf16 %v1613, %v1612
      %v1742 = vunpack.c.l.b16 %v1614
      %v1743 = vunpack.c.h.b16 %v1614
      %v1744 = vunpack.c.l.b16 %v1615
      %v1745 = vunpack.c.h.b16 %v1615
      %v1746 = vunpack.c.l.b16 %v1616
      %v1747 = vunpack.c.h.b16 %v1616
      %v1748 = vunpack.c.l.b16 %v1617
      %v1749 = vunpack.c.h.b16 %v1617
      %v1750 = vunpack.c.l.b16 %v1618
      %v1751 = vunpack.c.h.b16 %v1618
      %v1752 = vunpack.c.l.b16 %v1619
      %v1753 = vunpack.c.h.b16 %v1619
      %v1754 = vunpack.c.l.b16 %v1620
      %v1755 = vunpack.c.h.b16 %v1620
      %v1756 = vunpack.c.l.b16 %v1621
      %v1757 = vunpack.c.h.b16 %v1621
      %v1758 = vunpack.c.l.b16 %v1622
      %v1759 = vunpack.c.h.b16 %v1622
      %v1760 = vunpack.c.l.b16 %v1623
      %v1761 = vunpack.c.h.b16 %v1623
      %v1762 = vunpack.c.l.b16 %v1624
      %v1763 = vunpack.c.h.b16 %v1624
      %v1764 = vunpack.c.l.b16 %v1625
      %v1765 = vunpack.c.h.b16 %v1625
      %v1766 = vunpack.c.l.b16 %v1626
      %v1767 = vunpack.c.h.b16 %v1626
      %v1768 = vunpack.c.l.b16 %v1627
      %v1769 = vunpack.c.h.b16 %v1627
      %v1770 = vunpack.c.l.b16 %v1628
      %v1771 = vunpack.c.h.b16 %v1628
      %v1772 = vunpack.c.l.b16 %v1629
      %v1773 = vunpack.c.h.b16 %v1629
      %v1774 = vunpack.c.l.b16 %v1630
      %v1775 = vunpack.c.h.b16 %v1630
      %v1776 = vunpack.c.l.b16 %v1631
      %v1777 = vunpack.c.h.b16 %v1631
      %v1778 = vunpack.c.l.b16 %v1632
      %v1779 = vunpack.c.h.b16 %v1632
      %v1780 = vunpack.c.l.b16 %v1633
      %v1781 = vunpack.c.h.b16 %v1633
      %v1782 = vunpack.c.l.b16 %v1634
      %v1783 = vunpack.c.h.b16 %v1634
      %v1784 = vunpack.c.l.b16 %v1635
      %v1785 = vunpack.c.h.b16 %v1635
      %v1786 = vunpack.c.l.b16 %v1636
      %v1787 = vunpack.c.h.b16 %v1636
      %v1788 = vunpack.c.l.b16 %v1637
      %v1789 = vunpack.c.h.b16 %v1637
      %v1790 = vunpack.c.l.b16 %v1638
      %v1791 = vunpack.c.h.b16 %v1638
      %v1792 = vunpack.c.l.b16 %v1639
      %v1793 = vunpack.c.h.b16 %v1639
      %v1794 = vunpack.c.l.b16 %v1640
      %v1795 = vunpack.c.h.b16 %v1640
      %v1796 = vunpack.c.l.b16 %v1641
      %v1797 = vunpack.c.h.b16 %v1641
      %v1798 = vunpack.c.l.b16 %v1642
      %v1799 = vunpack.c.h.b16 %v1642
      %v1800 = vunpack.c.l.b16 %v1643
      %v1801 = vunpack.c.h.b16 %v1643
      %v1802 = vunpack.c.l.b16 %v1644
      %v1803 = vunpack.c.h.b16 %v1644
      %v1804 = vunpack.c.l.b16 %v1645
      %v1805 = vunpack.c.h.b16 %v1645
      %v1806 = vunpack.c.l.b16 %v1646
      %v1807 = vunpack.c.h.b16 %v1646
      %v1808 = vunpack.c.l.b16 %v1647
      %v1809 = vunpack.c.h.b16 %v1647
      %v1810 = vunpack.c.l.b16 %v1648
      %v1811 = vunpack.c.h.b16 %v1648
      %v1812 = vunpack.c.l.b16 %v1649
      %v1813 = vunpack.c.h.b16 %v1649
      %v1814 = vunpack.c.l.b16 %v1650
      %v1815 = vunpack.c.h.b16 %v1650
      %v1816 = vunpack.c.l.b16 %v1651
      %v1817 = vunpack.c.h.b16 %v1651
      %v1818 = vunpack.c.l.b16 %v1652
      %v1819 = vunpack.c.h.b16 %v1652
      %v1820 = vunpack.c.l.b16 %v1653
      %v1821 = vunpack.c.h.b16 %v1653
      %v1822 = vunpack.c.l.b16 %v1654
      %v1823 = vunpack.c.h.b16 %v1654
      %v1824 = vunpack.c.l.b16 %v1655
      %v1825 = vunpack.c.h.b16 %v1655
      %v1826 = vunpack.c.l.b16 %v1656
      %v1827 = vunpack.c.h.b16 %v1656
      %v1828 = vunpack.c.l.b16 %v1657
      %v1829 = vunpack.c.h.b16 %v1657
      %v1830 = vunpack.c.l.b16 %v1658
      %v1831 = vunpack.c.h.b16 %v1658
      %v1832 = vunpack.c.l.b16 %v1659
      %v1833 = vunpack.c.h.b16 %v1659
      %v1834 = vunpack.c.l.b16 %v1660
      %v1835 = vunpack.c.h.b16 %v1660
      %v1836 = vunpack.c.l.b16 %v1661
      %v1837 = vunpack.c.h.b16 %v1661
      %v1838 = vunpack.c.l.b16 %v1662
      %v1839 = vunpack.c.h.b16 %v1662
      %v1840 = vunpack.c.l.b16 %v1663
      %v1841 = vunpack.c.h.b16 %v1663
      %v1842 = vunpack.c.l.b16 %v1664
      %v1843 = vunpack.c.h.b16 %v1664
      %v1844 = vunpack.c.l.b16 %v1665
      %v1845 = vunpack.c.h.b16 %v1665
      %v1846 = vunpack.c.l.b16 %v1666
      %v1847 = vunpack.c.h.b16 %v1666
      %v1848 = vunpack.c.l.b16 %v1667
      %v1849 = vunpack.c.h.b16 %v1667
      %v1850 = vunpack.c.l.b16 %v1668
      %v1851 = vunpack.c.h.b16 %v1668
      %v1852 = vunpack.c.l.b16 %v1669
      %v1853 = vunpack.c.h.b16 %v1669
      %v1854 = vunpack.c.l.b16 %v1670
      %v1855 = vunpack.c.h.b16 %v1670
      %v1856 = vunpack.c.l.b16 %v1671
      %v1857 = vunpack.c.h.b16 %v1671
      %v1858 = vunpack.c.l.b16 %v1672
      %v1859 = vunpack.c.h.b16 %v1672
      %v1860 = vunpack.c.l.b16 %v1673
      %v1861 = vunpack.c.h.b16 %v1673
      %v1862 = vunpack.c.l.b16 %v1674
      %v1863 = vunpack.c.h.b16 %v1674
      %v1864 = vunpack.c.l.b16 %v1675
      %v1865 = vunpack.c.h.b16 %v1675
      %v1866 = vunpack.c.l.b16 %v1676
      %v1867 = vunpack.c.h.b16 %v1676
      %v1868 = vunpack.c.l.b16 %v1677
      %v1869 = vunpack.c.h.b16 %v1677
      %v1870 = vpack.c.b16 %v1742, %v1742
      %v1871 = vpack.c.b16 %v1743, %v1743
      %v1872 = vpack.c.b16 %v1744, %v1744
      %v1873 = vpack.c.b16 %v1745, %v1745
      %v1874 = vpack.c.b16 %v1746, %v1746
      %v1875 = vpack.c.b16 %v1747, %v1747
      %v1876 = vpack.c.b16 %v1748, %v1748
      %v1877 = vpack.c.b16 %v1749, %v1749
      %v1878 = vpack.c.b16 %v1750, %v1750
      %v1879 = vpack.c.b16 %v1751, %v1751
      %v1880 = vpack.c.b16 %v1752, %v1752
      %v1881 = vpack.c.b16 %v1753, %v1753
      %v1882 = vpack.c.b16 %v1754, %v1754
      %v1883 = vpack.c.b16 %v1755, %v1755
      %v1884 = vpack.c.b16 %v1756, %v1756
      %v1885 = vpack.c.b16 %v1757, %v1757
      %v1886 = vpack.c.b16 %v1758, %v1758
      %v1887 = vpack.c.b16 %v1759, %v1759
      %v1888 = vpack.c.b16 %v1760, %v1760
      %v1889 = vpack.c.b16 %v1761, %v1761
      %v1890 = vpack.c.b16 %v1762, %v1762
      %v1891 = vpack.c.b16 %v1763, %v1763
      %v1892 = vpack.c.b16 %v1764, %v1764
      %v1893 = vpack.c.b16 %v1765, %v1765
      %v1894 = vpack.c.b16 %v1766, %v1766
      %v1895 = vpack.c.b16 %v1767, %v1767
      %v1896 = vpack.c.b16 %v1768, %v1768
      %v1897 = vpack.c.b16 %v1769, %v1769
      %v1898 = vpack.c.b16 %v1770, %v1770
      %v1899 = vpack.c.b16 %v1771, %v1771
      %v1900 = vpack.c.b16 %v1772, %v1772
      %v1901 = vpack.c.b16 %v1773, %v1773
      %v1902 = vpack.c.b16 %v1774, %v1774
      %v1903 = vpack.c.b16 %v1775, %v1775
      %v1904 = vpack.c.b16 %v1776, %v1776
      %v1905 = vpack.c.b16 %v1777, %v1777
      %v1906 = vpack.c.b16 %v1778, %v1778
      %v1907 = vpack.c.b16 %v1779, %v1779
      %v1908 = vpack.c.b16 %v1780, %v1780
      %v1909 = vpack.c.b16 %v1781, %v1781
      %v1910 = vpack.c.b16 %v1782, %v1782
      %v1911 = vpack.c.b16 %v1783, %v1783
      %v1912 = vpack.c.b16 %v1784, %v1784
      %v1913 = vpack.c.b16 %v1785, %v1785
      %v1914 = vpack.c.b16 %v1786, %v1786
      %v1915 = vpack.c.b16 %v1787, %v1787
      %v1916 = vpack.c.b16 %v1788, %v1788
      %v1917 = vpack.c.b16 %v1789, %v1789
      %v1918 = vpack.c.b16 %v1790, %v1790
      %v1919 = vpack.c.b16 %v1791, %v1791
      %v1920 = vpack.c.b16 %v1792, %v1792
      %v1921 = vpack.c.b16 %v1793, %v1793
      %v1922 = vpack.c.b16 %v1794, %v1794
      %v1923 = vpack.c.b16 %v1795, %v1795
      %v1924 = vpack.c.b16 %v1796, %v1796
      %v1925 = vpack.c.b16 %v1797, %v1797
      %v1926 = vpack.c.b16 %v1798, %v1798
      %v1927 = vpack.c.b16 %v1799, %v1799
      %v1928 = vpack.c.b16 %v1800, %v1800
      %v1929 = vpack.c.b16 %v1801, %v1801
      %v1930 = vpack.c.b16 %v1802, %v1802
      %v1931 = vpack.c.b16 %v1803, %v1803
      %v1932 = vpack.c.b16 %v1804, %v1804
      %v1933 = vpack.c.b16 %v1805, %v1805
      %v1934 = vpack.c.b16 %v1806, %v1806
      %v1935 = vpack.c.b16 %v1807, %v1807
      %v1936 = vpack.c.b16 %v1808, %v1808
      %v1937 = vpack.c.b16 %v1809, %v1809
      %v1938 = vpack.c.b16 %v1810, %v1810
      %v1939 = vpack.c.b16 %v1811, %v1811
      %v1940 = vpack.c.b16 %v1812, %v1812
      %v1941 = vpack.c.b16 %v1813, %v1813
      %v1942 = vpack.c.b16 %v1814, %v1814
      %v1943 = vpack.c.b16 %v1815, %v1815
      %v1944 = vpack.c.b16 %v1816, %v1816
      %v1945 = vpack.c.b16 %v1817, %v1817
      %v1946 = vpack.c.b16 %v1818, %v1818
      %v1947 = vpack.c.b16 %v1819, %v1819
      %v1948 = vpack.c.b16 %v1820, %v1820
      %v1949 = vpack.c.b16 %v1821, %v1821
      %v1950 = vpack.c.b16 %v1822, %v1822
      %v1951 = vpack.c.b16 %v1823, %v1823
      %v1952 = vpack.c.b16 %v1824, %v1824
      %v1953 = vpack.c.b16 %v1825, %v1825
      %v1954 = vpack.c.b16 %v1826, %v1826
      %v1955 = vpack.c.b16 %v1827, %v1827
      %v1956 = vpack.c.b16 %v1828, %v1828
      %v1957 = vpack.c.b16 %v1829, %v1829
      %v1958 = vpack.c.b16 %v1830, %v1830
      %v1959 = vpack.c.b16 %v1831, %v1831
      %v1960 = vpack.c.b16 %v1832, %v1832
      %v1961 = vpack.c.b16 %v1833, %v1833
      %v1962 = vpack.c.b16 %v1834, %v1834
      %v1963 = vpack.c.b16 %v1835, %v1835
      %v1964 = vpack.c.b16 %v1836, %v1836
      %v1965 = vpack.c.b16 %v1837, %v1837
      %v1966 = vpack.c.b16 %v1838, %v1838
      %v1967 = vpack.c.b16 %v1839, %v1839
      %v1968 = vpack.c.b16 %v1840, %v1840
      %v1969 = vpack.c.b16 %v1841, %v1841
      %v1970 = vpack.c.b16 %v1842, %v1842
      %v1971 = vpack.c.b16 %v1843, %v1843
      %v1972 = vpack.c.b16 %v1844, %v1844
      %v1973 = vpack.c.b16 %v1845, %v1845
      %v1974 = vpack.c.b16 %v1846, %v1846
      %v1975 = vpack.c.b16 %v1847, %v1847
      %v1976 = vpack.c.b16 %v1848, %v1848
      %v1977 = vpack.c.b16 %v1849, %v1849
      %v1978 = vpack.c.b16 %v1850, %v1850
      %v1979 = vpack.c.b16 %v1851, %v1851
      %v1980 = vpack.c.b16 %v1852, %v1852
      %v1981 = vpack.c.b16 %v1853, %v1853
      %v1982 = vpack.c.b16 %v1854, %v1854
      %v1983 = vpack.c.b16 %v1855, %v1855
      %v1984 = vpack.c.b16 %v1856, %v1856
      %v1985 = vpack.c.b16 %v1857, %v1857
      %v1986 = vpack.c.b16 %v1858, %v1858
      %v1987 = vpack.c.b16 %v1859, %v1859
      %v1988 = vpack.c.b16 %v1860, %v1860
      %v1989 = vpack.c.b16 %v1861, %v1861
      %v1990 = vpack.c.b16 %v1862, %v1862
      %v1991 = vpack.c.b16 %v1863, %v1863
      %v1992 = vpack.c.b16 %v1864, %v1864
      %v1993 = vpack.c.b16 %v1865, %v1865
      %v1994 = vpack.c.b16 %v1866, %v1866
      %v1995 = vpack.c.b16 %v1867, %v1867
      %v1996 = vpack.c.b16 %v1868, %v1868
      %v1997 = vpack.c.b16 %v1869, %v1869
      %2126 = vst [vmem:[%s145] sm:$0xf] %v1870
      %2127 = vst [vmem:[%s145 + $0x4] sm:$0xf] %v1871
      %2128 = vst [vmem:[%s145 + $0x8] sm:$0xf] %v1872
      %2129 = vst [vmem:[%s145 + $0xc] sm:$0xf] %v1873
      %2130 = vst [vmem:[%s145 + $0x10] sm:$0xf] %v1874
      %2131 = vst [vmem:[%s145 + $0x14] sm:$0xf] %v1875
      %2132 = vst [vmem:[%s145 + $0x18] sm:$0xf] %v1876
      %2133 = vst [vmem:[%s145 + $0x1c] sm:$0xf] %v1877
      %2134 = vst [vmem:[%s145 + $0x20] sm:$0xf] %v1878
      %2135 = vst [vmem:[%s145 + $0x24] sm:$0xf] %v1879
      %2136 = vst [vmem:[%s145 + $0x28] sm:$0xf] %v1880
      %2137 = vst [vmem:[%s145 + $0x2c] sm:$0xf] %v1881
      %2138 = vst [vmem:[%s145 + $0x30] sm:$0xf] %v1882
      %2139 = vst [vmem:[%s145 + $0x34] sm:$0xf] %v1883
      %2140 = vst [vmem:[%s145 + $0x38] sm:$0xf] %v1884
      %2141 = vst [vmem:[%s145 + $0x3c] sm:$0xf] %v1885
      %2142 = vst [vmem:[%s145 + $0x40] sm:$0xf] %v1886
      %2143 = vst [vmem:[%s145 + $0x44] sm:$0xf] %v1887
      %2144 = vst [vmem:[%s145 + $0x48] sm:$0xf] %v1888
      %2145 = vst [vmem:[%s145 + $0x4c] sm:$0xf] %v1889
      %2146 = vst [vmem:[%s145 + $0x50] sm:$0xf] %v1890
      %2147 = vst [vmem:[%s145 + $0x54] sm:$0xf] %v1891
      %2148 = vst [vmem:[%s145 + $0x58] sm:$0xf] %v1892
      %2149 = vst [vmem:[%s145 + $0x5c] sm:$0xf] %v1893
      %2150 = vst [vmem:[%s145 + $0x60] sm:$0xf] %v1894
      %2151 = vst [vmem:[%s145 + $0x64] sm:$0xf] %v1895
      %2152 = vst [vmem:[%s145 + $0x68] sm:$0xf] %v1896
      %2153 = vst [vmem:[%s145 + $0x6c] sm:$0xf] %v1897
      %2154 = vst [vmem:[%s145 + $0x70] sm:$0xf] %v1898
      %2155 = vst [vmem:[%s145 + $0x74] sm:$0xf] %v1899
      %2156 = vst [vmem:[%s145 + $0x78] sm:$0xf] %v1900
      %2157 = vst [vmem:[%s145 + $0x7c] sm:$0xf] %v1901
      %2158 = vst [vmem:[%s145 + $0x80] sm:$0xf] %v1902
      %2159 = vst [vmem:[%s145 + $0x84] sm:$0xf] %v1903
      %2160 = vst [vmem:[%s145 + $0x88] sm:$0xf] %v1904
      %2161 = vst [vmem:[%s145 + $0x8c] sm:$0xf] %v1905
      %2162 = vst [vmem:[%s145 + $0x90] sm:$0xf] %v1906
      %2163 = vst [vmem:[%s145 + $0x94] sm:$0xf] %v1907
      %2164 = vst [vmem:[%s145 + $0x98] sm:$0xf] %v1908
      %2165 = vst [vmem:[%s145 + $0x9c] sm:$0xf] %v1909
      %2166 = vst [vmem:[%s145 + $0xa0] sm:$0xf] %v1910
      %2167 = vst [vmem:[%s145 + $0xa4] sm:$0xf] %v1911
      %2168 = vst [vmem:[%s145 + $0xa8] sm:$0xf] %v1912
      %2169 = vst [vmem:[%s145 + $0xac] sm:$0xf] %v1913
      %2170 = vst [vmem:[%s145 + $0xb0] sm:$0xf] %v1914
      %2171 = vst [vmem:[%s145 + $0xb4] sm:$0xf] %v1915
      %2172 = vst [vmem:[%s145 + $0xb8] sm:$0xf] %v1916
      %2173 = vst [vmem:[%s145 + $0xbc] sm:$0xf] %v1917
      %2174 = vst [vmem:[%s145 + $0xc0] sm:$0xf] %v1918
      %2175 = vst [vmem:[%s145 + $0xc4] sm:$0xf] %v1919
      %2176 = vst [vmem:[%s145 + $0xc8] sm:$0xf] %v1920
      %2177 = vst [vmem:[%s145 + $0xcc] sm:$0xf] %v1921
      %2178 = vst [vmem:[%s145 + $0xd0] sm:$0xf] %v1922
      %2179 = vst [vmem:[%s145 + $0xd4] sm:$0xf] %v1923
      %2180 = vst [vmem:[%s145 + $0xd8] sm:$0xf] %v1924
      %2181 = vst [vmem:[%s145 + $0xdc] sm:$0xf] %v1925
      %2182 = vst [vmem:[%s145 + $0xe0] sm:$0xf] %v1926
      %2183 = vst [vmem:[%s145 + $0xe4] sm:$0xf] %v1927
      %2184 = vst [vmem:[%s145 + $0xe8] sm:$0xf] %v1928
      %2185 = vst [vmem:[%s145 + $0xec] sm:$0xf] %v1929
      %2186 = vst [vmem:[%s145 + $0xf0] sm:$0xf] %v1930
      %2187 = vst [vmem:[%s145 + $0xf4] sm:$0xf] %v1931
      %2188 = vst [vmem:[%s145 + $0xf8] sm:$0xf] %v1932
      %2189 = vst [vmem:[%s145 + $0xfc] sm:$0xf] %v1933
      %2190 = vst [vmem:[%s145 + $0x100] sm:$0xf] %v1934
      %2191 = vst [vmem:[%s145 + $0x104] sm:$0xf] %v1935
      %2192 = vst [vmem:[%s145 + $0x108] sm:$0xf] %v1936
      %2193 = vst [vmem:[%s145 + $0x10c] sm:$0xf] %v1937
      %2194 = vst [vmem:[%s145 + $0x110] sm:$0xf] %v1938
      %2195 = vst [vmem:[%s145 + $0x114] sm:$0xf] %v1939
      %2196 = vst [vmem:[%s145 + $0x118] sm:$0xf] %v1940
      %2197 = vst [vmem:[%s145 + $0x11c] sm:$0xf] %v1941
      %2198 = vst [vmem:[%s145 + $0x120] sm:$0xf] %v1942
      %2199 = vst [vmem:[%s145 + $0x124] sm:$0xf] %v1943
      %2200 = vst [vmem:[%s145 + $0x128] sm:$0xf] %v1944
      %2201 = vst [vmem:[%s145 + $0x12c] sm:$0xf] %v1945
      %2202 = vst [vmem:[%s145 + $0x130] sm:$0xf] %v1946
      %2203 = vst [vmem:[%s145 + $0x134] sm:$0xf] %v1947
      %2204 = vst [vmem:[%s145 + $0x138] sm:$0xf] %v1948
      %2205 = vst [vmem:[%s145 + $0x13c] sm:$0xf] %v1949
      %2206 = vst [vmem:[%s145 + $0x140] sm:$0xf] %v1950
      %2207 = vst [vmem:[%s145 + $0x144] sm:$0xf] %v1951
      %2208 = vst [vmem:[%s145 + $0x148] sm:$0xf] %v1952
      %2209 = vst [vmem:[%s145 + $0x14c] sm:$0xf] %v1953
      %2210 = vst [vmem:[%s145 + $0x150] sm:$0xf] %v1954
      %2211 = vst [vmem:[%s145 + $0x154] sm:$0xf] %v1955
      %2212 = vst [vmem:[%s145 + $0x158] sm:$0xf] %v1956
      %2213 = vst [vmem:[%s145 + $0x15c] sm:$0xf] %v1957
      %2214 = vst [vmem:[%s145 + $0x160] sm:$0xf] %v1958
      %2215 = vst [vmem:[%s145 + $0x164] sm:$0xf] %v1959
      %2216 = vst [vmem:[%s145 + $0x168] sm:$0xf] %v1960
      %2217 = vst [vmem:[%s145 + $0x16c] sm:$0xf] %v1961
      %2218 = vst [vmem:[%s145 + $0x170] sm:$0xf] %v1962
      %2219 = vst [vmem:[%s145 + $0x174] sm:$0xf] %v1963
      %2220 = vst [vmem:[%s145 + $0x178] sm:$0xf] %v1964
      %2221 = vst [vmem:[%s145 + $0x17c] sm:$0xf] %v1965
      %2222 = vst [vmem:[%s145 + $0x180] sm:$0xf] %v1966
      %2223 = vst [vmem:[%s145 + $0x184] sm:$0xf] %v1967
      %2224 = vst [vmem:[%s145 + $0x188] sm:$0xf] %v1968
      %2225 = vst [vmem:[%s145 + $0x18c] sm:$0xf] %v1969
      %2226 = vst [vmem:[%s145 + $0x190] sm:$0xf] %v1970
      %2227 = vst [vmem:[%s145 + $0x194] sm:$0xf] %v1971
      %2228 = vst [vmem:[%s145 + $0x198] sm:$0xf] %v1972
      %2229 = vst [vmem:[%s145 + $0x19c] sm:$0xf] %v1973
      %2230 = vst [vmem:[%s145 + $0x1a0] sm:$0xf] %v1974
      %2231 = vst [vmem:[%s145 + $0x1a4] sm:$0xf] %v1975
      %2232 = vst [vmem:[%s145 + $0x1a8] sm:$0xf] %v1976
      %2233 = vst [vmem:[%s145 + $0x1ac] sm:$0xf] %v1977
      %2234 = vst [vmem:[%s145 + $0x1b0] sm:$0xf] %v1978
      %2235 = vst [vmem:[%s145 + $0x1b4] sm:$0xf] %v1979
      %2236 = vst [vmem:[%s145 + $0x1b8] sm:$0xf] %v1980
      %2237 = vst [vmem:[%s145 + $0x1bc] sm:$0xf] %v1981
      %2238 = vst [vmem:[%s145 + $0x1c0] sm:$0xf] %v1982
      %2239 = vst [vmem:[%s145 + $0x1c4] sm:$0xf] %v1983
      %2240 = vst [vmem:[%s145 + $0x1c8] sm:$0xf] %v1984
      %2241 = vst [vmem:[%s145 + $0x1cc] sm:$0xf] %v1985
      %2242 = vst [vmem:[%s145 + $0x1d0] sm:$0xf] %v1986
      %2243 = vst [vmem:[%s145 + $0x1d4] sm:$0xf] %v1987
      %2244 = vst [vmem:[%s145 + $0x1d8] sm:$0xf] %v1988
      %2245 = vst [vmem:[%s145 + $0x1dc] sm:$0xf] %v1989
      %2246 = vst [vmem:[%s145 + $0x1e0] sm:$0xf] %v1990
      %2247 = vst [vmem:[%s145 + $0x1e4] sm:$0xf] %v1991
      %2248 = vst [vmem:[%s145 + $0x1e8] sm:$0xf] %v1992
      %2249 = vst [vmem:[%s145 + $0x1ec] sm:$0xf] %v1993
      %2250 = vst [vmem:[%s145 + $0x1f0] sm:$0xf] %v1994
      %2251 = vst [vmem:[%s145 + $0x1f4] sm:$0xf] %v1995
      %2252 = vst [vmem:[%s145 + $0x1f8] sm:$0xf] %v1996
      %2253 = vst [vmem:[%s145 + $0x1fc] sm:$0xf] %v1997
      %s2254 = smul.u32 128, %s13
      %p2255 = scmp.lt.s32.totalorder %s2254, 255
      %s2256 = scalar_select %p2255, %s2254, 255
      %s2257 = smul.addr %s2256, 4
      %s2258 = scalar_lea.vmem %s2, %s2257
      // Predicated region
      $region29: #{_lambda_.4} parent=27 // pred_check
        %p2259 = pneg %p78
      $region30: #{_lambda_.4} parent=27 // pred_check_branch
        %2261 = sbr.rel (%p2259) target = $region32
      $region31: #{_lambda_.4} parent=27 // pred_region
        %s2262 = smul.u32 128, %s13
      $region32: #{_lambda_.4} parent=27 // pred_fallthru
        _
    $region28: #{_lambda_.4} parent=5 // pred_fallthru
      _
    %p2263 = scmp.le.s32.totalorder 2, %s8
    // Predicated region
    $region33: #{_lambda_.4} parent=5 // pred_check
      %p2264 = pneg %p2263
    $region34: #{_lambda_.4} parent=5 // pred_check_branch
      %2266 = sbr.rel (%p2264) target = $region36
    $region35: #{_lambda_.4} parent=5 // pred_region
      %s2267 = ssub.s32 %s8, 2
      // Predicated region
      $region37: #{_lambda_.4} parent=35 // pred_check
        %p2268 = pneg %p84
      $region38: #{_lambda_.4} parent=35 // pred_check_branch
        %2270 = sbr.rel (%p2268) target = $region40
      $region39: #{_lambda_.4} parent=35 // pred_region
        %s2271 = smul.u32 128, %s14
        %p2272 = scmp.lt.s32.totalorder %s2271, 255
        %s2273 = scalar_select %p2272, %s2271, 255
        %s2274 = smul.addr %s2273, 4
        %s2275 = scalar_lea.vmem %s2, %s2274
      $region40: #{_lambda_.4} parent=35 // pred_fallthru
        _
    $region36: #{_lambda_.4} parent=5 // pred_fallthru
      _
  $region6: #{_lambda_.4} parent=0 // loop_footer
    %s12 = sadd.s32 1, %s8
  $region7: #{_lambda_.4} parent=0 // loop_footer_branch
    %7 = sbr.rel target = $region3
  $region8: #{_lambda_.4} parent=0 // loop_exit
    _

// kernel: _lambda_.5
$region0: #{_lambda_.5}
  #allocation0 [shape = 'u32[]', space=smem, size = 0x4, offset = 0x4, fixed_abs, tag = 'smem constant byte address 0x4 - core index']
  #allocation1 [shape = 'u32[144,128]{1,0:T(1,128)}', space=vmem, size = 0x12000, scoped, tag = 'internal scratch']
  %s0 = inlined_call_operand.vmem [shape: bf16[512,128], index: 0, kind: input, shape index: {}]
  %s1 = inlined_call_operand.vmem [shape: bf16[128,128], index: 1, kind: input, shape index: {}]
  %s2 = inlined_call_operand.vmem [shape: f32[1,128], index: 2, kind: input, shape index: {}]
  %s3 = inlined_call_operand.vmem [shape: f32[1,128], index: 3, kind: input, shape index: {}]
  %s4 = inlined_call_operand.vmem [shape: bf16[512,128], index: 4, kind: output, shape index: {}]
  %s5 = sld [smem:[#allocation0]]
  $region26: #{_lambda_.5} parent=0
    _
  %s7 = ssub.s32 1, %s5
  %s8 = scalar_select 0, %s7, %s5
  // Predicated region
  $region2: #{_lambda_.5} parent=0 // pred_check
    _
  $region3: #{_lambda_.5} parent=0 // pred_check_branch
    %10 = sbr.rel (0) target = $region5
  $region4: #{_lambda_.5} parent=0 // pred_region
    _
  $region5: #{_lambda_.5} parent=0 // pred_fallthru
    _
  // Predicated region
  $region6: #{_lambda_.5} parent=0 // pred_check
    _
  $region7: #{_lambda_.5} parent=0 // pred_check_branch
    %12 = sbr.rel (0) target = $region9
  $region8: #{_lambda_.5} parent=0 // pred_region
    _
  $region9: #{_lambda_.5} parent=0 // pred_fallthru
    _
  // Predicated region
  $region10: #{_lambda_.5} parent=0 // pred_check
    _
  $region11: #{_lambda_.5} parent=0 // pred_check_branch
    %14 = sbr.rel (0) target = $region13
  $region12: #{_lambda_.5} parent=0 // pred_region
    _
  $region13: #{_lambda_.5} parent=0 // pred_fallthru
    _
  // Predicated region
  $region14: #{_lambda_.5} parent=0 // pred_check
    _
  $region15: #{_lambda_.5} parent=0 // pred_check_branch
    %16 = sbr.rel (0) target = $region17
  $region16: #{_lambda_.5} parent=0 // pred_region
    _
  $region17: #{_lambda_.5} parent=0 // pred_fallthru
    _
  %v18 = vld [vmem:[%s0] sm:$0xf]
  %v19 = vld [vmem:[%s0 + $0x4] sm:$0xf]
  %v20 = vld [vmem:[%s0 + $0x8] sm:$0xf]
  %v21 = vld [vmem:[%s0 + $0xc] sm:$0xf]
  %v22 = vld [vmem:[%s0 + $0x10] sm:$0xf]
  %v23 = vld [vmem:[%s0 + $0x14] sm:$0xf]
  %v24 = vld [vmem:[%s0 + $0x18] sm:$0xf]
  %v25 = vld [vmem:[%s0 + $0x1c] sm:$0xf]
  %v26 = vld [vmem:[%s0 + $0x20] sm:$0xf]
  %v27 = vld [vmem:[%s0 + $0x24] sm:$0xf]
  %v28 = vld [vmem:[%s0 + $0x28] sm:$0xf]
  %v29 = vld [vmem:[%s0 + $0x2c] sm:$0xf]
  %v30 = vld [vmem:[%s0 + $0x30] sm:$0xf]
  %v31 = vld [vmem:[%s0 + $0x34] sm:$0xf]
  %v32 = vld [vmem:[%s0 + $0x38] sm:$0xf]
  %v33 = vld [vmem:[%s0 + $0x3c] sm:$0xf]
  %v34 = vld [vmem:[%s0 + $0x40] sm:$0xf]
  %v35 = vld [vmem:[%s0 + $0x44] sm:$0xf]
  %v36 = vld [vmem:[%s0 + $0x48] sm:$0xf]
  %v37 = vld [vmem:[%s0 + $0x4c] sm:$0xf]
  %v38 = vld [vmem:[%s0 + $0x50] sm:$0xf]
  %v39 = vld [vmem:[%s0 + $0x54] sm:$0xf]
  %v40 = vld [vmem:[%s0 + $0x58] sm:$0xf]
  %v41 = vld [vmem:[%s0 + $0x5c] sm:$0xf]
  %v42 = vld [vmem:[%s0 + $0x60] sm:$0xf]
  %v43 = vld [vmem:[%s0 + $0x64] sm:$0xf]
  %v44 = vld [vmem:[%s0 + $0x68] sm:$0xf]
  %v45 = vld [vmem:[%s0 + $0x6c] sm:$0xf]
  %v46 = vld [vmem:[%s0 + $0x70] sm:$0xf]
  %v47 = vld [vmem:[%s0 + $0x74] sm:$0xf]
  %v48 = vld [vmem:[%s0 + $0x78] sm:$0xf]
  %v49 = vld [vmem:[%s0 + $0x7c] sm:$0xf]
  %v50 = vld [vmem:[%s0 + $0x80] sm:$0xf]
  %v51 = vld [vmem:[%s0 + $0x84] sm:$0xf]
  %v52 = vld [vmem:[%s0 + $0x88] sm:$0xf]
  %v53 = vld [vmem:[%s0 + $0x8c] sm:$0xf]
  %v54 = vld [vmem:[%s0 + $0x90] sm:$0xf]
  %v55 = vld [vmem:[%s0 + $0x94] sm:$0xf]
  %v56 = vld [vmem:[%s0 + $0x98] sm:$0xf]
  %v57 = vld [vmem:[%s0 + $0x9c] sm:$0xf]
  %v58 = vld [vmem:[%s0 + $0xa0] sm:$0xf]
  %v59 = vld [vmem:[%s0 + $0xa4] sm:$0xf]
  %v60 = vld [vmem:[%s0 + $0xa8] sm:$0xf]
  %v61 = vld [vmem:[%s0 + $0xac] sm:$0xf]
  %v62 = vld [vmem:[%s0 + $0xb0] sm:$0xf]
  %v63 = vld [vmem:[%s0 + $0xb4] sm:$0xf]
  %v64 = vld [vmem:[%s0 + $0xb8] sm:$0xf]
  %v65 = vld [vmem:[%s0 + $0xbc] sm:$0xf]
  %v66 = vld [vmem:[%s0 + $0xc0] sm:$0xf]
  %v67 = vld [vmem:[%s0 + $0xc4] sm:$0xf]
  %v68 = vld [vmem:[%s0 + $0xc8] sm:$0xf]
  %v69 = vld [vmem:[%s0 + $0xcc] sm:$0xf]
  %v70 = vld [vmem:[%s0 + $0xd0] sm:$0xf]
  %v71 = vld [vmem:[%s0 + $0xd4] sm:$0xf]
  %v72 = vld [vmem:[%s0 + $0xd8] sm:$0xf]
  %v73 = vld [vmem:[%s0 + $0xdc] sm:$0xf]
  %v74 = vld [vmem:[%s0 + $0xe0] sm:$0xf]
  %v75 = vld [vmem:[%s0 + $0xe4] sm:$0xf]
  %v76 = vld [vmem:[%s0 + $0xe8] sm:$0xf]
  %v77 = vld [vmem:[%s0 + $0xec] sm:$0xf]
  %v78 = vld [vmem:[%s0 + $0xf0] sm:$0xf]
  %v79 = vld [vmem:[%s0 + $0xf4] sm:$0xf]
  %v80 = vld [vmem:[%s0 + $0xf8] sm:$0xf]
  %v81 = vld [vmem:[%s0 + $0xfc] sm:$0xf]
  %v82 = vld [vmem:[%s1] sm:$0xf]
  %v83 = vld [vmem:[%s1 + $0x4] sm:$0xf]
  %v84 = vld [vmem:[%s1 + $0x8] sm:$0xf]
  %v85 = vld [vmem:[%s1 + $0xc] sm:$0xf]
  %v86 = vld [vmem:[%s1 + $0x10] sm:$0xf]
  %v87 = vld [vmem:[%s1 + $0x14] sm:$0xf]
  %v88 = vld [vmem:[%s1 + $0x18] sm:$0xf]
  %v89 = vld [vmem:[%s1 + $0x1c] sm:$0xf]
  %v90 = vld [vmem:[%s1 + $0x20] sm:$0xf]
  %v91 = vld [vmem:[%s1 + $0x24] sm:$0xf]
  %v92 = vld [vmem:[%s1 + $0x28] sm:$0xf]
  %v93 = vld [vmem:[%s1 + $0x2c] sm:$0xf]
  %v94 = vld [vmem:[%s1 + $0x30] sm:$0xf]
  %v95 = vld [vmem:[%s1 + $0x34] sm:$0xf]
  %v96 = vld [vmem:[%s1 + $0x38] sm:$0xf]
  %v97 = vld [vmem:[%s1 + $0x3c] sm:$0xf]
  %v162 = vunpack.c.l.b16 %v18
  %v163 = vunpack.c.l.b16 %v19
  %v164 = vunpack.c.l.b16 %v20
  %v165 = vunpack.c.l.b16 %v21
  %v166 = vunpack.c.l.b16 %v22
  %v167 = vunpack.c.l.b16 %v23
  %v168 = vunpack.c.l.b16 %v24
  %v169 = vunpack.c.l.b16 %v25
  %v170 = vunpack.c.l.b16 %v26
  %v171 = vunpack.c.l.b16 %v27
  %v172 = vunpack.c.l.b16 %v28
  %v173 = vunpack.c.l.b16 %v29
  %v174 = vunpack.c.l.b16 %v30
  %v175 = vunpack.c.l.b16 %v31
  %v176 = vunpack.c.l.b16 %v32
  %v177 = vunpack.c.l.b16 %v33
  %v178 = vunpack.c.l.b16 %v34
  %v179 = vunpack.c.l.b16 %v35
  %v180 = vunpack.c.l.b16 %v36
  %v181 = vunpack.c.l.b16 %v37
  %v182 = vunpack.c.l.b16 %v38
  %v183 = vunpack.c.l.b16 %v39
  %v184 = vunpack.c.l.b16 %v40
  %v185 = vunpack.c.l.b16 %v41
  %v186 = vunpack.c.l.b16 %v42
  %v187 = vunpack.c.l.b16 %v43
  %v188 = vunpack.c.l.b16 %v44
  %v189 = vunpack.c.l.b16 %v45
  %v190 = vunpack.c.l.b16 %v46
  %v191 = vunpack.c.l.b16 %v47
  %v192 = vunpack.c.l.b16 %v48
  %v193 = vunpack.c.l.b16 %v49
  %v194 = vunpack.c.l.b16 %v50
  %v195 = vunpack.c.l.b16 %v51
  %v196 = vunpack.c.l.b16 %v52
  %v197 = vunpack.c.l.b16 %v53
  %v198 = vunpack.c.l.b16 %v54
  %v199 = vunpack.c.l.b16 %v55
  %v200 = vunpack.c.l.b16 %v56
  %v201 = vunpack.c.l.b16 %v57
  %v202 = vunpack.c.l.b16 %v58
  %v203 = vunpack.c.l.b16 %v59
  %v204 = vunpack.c.l.b16 %v60
  %v205 = vunpack.c.l.b16 %v61
  %v206 = vunpack.c.l.b16 %v62
  %v207 = vunpack.c.l.b16 %v63
  %v208 = vunpack.c.l.b16 %v64
  %v209 = vunpack.c.l.b16 %v65
  %v210 = vunpack.c.l.b16 %v66
  %v211 = vunpack.c.l.b16 %v67
  %v212 = vunpack.c.l.b16 %v68
  %v213 = vunpack.c.l.b16 %v69
  %v214 = vunpack.c.l.b16 %v70
  %v215 = vunpack.c.l.b16 %v71
  %v216 = vunpack.c.l.b16 %v72
  %v217 = vunpack.c.l.b16 %v73
  %v218 = vunpack.c.l.b16 %v74
  %v219 = vunpack.c.l.b16 %v75
  %v220 = vunpack.c.l.b16 %v76
  %v221 = vunpack.c.l.b16 %v77
  %v222 = vunpack.c.l.b16 %v78
  %v223 = vunpack.c.l.b16 %v79
  %v224 = vunpack.c.l.b16 %v80
  %v225 = vunpack.c.l.b16 %v81
  %v226 = vpack.c.b16 %v163, %v162
  %v227 = vpack.c.b16 %v165, %v164
  %v228 = vpack.c.b16 %v167, %v166
  %v229 = vpack.c.b16 %v169, %v168
  %v230 = vpack.c.b16 %v171, %v170
  %v231 = vpack.c.b16 %v173, %v172
  %v232 = vpack.c.b16 %v175, %v174
  %v233 = vpack.c.b16 %v177, %v176
  %v234 = vpack.c.b16 %v179, %v178
  %v235 = vpack.c.b16 %v181, %v180
  %v236 = vpack.c.b16 %v183, %v182
  %v237 = vpack.c.b16 %v185, %v184
  %v238 = vpack.c.b16 %v187, %v186
  %v239 = vpack.c.b16 %v189, %v188
  %v240 = vpack.c.b16 %v191, %v190
  %v241 = vpack.c.b16 %v193, %v192
  %v242 = vpack.c.b16 %v195, %v194
  %v243 = vpack.c.b16 %v197, %v196
  %v244 = vpack.c.b16 %v199, %v198
  %v245 = vpack.c.b16 %v201, %v200
  %v246 = vpack.c.b16 %v203, %v202
  %v247 = vpack.c.b16 %v205, %v204
  %v248 = vpack.c.b16 %v207, %v206
  %v249 = vpack.c.b16 %v209, %v208
  %v250 = vpack.c.b16 %v211, %v210
  %v251 = vpack.c.b16 %v213, %v212
  %v252 = vpack.c.b16 %v215, %v214
  %v253 = vpack.c.b16 %v217, %v216
  %v254 = vpack.c.b16 %v219, %v218
  %v255 = vpack.c.b16 %v221, %v220
  %v256 = vpack.c.b16 %v223, %v222
  %v257 = vpack.c.b16 %v225, %v224
  %v306 = vunpack.c.l.b16 %v82
  %v307 = vunpack.c.l.b16 %v83
  %v308 = vunpack.c.l.b16 %v84
  %v309 = vunpack.c.l.b16 %v85
  %v310 = vunpack.c.l.b16 %v86
  %v311 = vunpack.c.l.b16 %v87
  %v312 = vunpack.c.l.b16 %v88
  %v313 = vunpack.c.l.b16 %v89
  %v314 = vunpack.c.l.b16 %v90
  %v315 = vunpack.c.l.b16 %v91
  %v316 = vunpack.c.l.b16 %v92
  %v317 = vunpack.c.l.b16 %v93
  %v318 = vunpack.c.l.b16 %v94
  %v319 = vunpack.c.l.b16 %v95
  %v320 = vunpack.c.l.b16 %v96
  %v321 = vunpack.c.l.b16 %v97
  %v322 = vpack.c.b16 %v307, %v306
  %v323 = vpack.c.b16 %v309, %v308
  %v324 = vpack.c.b16 %v311, %v310
  %v325 = vpack.c.b16 %v313, %v312
  %v326 = vpack.c.b16 %v315, %v314
  %v327 = vpack.c.b16 %v317, %v316
  %v328 = vpack.c.b16 %v319, %v318
  %v329 = vpack.c.b16 %v321, %v320
  %338 = vmatprep.subr.bf16.mxu0 0
  %339 = vmatpush1.bf16.msra.mxu0 %v322
  %340 = vmatprep.subr.bf16.mxu0 0
  %341 = vmatpush1.bf16.msra.mxu0 %v323
  %342 = vmatprep.subr.bf16.mxu0 0
  %343 = vmatpush1.bf16.msra.mxu0 %v324
  %344 = vmatprep.subr.bf16.mxu0 0
  %345 = vmatpush1.bf16.msra.mxu0 %v325
  %346 = vmatprep.subr.bf16.mxu0 0
  %347 = vmatpush1.bf16.msra.mxu0 %v326
  %348 = vmatprep.subr.bf16.mxu0 0
  %349 = vmatpush1.bf16.msra.mxu0 %v327
  %350 = vmatprep.subr.bf16.mxu0 0
  %351 = vmatpush1.bf16.msra.mxu0 %v328
  %352 = vmatprep.subr.bf16.mxu0 0
  %353 = vmatpush1.bf16.msra.mxu0 %v329
  %354 = vmatprep.subr.bf16.mxu0 0
  %355 = vmatpush1.bf16.msra.mxu0 0
  %356 = vmatprep.subr.bf16.mxu0 0
  %357 = vmatpush1.bf16.msra.mxu0 0
  %358 = vmatprep.subr.bf16.mxu0 0
  %359 = vmatpush1.bf16.msra.mxu0 0
  %360 = vmatprep.subr.bf16.mxu0 0
  %361 = vmatpush1.bf16.msra.mxu0 0
  %362 = vmatprep.subr.bf16.mxu0 0
  %363 = vmatpush1.bf16.msra.mxu0 0
  %364 = vmatprep.subr.bf16.mxu0 0
  %365 = vmatpush1.bf16.msra.mxu0 0
  %366 = vmatprep.subr.bf16.mxu0 0
  %367 = vmatpush1.bf16.msra.mxu0 0
  %368 = vmatprep.subr.bf16.mxu0 0
  %369 = vmatpush1.bf16.msra.mxu0 0
  %370 = vmatprep.mubr.bf16.mxu0 0
  %371 = vmatmul.mubr.bf16.gmra.mrb[0].mxu0 %v226
  %v372 = vpop.f32.mrb[0].mxu0
  %v373 = vadd.f32 0.0, %v372
  %v374 = vpop.f32.mrb[0].mxu0
  %v375 = vpop.f32.mrb[0].mxu0
  %v376 = vadd.f32 0.0, %v375
  %v377 = vpop.f32.mrb[0].mxu0
  %378 = vmatprep.mubr.bf16.mxu0 0
  %379 = vmatmul.mubr.bf16.gmra.mrb[0].mxu0 %v227
  %v380 = vpop.f32.mrb[0].mxu0
  %v381 = vadd.f32 0.0, %v380
  %v382 = vpop.f32.mrb[0].mxu0
  %v383 = vpop.f32.mrb[0].mxu0
  %v384 = vadd.f32 0.0, %v383
  %v385 = vpop.f32.mrb[0].mxu0
  %386 = vmatprep.mubr.bf16.mxu0 0
  %387 = vmatmul.mubr.bf16.gmra.mrb[0].mxu0 %v228
  %v388 = vpop.f32.mrb[0].mxu0
  %v389 = vadd.f32 0.0, %v388
  %v390 = vpop.f32.mrb[0].mxu0
  %v391 = vpop.f32.mrb[0].mxu0
  %v392 = vadd.f32 0.0, %v391
  %v393 = vpop.f32.mrb[0].mxu0
  %394 = vmatprep.mubr.bf16.mxu0 0
  %395 = vmatmul.mubr.bf16.gmra.mrb[0].mxu0 %v229
  %v396 = vpop.f32.mrb[0].mxu0
  %v397 = vadd.f32 0.0, %v396
  %v398 = vpop.f32.mrb[0].mxu0
  %v399 = vpop.f32.mrb[0].mxu0
  %v400 = vadd.f32 0.0, %v399
  %v401 = vpop.f32.mrb[0].mxu0
  %402 = vmatprep.mubr.bf16.mxu0 0
  %403 = vmatmul.mubr.bf16.gmra.mrb[0].mxu0 %v230
  %v404 = vpop.f32.mrb[0].mxu0
  %v405 = vadd.f32 0.0, %v404
  %v406 = vpop.f32.mrb[0].mxu0
  %v407 = vpop.f32.mrb[0].mxu0
  %v408 = vadd.f32 0.0, %v407
  %v409 = vpop.f32.mrb[0].mxu0
  %410 = vmatprep.mubr.bf16.mxu0 0
  %411 = vmatmul.mubr.bf16.gmra.mrb[0].mxu0 %v231
  %v412 = vpop.f32.mrb[0].mxu0
  %v413 = vadd.f32 0.0, %v412
  %v414 = vpop.f32.mrb[0].mxu0
  %v415 = vpop.f32.mrb[0].mxu0
  %v416 = vadd.f32 0.0, %v415
  %v417 = vpop.f32.mrb[0].mxu0
  %418 = vmatprep.mubr.bf16.mxu0 0
  %419 = vmatmul.mubr.bf16.gmra.mrb[0].mxu0 %v232
  %v420 = vpop.f32.mrb[0].mxu0
  %v421 = vadd.f32 0.0, %v420
  %v422 = vpop.f32.mrb[0].mxu0
  %v423 = vpop.f32.mrb[0].mxu0
  %v424 = vadd.f32 0.0, %v423
  %v425 = vpop.f32.mrb[0].mxu0
  %426 = vmatprep.mubr.bf16.mxu0 0
  %427 = vmatmul.mubr.bf16.gmra.mrb[0].mxu0 %v233
  %v428 = vpop.f32.mrb[0].mxu0
  %v429 = vadd.f32 0.0, %v428
  %v430 = vpop.f32.mrb[0].mxu0
  %v431 = vpop.f32.mrb[0].mxu0
  %v432 = vadd.f32 0.0, %v431
  %v433 = vpop.f32.mrb[0].mxu0
  %434 = vmatprep.mubr.bf16.mxu0 0
  %435 = vmatmul.mubr.bf16.gmra.mrb[0].mxu0 %v234
  %v436 = vpop.f32.mrb[0].mxu0
  %v437 = vadd.f32 0.0, %v436
  %v438 = vpop.f32.mrb[0].mxu0
  %v439 = vpop.f32.mrb[0].mxu0
  %v440 = vadd.f32 0.0, %v439
  %v441 = vpop.f32.mrb[0].mxu0
  %442 = vmatprep.mubr.bf16.mxu0 0
  %443 = vmatmul.mubr.bf16.gmra.mrb[0].mxu0 %v235
  %v444 = vpop.f32.mrb[0].mxu0
  %v445 = vadd.f32 0.0, %v444
  %v446 = vpop.f32.mrb[0].mxu0
  %v447 = vpop.f32.mrb[0].mxu0
  %v448 = vadd.f32 0.0, %v447
  %v449 = vpop.f32.mrb[0].mxu0
  %450 = vmatprep.mubr.bf16.mxu0 0
  %451 = vmatmul.mubr.bf16.gmra.mrb[0].mxu0 %v236
  %v452 = vpop.f32.mrb[0].mxu0
  %v453 = vadd.f32 0.0, %v452
  %v454 = vpop.f32.mrb[0].mxu0
  %v455 = vpop.f32.mrb[0].mxu0
  %v456 = vadd.f32 0.0, %v455
  %v457 = vpop.f32.mrb[0].mxu0
  %458 = vmatprep.mubr.bf16.mxu0 0
  %459 = vmatmul.mubr.bf16.gmra.mrb[0].mxu0 %v237
  %v460 = vpop.f32.mrb[0].mxu0
  %v461 = vadd.f32 0.0, %v460
  %v462 = vpop.f32.mrb[0].mxu0
  %v463 = vpop.f32.mrb[0].mxu0
  %v464 = vadd.f32 0.0, %v463
  %v465 = vpop.f32.mrb[0].mxu0
  %466 = vmatprep.mubr.bf16.mxu0 0
  %467 = vmatmul.mubr.bf16.gmra.mrb[0].mxu0 %v238
  %v468 = vpop.f32.mrb[0].mxu0
  %v469 = vadd.f32 0.0, %v468
  %v470 = vpop.f32.mrb[0].mxu0
  %v471 = vpop.f32.mrb[0].mxu0
  %v472 = vadd.f32 0.0, %v471
  %v473 = vpop.f32.mrb[0].mxu0
  %474 = vmatprep.mubr.bf16.mxu0 0
  %475 = vmatmul.mubr.bf16.gmra.mrb[0].mxu0 %v239
  %v476 = vpop.f32.mrb[0].mxu0
  %v477 = vadd.f32 0.0, %v476
  %v478 = vpop.f32.mrb[0].mxu0
  %v479 = vpop.f32.mrb[0].mxu0
  %v480 = vadd.f32 0.0, %v479
  %v481 = vpop.f32.mrb[0].mxu0
  %482 = vmatprep.mubr.bf16.mxu0 0
  %483 = vmatmul.mubr.bf16.gmra.mrb[0].mxu0 %v240
  %v484 = vpop.f32.mrb[0].mxu0
  %v485 = vadd.f32 0.0, %v484
  %v486 = vpop.f32.mrb[0].mxu0
  %v487 = vpop.f32.mrb[0].mxu0
  %v488 = vadd.f32 0.0, %v487
  %v489 = vpop.f32.mrb[0].mxu0
  %490 = vmatprep.mubr.bf16.mxu0 0
  %491 = vmatmul.mubr.bf16.gmra.mrb[0].mxu0 %v241
  %v492 = vpop.f32.mrb[0].mxu0
  %v493 = vadd.f32 0.0, %v492
  %v494 = vpop.f32.mrb[0].mxu0
  %v495 = vpop.f32.mrb[0].mxu0
  %v496 = vadd.f32 0.0, %v495
  %v497 = vpop.f32.mrb[0].mxu0
  %498 = vmatprep.mubr.bf16.mxu0 0
  %499 = vmatmul.mubr.bf16.gmra.mrb[0].mxu0 %v242
  %v500 = vpop.f32.mrb[0].mxu0
  %v501 = vadd.f32 0.0, %v500
  %v502 = vpop.f32.mrb[0].mxu0
  %v503 = vpop.f32.mrb[0].mxu0
  %v504 = vadd.f32 0.0, %v503
  %v505 = vpop.f32.mrb[0].mxu0
  %506 = vmatprep.mubr.bf16.mxu0 0
  %507 = vmatmul.mubr.bf16.gmra.mrb[0].mxu0 %v243
  %v508 = vpop.f32.mrb[0].mxu0
  %v509 = vadd.f32 0.0, %v508
  %v510 = vpop.f32.mrb[0].mxu0
  %v511 = vpop.f32.mrb[0].mxu0
  %v512 = vadd.f32 0.0, %v511
  %v513 = vpop.f32.mrb[0].mxu0
  %514 = vmatprep.mubr.bf16.mxu0 0
  %515 = vmatmul.mubr.bf16.gmra.mrb[0].mxu0 %v244
  %v516 = vpop.f32.mrb[0].mxu0
  %v517 = vadd.f32 0.0, %v516
  %v518 = vpop.f32.mrb[0].mxu0
  %v519 = vpop.f32.mrb[0].mxu0
  %v520 = vadd.f32 0.0, %v519
  %v521 = vpop.f32.mrb[0].mxu0
  %522 = vmatprep.mubr.bf16.mxu0 0
  %523 = vmatmul.mubr.bf16.gmra.mrb[0].mxu0 %v245
  %v524 = vpop.f32.mrb[0].mxu0
  %v525 = vadd.f32 0.0, %v524
  %v526 = vpop.f32.mrb[0].mxu0
  %v527 = vpop.f32.mrb[0].mxu0
  %v528 = vadd.f32 0.0, %v527
  %v529 = vpop.f32.mrb[0].mxu0
  %530 = vmatprep.mubr.bf16.mxu0 0
  %531 = vmatmul.mubr.bf16.gmra.mrb[0].mxu0 %v246
  %v532 = vpop.f32.mrb[0].mxu0
  %v533 = vadd.f32 0.0, %v532
  %v534 = vpop.f32.mrb[0].mxu0
  %v535 = vpop.f32.mrb[0].mxu0
  %v536 = vadd.f32 0.0, %v535
  %v537 = vpop.f32.mrb[0].mxu0
  %538 = vmatprep.mubr.bf16.mxu0 0
  %539 = vmatmul.mubr.bf16.gmra.mrb[0].mxu0 %v247
  %v540 = vpop.f32.mrb[0].mxu0
  %v541 = vadd.f32 0.0, %v540
  %v542 = vpop.f32.mrb[0].mxu0
  %v543 = vpop.f32.mrb[0].mxu0
  %v544 = vadd.f32 0.0, %v543
  %v545 = vpop.f32.mrb[0].mxu0
  %546 = vmatprep.mubr.bf16.mxu0 0
  %547 = vmatmul.mubr.bf16.gmra.mrb[0].mxu0 %v248
  %v548 = vpop.f32.mrb[0].mxu0
  %v549 = vadd.f32 0.0, %v548
  %v550 = vpop.f32.mrb[0].mxu0
  %v551 = vpop.f32.mrb[0].mxu0
  %v552 = vadd.f32 0.0, %v551
  %v553 = vpop.f32.mrb[0].mxu0
  %554 = vmatprep.mubr.bf16.mxu0 0
  %555 = vmatmul.mubr.bf16.gmra.mrb[0].mxu0 %v249
  %v556 = vpop.f32.mrb[0].mxu0
  %v557 = vadd.f32 0.0, %v556
  %v558 = vpop.f32.mrb[0].mxu0
  %v559 = vpop.f32.mrb[0].mxu0
  %v560 = vadd.f32 0.0, %v559
  %v561 = vpop.f32.mrb[0].mxu0
  %562 = vmatprep.mubr.bf16.mxu0 0
  %563 = vmatmul.mubr.bf16.gmra.mrb[0].mxu0 %v250
  %v564 = vpop.f32.mrb[0].mxu0
  %v565 = vadd.f32 0.0, %v564
  %v566 = vpop.f32.mrb[0].mxu0
  %v567 = vpop.f32.mrb[0].mxu0
  %v568 = vadd.f32 0.0, %v567
  %v569 = vpop.f32.mrb[0].mxu0
  %570 = vmatprep.mubr.bf16.mxu0 0
  %571 = vmatmul.mubr.bf16.gmra.mrb[0].mxu0 %v251
  %v572 = vpop.f32.mrb[0].mxu0
  %v573 = vadd.f32 0.0, %v572
  %v574 = vpop.f32.mrb[0].mxu0
  %v575 = vpop.f32.mrb[0].mxu0
  %v576 = vadd.f32 0.0, %v575
  %v577 = vpop.f32.mrb[0].mxu0
  %578 = vmatprep.mubr.bf16.mxu0 0
  %579 = vmatmul.mubr.bf16.gmra.mrb[0].mxu0 %v252
  %v580 = vpop.f32.mrb[0].mxu0
  %v581 = vadd.f32 0.0, %v580
  %v582 = vpop.f32.mrb[0].mxu0
  %v583 = vpop.f32.mrb[0].mxu0
  %v584 = vadd.f32 0.0, %v583
  %v585 = vpop.f32.mrb[0].mxu0
  %586 = vmatprep.mubr.bf16.mxu0 0
  %587 = vmatmul.mubr.bf16.gmra.mrb[0].mxu0 %v253
  %v588 = vpop.f32.mrb[0].mxu0
  %v589 = vadd.f32 0.0, %v588
  %v590 = vpop.f32.mrb[0].mxu0
  %v591 = vpop.f32.mrb[0].mxu0
  %v592 = vadd.f32 0.0, %v591
  %v593 = vpop.f32.mrb[0].mxu0
  %594 = vmatprep.mubr.bf16.mxu0 0
  %595 = vmatmul.mubr.bf16.gmra.mrb[0].mxu0 %v254
  %v596 = vpop.f32.mrb[0].mxu0
  %v597 = vadd.f32 0.0, %v596
  %v598 = vpop.f32.mrb[0].mxu0
  %v599 = vpop.f32.mrb[0].mxu0
  %v600 = vadd.f32 0.0, %v599
  %v601 = vpop.f32.mrb[0].mxu0
  %602 = vmatprep.mubr.bf16.mxu0 0
  %603 = vmatmul.mubr.bf16.gmra.mrb[0].mxu0 %v255
  %v604 = vpop.f32.mrb[0].mxu0
  %v605 = vadd.f32 0.0, %v604
  %v606 = vpop.f32.mrb[0].mxu0
  %v607 = vpop.f32.mrb[0].mxu0
  %v608 = vadd.f32 0.0, %v607
  %v609 = vpop.f32.mrb[0].mxu0
  %610 = vmatprep.mubr.bf16.mxu0 0
  %611 = vmatmul.mubr.bf16.gmra.mrb[0].mxu0 %v256
  %v612 = vpop.f32.mrb[0].mxu0
  %v613 = vadd.f32 0.0, %v612
  %v614 = vpop.f32.mrb[0].mxu0
  %v615 = vpop.f32.mrb[0].mxu0
  %v616 = vadd.f32 0.0, %v615
  %v617 = vpop.f32.mrb[0].mxu0
  %618 = vmatprep.mubr.bf16.mxu0 0
  %619 = vmatmul.mubr.bf16.gmra.mrb[0].mxu0 %v257
  %v620 = vpop.f32.mrb[0].mxu0
  %v621 = vadd.f32 0.0, %v620
  %v622 = vpop.f32.mrb[0].mxu0
  %v623 = vpop.f32.mrb[0].mxu0
  %v624 = vadd.f32 0.0, %v623
  %v625 = vpop.f32.mrb[0].mxu0
  %626 = vdwg.mxu0
  %v627 = vadd.f32 %v373, %v376
  %v628 = vadd.f32 %v627, %v381
  %v629 = vadd.f32 %v628, %v384
  %v630 = vadd.f32 %v629, %v389
  %v631 = vadd.f32 %v630, %v392
  %v632 = vadd.f32 %v631, %v397
  %v633 = vadd.f32 %v632, %v400
  %v634 = vadd.f32 %v633, %v405
  %v635 = vadd.f32 %v634, %v408
  %v636 = vadd.f32 %v635, %v413
  %v637 = vadd.f32 %v636, %v416
  %v638 = vadd.f32 %v637, %v421
  %v639 = vadd.f32 %v638, %v424
  %v640 = vadd.f32 %v639, %v429
  %v641 = vadd.f32 %v640, %v432
  %v642 = vadd.f32 %v641, %v437
  %v643 = vadd.f32 %v642, %v440
  %v644 = vadd.f32 %v643, %v445
  %v645 = vadd.f32 %v644, %v448
  %v646 = vadd.f32 %v645, %v453
  %v647 = vadd.f32 %v646, %v456
  %v648 = vadd.f32 %v647, %v461
  %v649 = vadd.f32 %v648, %v464
  %v650 = vadd.f32 %v649, %v469
  %v651 = vadd.f32 %v650, %v472
  %v652 = vadd.f32 %v651, %v477
  %v653 = vadd.f32 %v652, %v480
  %v654 = vadd.f32 %v653, %v485
  %v655 = vadd.f32 %v654, %v488
  %v656 = vadd.f32 %v655, %v493
  %v657 = vadd.f32 %v656, %v496
  %v658 = vadd.f32 %v657, %v501
  %v659 = vadd.f32 %v658, %v504
  %v660 = vadd.f32 %v659, %v509
  %v661 = vadd.f32 %v660, %v512
  %v662 = vadd.f32 %v661, %v517
  %v663 = vadd.f32 %v662, %v520
  %v664 = vadd.f32 %v663, %v525
  %v665 = vadd.f32 %v664, %v528
  %v666 = vadd.f32 %v665, %v533
  %v667 = vadd.f32 %v666, %v536
  %v668 = vadd.f32 %v667, %v541
  %v669 = vadd.f32 %v668, %v544
  %v670 = vadd.f32 %v669, %v549
  %v671 = vadd.f32 %v670, %v552
  %v672 = vadd.f32 %v671, %v557
  %v673 = vadd.f32 %v672, %v560
  %v674 = vadd.f32 %v673, %v565
  %v675 = vadd.f32 %v674, %v568
  %v676 = vadd.f32 %v675, %v573
  %v677 = vadd.f32 %v676, %v576
  %v678 = vadd.f32 %v677, %v581
  %v679 = vadd.f32 %v678, %v584
  %v680 = vadd.f32 %v679, %v589
  %v681 = vadd.f32 %v680, %v592
  %v682 = vadd.f32 %v681, %v597
  %v683 = vadd.f32 %v682, %v600
  %v684 = vadd.f32 %v683, %v605
  %v685 = vadd.f32 %v684, %v608
  %v686 = vadd.f32 %v685, %v613
  %v687 = vadd.f32 %v686, %v616
  %v688 = vadd.f32 %v687, %v621
  %v689 = vadd.f32 %v688, %v624
  %v690 = vrot.slane %v689, 4
  %v691 = vadd.f32 %v689, %v690
  %v692 = vrot.slane %v691, 2
  %v693 = vadd.f32 %v691, %v692
  %v694 = vrot.slane %v693, 1
  %v695 = vadd.f32 %v693, %v694
  %v696 = vmul.f32 %v695, 0.001953125
  %v697 = vmul.f32 %v373, %v373
  %v698 = vmul.f32 %v376, %v376
  %v699 = vmul.f32 %v381, %v381
  %v700 = vmul.f32 %v384, %v384
  %v701 = vmul.f32 %v389, %v389
  %v702 = vmul.f32 %v392, %v392
  %v703 = vmul.f32 %v397, %v397
  %v704 = vmul.f32 %v400, %v400
  %v705 = vmul.f32 %v405, %v405
  %v706 = vmul.f32 %v408, %v408
  %v707 = vmul.f32 %v413, %v413
  %v708 = vmul.f32 %v416, %v416
  %v709 = vmul.f32 %v421, %v421
  %v710 = vmul.f32 %v424, %v424
  %v711 = vmul.f32 %v429, %v429
  %v712 = vmul.f32 %v432, %v432
  %v713 = vmul.f32 %v437, %v437
  %v714 = vmul.f32 %v440, %v440
  %v715 = vmul.f32 %v445, %v445
  %v716 = vmul.f32 %v448, %v448
  %v717 = vmul.f32 %v453, %v453
  %v718 = vmul.f32 %v456, %v456
  %v719 = vmul.f32 %v461, %v461
  %v720 = vmul.f32 %v464, %v464
  %v721 = vmul.f32 %v469, %v469
  %v722 = vmul.f32 %v472, %v472
  %v723 = vmul.f32 %v477, %v477
  %v724 = vmul.f32 %v480, %v480
  %v725 = vmul.f32 %v485, %v485
  %v726 = vmul.f32 %v488, %v488
  %v727 = vmul.f32 %v493, %v493
  %v728 = vmul.f32 %v496, %v496
  %v729 = vmul.f32 %v501, %v501
  %v730 = vmul.f32 %v504, %v504
  %v731 = vmul.f32 %v509, %v509
  %v732 = vmul.f32 %v512, %v512
  %v733 = vmul.f32 %v517, %v517
  %v734 = vmul.f32 %v520, %v520
  %v735 = vmul.f32 %v525, %v525
  %v736 = vmul.f32 %v528, %v528
  %v737 = vmul.f32 %v533, %v533
  %v738 = vmul.f32 %v536, %v536
  %v739 = vmul.f32 %v541, %v541
  %v740 = vmul.f32 %v544, %v544
  %v741 = vmul.f32 %v549, %v549
  %v742 = vmul.f32 %v552, %v552
  %v743 = vmul.f32 %v557, %v557
  %v744 = vmul.f32 %v560, %v560
  %v745 = vmul.f32 %v565, %v565
  %v746 = vmul.f32 %v568, %v568
  %v747 = vmul.f32 %v573, %v573
  %v748 = vmul.f32 %v576, %v576
  %v749 = vmul.f32 %v581, %v581
  %v750 = vmul.f32 %v584, %v584
  %v751 = vmul.f32 %v589, %v589
  %v752 = vmul.f32 %v592, %v592
  %v753 = vmul.f32 %v597, %v597
  %v754 = vmul.f32 %v600, %v600
  %v755 = vmul.f32 %v605, %v605
  %v756 = vmul.f32 %v608, %v608
  %v757 = vmul.f32 %v613, %v613
  %v758 = vmul.f32 %v616, %v616
  %v759 = vmul.f32 %v621, %v621
  %v760 = vmul.f32 %v624, %v624
  %v761 = vadd.f32 %v697, %v698
  %v762 = vadd.f32 %v761, %v699
  %v763 = vadd.f32 %v762, %v700
  %v764 = vadd.f32 %v763, %v701
  %v765 = vadd.f32 %v764, %v702
  %v766 = vadd.f32 %v765, %v703
  %v767 = vadd.f32 %v766, %v704
  %v768 = vadd.f32 %v767, %v705
  %v769 = vadd.f32 %v768, %v706
  %v770 = vadd.f32 %v769, %v707
  %v771 = vadd.f32 %v770, %v708
  %v772 = vadd.f32 %v771, %v709
  %v773 = vadd.f32 %v772, %v710
  %v774 = vadd.f32 %v773, %v711
  %v775 = vadd.f32 %v774, %v712
  %v776 = vadd.f32 %v775, %v713
  %v777 = vadd.f32 %v776, %v714
  %v778 = vadd.f32 %v777, %v715
  %v779 = vadd.f32 %v778, %v716
  %v780 = vadd.f32 %v779, %v717
  %v781 = vadd.f32 %v780, %v718
  %v782 = vadd.f32 %v781, %v719
  %v783 = vadd.f32 %v782, %v720
  %v784 = vadd.f32 %v783, %v721
  %v785 = vadd.f32 %v784, %v722
  %v786 = vadd.f32 %v785, %v723
  %v787 = vadd.f32 %v786, %v724
  %v788 = vadd.f32 %v787, %v725
  %v789 = vadd.f32 %v788, %v726
  %v790 = vadd.f32 %v789, %v727
  %v791 = vadd.f32 %v790, %v728
  %v792 = vadd.f32 %v791, %v729
  %v793 = vadd.f32 %v792, %v730
  %v794 = vadd.f32 %v793, %v731
  %v795 = vadd.f32 %v794, %v732
  %v796 = vadd.f32 %v795, %v733
  %v797 = vadd.f32 %v796, %v734
  %v798 = vadd.f32 %v797, %v735
  %v799 = vadd.f32 %v798, %v736
  %v800 = vadd.f32 %v799, %v737
  %v801 = vadd.f32 %v800, %v738
  %v802 = vadd.f32 %v801, %v739
  %v803 = vadd.f32 %v802, %v740
  %v804 = vadd.f32 %v803, %v741
  %v805 = vadd.f32 %v804, %v742
  %v806 = vadd.f32 %v805, %v743
  %v807 = vadd.f32 %v806, %v744
  %v808 = vadd.f32 %v807, %v745
  %v809 = vadd.f32 %v808, %v746
  %v810 = vadd.f32 %v809, %v747
  %v811 = vadd.f32 %v810, %v748
  %v812 = vadd.f32 %v811, %v749
  %v813 = vadd.f32 %v812, %v750
  %v814 = vadd.f32 %v813, %v751
  %v815 = vadd.f32 %v814, %v752
  %v816 = vadd.f32 %v815, %v753
  %v817 = vadd.f32 %v816, %v754
  %v818 = vadd.f32 %v817, %v755
  %v819 = vadd.f32 %v818, %v756
  %v820 = vadd.f32 %v819, %v757
  %v821 = vadd.f32 %v820, %v758
  %v822 = vadd.f32 %v821, %v759
  %v823 = vadd.f32 %v822, %v760
  %v824 = vrot.slane %v823, 4
  %v825 = vadd.f32 %v823, %v824
  %v826 = vrot.slane %v825, 2
  %v827 = vadd.f32 %v825, %v826
  %v828 = vrot.slane %v827, 1
  %v829 = vadd.f32 %v827, %v828
  %v830 = vmul.f32 %v829, 0.001953125
  %v831 = vmul.f32 %v696, %v696
  %v832 = vsub.f32 %v830, %v831
  %v833 = vmax.f32 %v832, 0.0
  %v834 = vld [vmem:[%s2] sm:$0x1]
  %v835 = vadd.f32 %v833, 1e-05
  %v836 = vrsqrt.pop %v835
  %v837 = vmul.f32 %v834, %v836
  %v838 = vld [vmem:[%s3] sm:$0x1]
  %v839 = vmul.f32 %v696, %v837
  %v840 = vsub.f32 %v838, %v839
  %v842 = vlaneseq
  %v843 = vshrl.u32 %v842, 7
  %v844 = vsub.s32 0, %v843
  %v845 = vrot.slane %v837, %v844
  %v847 = vmul.f32 %v373, %v845
  %v848 = vmul.f32 %v376, %v845
  %v849 = vmul.f32 %v381, %v845
  %v850 = vmul.f32 %v384, %v845
  %v851 = vmul.f32 %v389, %v845
  %v852 = vmul.f32 %v392, %v845
  %v853 = vmul.f32 %v397, %v845
  %v854 = vmul.f32 %v400, %v845
  %v855 = vmul.f32 %v405, %v845
  %v856 = vmul.f32 %v408, %v845
  %v857 = vmul.f32 %v413, %v845
  %v858 = vmul.f32 %v416, %v845
  %v859 = vmul.f32 %v421, %v845
  %v860 = vmul.f32 %v424, %v845
  %v861 = vmul.f32 %v429, %v845
  %v862 = vmul.f32 %v432, %v845
  %v863 = vmul.f32 %v437, %v845
  %v864 = vmul.f32 %v440, %v845
  %v865 = vmul.f32 %v445, %v845
  %v866 = vmul.f32 %v448, %v845
  %v867 = vmul.f32 %v453, %v845
  %v868 = vmul.f32 %v456, %v845
  %v869 = vmul.f32 %v461, %v845
  %v870 = vmul.f32 %v464, %v845
  %v871 = vmul.f32 %v469, %v845
  %v872 = vmul.f32 %v472, %v845
  %v873 = vmul.f32 %v477, %v845
  %v874 = vmul.f32 %v480, %v845
  %v875 = vmul.f32 %v485, %v845
  %v876 = vmul.f32 %v488, %v845
  %v877 = vmul.f32 %v493, %v845
  %v878 = vmul.f32 %v496, %v845
  %v879 = vmul.f32 %v501, %v845
  %v880 = vmul.f32 %v504, %v845
  %v881 = vmul.f32 %v509, %v845
  %v882 = vmul.f32 %v512, %v845
  %v883 = vmul.f32 %v517, %v845
  %v884 = vmul.f32 %v520, %v845
  %v885 = vmul.f32 %v525, %v845
  %v886 = vmul.f32 %v528, %v845
  %v887 = vmul.f32 %v533, %v845
  %v888 = vmul.f32 %v536, %v845
  %v889 = vmul.f32 %v541, %v845
  %v890 = vmul.f32 %v544, %v845
  %v891 = vmul.f32 %v549, %v845
  %v892 = vmul.f32 %v552, %v845
  %v893 = vmul.f32 %v557, %v845
  %v894 = vmul.f32 %v560, %v845
  %v895 = vmul.f32 %v565, %v845
  %v896 = vmul.f32 %v568, %v845
  %v897 = vmul.f32 %v573, %v845
  %v898 = vmul.f32 %v576, %v845
  %v899 = vmul.f32 %v581, %v845
  %v900 = vmul.f32 %v584, %v845
  %v901 = vmul.f32 %v589, %v845
  %v902 = vmul.f32 %v592, %v845
  %v903 = vmul.f32 %v597, %v845
  %v904 = vmul.f32 %v600, %v845
  %v905 = vmul.f32 %v605, %v845
  %v906 = vmul.f32 %v608, %v845
  %v907 = vmul.f32 %v613, %v845
  %v908 = vmul.f32 %v616, %v845
  %v909 = vmul.f32 %v621, %v845
  %v910 = vmul.f32 %v624, %v845
  %v912 = vlaneseq
  %v913 = vshrl.u32 %v912, 7
  %v914 = vsub.s32 0, %v913
  %v915 = vrot.slane %v840, %v914
  %v917 = vadd.f32 %v847, %v915
  %v918 = vadd.f32 %v848, %v915
  %v919 = vadd.f32 %v849, %v915
  %v920 = vadd.f32 %v850, %v915
  %v921 = vadd.f32 %v851, %v915
  %v922 = vadd.f32 %v852, %v915
  %v923 = vadd.f32 %v853, %v915
  %v924 = vadd.f32 %v854, %v915
  %v925 = vadd.f32 %v855, %v915
  %v926 = vadd.f32 %v856, %v915
  %v927 = vadd.f32 %v857, %v915
  %v928 = vadd.f32 %v858, %v915
  %v929 = vadd.f32 %v859, %v915
  %v930 = vadd.f32 %v860, %v915
  %v931 = vadd.f32 %v861, %v915
  %v932 = vadd.f32 %v862, %v915
  %v933 = vadd.f32 %v863, %v915
  %v934 = vadd.f32 %v864, %v915
  %v935 = vadd.f32 %v865, %v915
  %v936 = vadd.f32 %v866, %v915
  %v937 = vadd.f32 %v867, %v915
  %v938 = vadd.f32 %v868, %v915
  %v939 = vadd.f32 %v869, %v915
  %v940 = vadd.f32 %v870, %v915
  %v941 = vadd.f32 %v871, %v915
  %v942 = vadd.f32 %v872, %v915
  %v943 = vadd.f32 %v873, %v915
  %v944 = vadd.f32 %v874, %v915
  %v945 = vadd.f32 %v875, %v915
  %v946 = vadd.f32 %v876, %v915
  %v947 = vadd.f32 %v877, %v915
  %v948 = vadd.f32 %v878, %v915
  %v949 = vadd.f32 %v879, %v915
  %v950 = vadd.f32 %v880, %v915
  %v951 = vadd.f32 %v881, %v915
  %v952 = vadd.f32 %v882, %v915
  %v953 = vadd.f32 %v883, %v915
  %v954 = vadd.f32 %v884, %v915
  %v955 = vadd.f32 %v885, %v915
  %v956 = vadd.f32 %v886, %v915
  %v957 = vadd.f32 %v887, %v915
  %v958 = vadd.f32 %v888, %v915
  %v959 = vadd.f32 %v889, %v915
  %v960 = vadd.f32 %v890, %v915
  %v961 = vadd.f32 %v891, %v915
  %v962 = vadd.f32 %v892, %v915
  %v963 = vadd.f32 %v893, %v915
  %v964 = vadd.f32 %v894, %v915
  %v965 = vadd.f32 %v895, %v915
  %v966 = vadd.f32 %v896, %v915
  %v967 = vadd.f32 %v897, %v915
  %v968 = vadd.f32 %v898, %v915
  %v969 = vadd.f32 %v899, %v915
  %v970 = vadd.f32 %v900, %v915
  %v971 = vadd.f32 %v901, %v915
  %v972 = vadd.f32 %v902, %v915
  %v973 = vadd.f32 %v903, %v915
  %v974 = vadd.f32 %v904, %v915
  %v975 = vadd.f32 %v905, %v915
  %v976 = vadd.f32 %v906, %v915
  %v977 = vadd.f32 %v907, %v915
  %v978 = vadd.f32 %v908, %v915
  %v979 = vadd.f32 %v909, %v915
  %v980 = vadd.f32 %v910, %v915
  %v981 = vmul.f32 %v917, 0.2
  %v982 = vmul.f32 %v918, 0.2
  %v983 = vmul.f32 %v919, 0.2
  %v984 = vmul.f32 %v920, 0.2
  %v985 = vmul.f32 %v921, 0.2
  %v986 = vmul.f32 %v922, 0.2
  %v987 = vmul.f32 %v923, 0.2
  %v988 = vmul.f32 %v924, 0.2
  %v989 = vmul.f32 %v925, 0.2
  %v990 = vmul.f32 %v926, 0.2
  %v991 = vmul.f32 %v927, 0.2
  %v992 = vmul.f32 %v928, 0.2
  %v993 = vmul.f32 %v929, 0.2
  %v994 = vmul.f32 %v930, 0.2
  %v995 = vmul.f32 %v931, 0.2
  %v996 = vmul.f32 %v932, 0.2
  %v997 = vmul.f32 %v933, 0.2
  %v998 = vmul.f32 %v934, 0.2
  %v999 = vmul.f32 %v935, 0.2
  %v1000 = vmul.f32 %v936, 0.2
  %v1001 = vmul.f32 %v937, 0.2
  %v1002 = vmul.f32 %v938, 0.2
  %v1003 = vmul.f32 %v939, 0.2
  %v1004 = vmul.f32 %v940, 0.2
  %v1005 = vmul.f32 %v941, 0.2
  %v1006 = vmul.f32 %v942, 0.2
  %v1007 = vmul.f32 %v943, 0.2
  %v1008 = vmul.f32 %v944, 0.2
  %v1009 = vmul.f32 %v945, 0.2
  %v1010 = vmul.f32 %v946, 0.2
  %v1011 = vmul.f32 %v947, 0.2
  %v1012 = vmul.f32 %v948, 0.2
  %v1013 = vmul.f32 %v949, 0.2
  %v1014 = vmul.f32 %v950, 0.2
  %v1015 = vmul.f32 %v951, 0.2
  %v1016 = vmul.f32 %v952, 0.2
  %v1017 = vmul.f32 %v953, 0.2
  %v1018 = vmul.f32 %v954, 0.2
  %v1019 = vmul.f32 %v955, 0.2
  %v1020 = vmul.f32 %v956, 0.2
  %v1021 = vmul.f32 %v957, 0.2
  %v1022 = vmul.f32 %v958, 0.2
  %v1023 = vmul.f32 %v959, 0.2
  %v1024 = vmul.f32 %v960, 0.2
  %v1025 = vmul.f32 %v961, 0.2
  %v1026 = vmul.f32 %v962, 0.2
  %v1027 = vmul.f32 %v963, 0.2
  %v1028 = vmul.f32 %v964, 0.2
  %v1029 = vmul.f32 %v965, 0.2
  %v1030 = vmul.f32 %v966, 0.2
  %v1031 = vmul.f32 %v967, 0.2
  %v1032 = vmul.f32 %v968, 0.2
  %v1033 = vmul.f32 %v969, 0.2
  %v1034 = vmul.f32 %v970, 0.2
  %v1035 = vmul.f32 %v971, 0.2
  %v1036 = vmul.f32 %v972, 0.2
  %v1037 = vmul.f32 %v973, 0.2
  %v1038 = vmul.f32 %v974, 0.2
  %v1039 = vmul.f32 %v975, 0.2
  %v1040 = vmul.f32 %v976, 0.2
  %v1041 = vmul.f32 %v977, 0.2
  %v1042 = vmul.f32 %v978, 0.2
  %v1043 = vmul.f32 %v979, 0.2
  %v1044 = vmul.f32 %v980, 0.2
  %v1045 = vmax.f32 %v917, %v981
  %v1046 = vmax.f32 %v918, %v982
  %v1047 = vmax.f32 %v919, %v983
  %v1048 = vmax.f32 %v920, %v984
  %v1049 = vmax.f32 %v921, %v985
  %v1050 = vmax.f32 %v922, %v986
  %v1051 = vmax.f32 %v923, %v987
  %v1052 = vmax.f32 %v924, %v988
  %v1053 = vmax.f32 %v925, %v989
  %v1054 = vmax.f32 %v926, %v990
  %v1055 = vmax.f32 %v927, %v991
  %v1056 = vmax.f32 %v928, %v992
  %v1057 = vmax.f32 %v929, %v993
  %v1058 = vmax.f32 %v930, %v994
  %v1059 = vmax.f32 %v931, %v995
  %v1060 = vmax.f32 %v932, %v996
  %v1061 = vmax.f32 %v933, %v997
  %v1062 = vmax.f32 %v934, %v998
  %v1063 = vmax.f32 %v935, %v999
  %v1064 = vmax.f32 %v936, %v1000
  %v1065 = vmax.f32 %v937, %v1001
  %v1066 = vmax.f32 %v938, %v1002
  %v1067 = vmax.f32 %v939, %v1003
  %v1068 = vmax.f32 %v940, %v1004
  %v1069 = vmax.f32 %v941, %v1005
  %v1070 = vmax.f32 %v942, %v1006
  %v1071 = vmax.f32 %v943, %v1007
  %v1072 = vmax.f32 %v944, %v1008
  %v1073 = vmax.f32 %v945, %v1009
  %v1074 = vmax.f32 %v946, %v1010
  %v1075 = vmax.f32 %v947, %v1011
  %v1076 = vmax.f32 %v948, %v1012
  %v1077 = vmax.f32 %v949, %v1013
  %v1078 = vmax.f32 %v950, %v1014
  %v1079 = vmax.f32 %v951, %v1015
  %v1080 = vmax.f32 %v952, %v1016
  %v1081 = vmax.f32 %v953, %v1017
  %v1082 = vmax.f32 %v954, %v1018
  %v1083 = vmax.f32 %v955, %v1019
  %v1084 = vmax.f32 %v956, %v1020
  %v1085 = vmax.f32 %v957, %v1021
  %v1086 = vmax.f32 %v958, %v1022
  %v1087 = vmax.f32 %v959, %v1023
  %v1088 = vmax.f32 %v960, %v1024
  %v1089 = vmax.f32 %v961, %v1025
  %v1090 = vmax.f32 %v962, %v1026
  %v1091 = vmax.f32 %v963, %v1027
  %v1092 = vmax.f32 %v964, %v1028
  %v1093 = vmax.f32 %v965, %v1029
  %v1094 = vmax.f32 %v966, %v1030
  %v1095 = vmax.f32 %v967, %v1031
  %v1096 = vmax.f32 %v968, %v1032
  %v1097 = vmax.f32 %v969, %v1033
  %v1098 = vmax.f32 %v970, %v1034
  %v1099 = vmax.f32 %v971, %v1035
  %v1100 = vmax.f32 %v972, %v1036
  %v1101 = vmax.f32 %v973, %v1037
  %v1102 = vmax.f32 %v974, %v1038
  %v1103 = vmax.f32 %v975, %v1039
  %v1104 = vmax.f32 %v976, %v1040
  %v1105 = vmax.f32 %v977, %v1041
  %v1106 = vmax.f32 %v978, %v1042
  %v1107 = vmax.f32 %v979, %v1043
  %v1108 = vmax.f32 %v980, %v1044
  %v1109 = vpack.c.bf16 %v1046, %v1045
  %v1110 = vpack.c.bf16 %v1048, %v1047
  %v1111 = vpack.c.bf16 %v1050, %v1049
  %v1112 = vpack.c.bf16 %v1052, %v1051
  %v1113 = vpack.c.bf16 %v1054, %v1053
  %v1114 = vpack.c.bf16 %v1056, %v1055
  %v1115 = vpack.c.bf16 %v1058, %v1057
  %v1116 = vpack.c.bf16 %v1060, %v1059
  %v1117 = vpack.c.bf16 %v1062, %v1061
  %v1118 = vpack.c.bf16 %v1064, %v1063
  %v1119 = vpack.c.bf16 %v1066, %v1065
  %v1120 = vpack.c.bf16 %v1068, %v1067
  %v1121 = vpack.c.bf16 %v1070, %v1069
  %v1122 = vpack.c.bf16 %v1072, %v1071
  %v1123 = vpack.c.bf16 %v1074, %v1073
  %v1124 = vpack.c.bf16 %v1076, %v1075
  %v1125 = vpack.c.bf16 %v1078, %v1077
  %v1126 = vpack.c.bf16 %v1080, %v1079
  %v1127 = vpack.c.bf16 %v1082, %v1081
  %v1128 = vpack.c.bf16 %v1084, %v1083
  %v1129 = vpack.c.bf16 %v1086, %v1085
  %v1130 = vpack.c.bf16 %v1088, %v1087
  %v1131 = vpack.c.bf16 %v1090, %v1089
  %v1132 = vpack.c.bf16 %v1092, %v1091
  %v1133 = vpack.c.bf16 %v1094, %v1093
  %v1134 = vpack.c.bf16 %v1096, %v1095
  %v1135 = vpack.c.bf16 %v1098, %v1097
  %v1136 = vpack.c.bf16 %v1100, %v1099
  %v1137 = vpack.c.bf16 %v1102, %v1101
  %v1138 = vpack.c.bf16 %v1104, %v1103
  %v1139 = vpack.c.bf16 %v1106, %v1105
  %v1140 = vpack.c.bf16 %v1108, %v1107
  %v1173 = vunpack.c.l.b16 %v1109
  %v1174 = vunpack.c.h.b16 %v1109
  %v1175 = vunpack.c.l.b16 %v1110
  %v1176 = vunpack.c.h.b16 %v1110
  %v1177 = vunpack.c.l.b16 %v1111
  %v1178 = vunpack.c.h.b16 %v1111
  %v1179 = vunpack.c.l.b16 %v1112
  %v1180 = vunpack.c.h.b16 %v1112
  %v1181 = vunpack.c.l.b16 %v1113
  %v1182 = vunpack.c.h.b16 %v1113
  %v1183 = vunpack.c.l.b16 %v1114
  %v1184 = vunpack.c.h.b16 %v1114
  %v1185 = vunpack.c.l.b16 %v1115
  %v1186 = vunpack.c.h.b16 %v1115
  %v1187 = vunpack.c.l.b16 %v1116
  %v1188 = vunpack.c.h.b16 %v1116
  %v1189 = vunpack.c.l.b16 %v1117
  %v1190 = vunpack.c.h.b16 %v1117
  %v1191 = vunpack.c.l.b16 %v1118
  %v1192 = vunpack.c.h.b16 %v1118
  %v1193 = vunpack.c.l.b16 %v1119
  %v1194 = vunpack.c.h.b16 %v1119
  %v1195 = vunpack.c.l.b16 %v1120
  %v1196 = vunpack.c.h.b16 %v1120
  %v1197 = vunpack.c.l.b16 %v1121
  %v1198 = vunpack.c.h.b16 %v1121
  %v1199 = vunpack.c.l.b16 %v1122
  %v1200 = vunpack.c.h.b16 %v1122
  %v1201 = vunpack.c.l.b16 %v1123
  %v1202 = vunpack.c.h.b16 %v1123
  %v1203 = vunpack.c.l.b16 %v1124
  %v1204 = vunpack.c.h.b16 %v1124
  %v1205 = vunpack.c.l.b16 %v1125
  %v1206 = vunpack.c.h.b16 %v1125
  %v1207 = vunpack.c.l.b16 %v1126
  %v1208 = vunpack.c.h.b16 %v1126
  %v1209 = vunpack.c.l.b16 %v1127
  %v1210 = vunpack.c.h.b16 %v1127
  %v1211 = vunpack.c.l.b16 %v1128
  %v1212 = vunpack.c.h.b16 %v1128
  %v1213 = vunpack.c.l.b16 %v1129
  %v1214 = vunpack.c.h.b16 %v1129
  %v1215 = vunpack.c.l.b16 %v1130
  %v1216 = vunpack.c.h.b16 %v1130
  %v1217 = vunpack.c.l.b16 %v1131
  %v1218 = vunpack.c.h.b16 %v1131
  %v1219 = vunpack.c.l.b16 %v1132
  %v1220 = vunpack.c.h.b16 %v1132
  %v1221 = vunpack.c.l.b16 %v1133
  %v1222 = vunpack.c.h.b16 %v1133
  %v1223 = vunpack.c.l.b16 %v1134
  %v1224 = vunpack.c.h.b16 %v1134
  %v1225 = vunpack.c.l.b16 %v1135
  %v1226 = vunpack.c.h.b16 %v1135
  %v1227 = vunpack.c.l.b16 %v1136
  %v1228 = vunpack.c.h.b16 %v1136
  %v1229 = vunpack.c.l.b16 %v1137
  %v1230 = vunpack.c.h.b16 %v1137
  %v1231 = vunpack.c.l.b16 %v1138
  %v1232 = vunpack.c.h.b16 %v1138
  %v1233 = vunpack.c.l.b16 %v1139
  %v1234 = vunpack.c.h.b16 %v1139
  %v1235 = vunpack.c.l.b16 %v1140
  %v1236 = vunpack.c.h.b16 %v1140
  %v1237 = vpack.c.b16 %v1173, %v1173
  %v1238 = vpack.c.b16 %v1174, %v1174
  %v1239 = vpack.c.b16 %v1175, %v1175
  %v1240 = vpack.c.b16 %v1176, %v1176
  %v1241 = vpack.c.b16 %v1177, %v1177
  %v1242 = vpack.c.b16 %v1178, %v1178
  %v1243 = vpack.c.b16 %v1179, %v1179
  %v1244 = vpack.c.b16 %v1180, %v1180
  %v1245 = vpack.c.b16 %v1181, %v1181
  %v1246 = vpack.c.b16 %v1182, %v1182
  %v1247 = vpack.c.b16 %v1183, %v1183
  %v1248 = vpack.c.b16 %v1184, %v1184
  %v1249 = vpack.c.b16 %v1185, %v1185
  %v1250 = vpack.c.b16 %v1186, %v1186
  %v1251 = vpack.c.b16 %v1187, %v1187
  %v1252 = vpack.c.b16 %v1188, %v1188
  %v1253 = vpack.c.b16 %v1189, %v1189
  %v1254 = vpack.c.b16 %v1190, %v1190
  %v1255 = vpack.c.b16 %v1191, %v1191
  %v1256 = vpack.c.b16 %v1192, %v1192
  %v1257 = vpack.c.b16 %v1193, %v1193
  %v1258 = vpack.c.b16 %v1194, %v1194
  %v1259 = vpack.c.b16 %v1195, %v1195
  %v1260 = vpack.c.b16 %v1196, %v1196
  %v1261 = vpack.c.b16 %v1197, %v1197
  %v1262 = vpack.c.b16 %v1198, %v1198
  %v1263 = vpack.c.b16 %v1199, %v1199
  %v1264 = vpack.c.b16 %v1200, %v1200
  %v1265 = vpack.c.b16 %v1201, %v1201
  %v1266 = vpack.c.b16 %v1202, %v1202
  %v1267 = vpack.c.b16 %v1203, %v1203
  %v1268 = vpack.c.b16 %v1204, %v1204
  %v1269 = vpack.c.b16 %v1205, %v1205
  %v1270 = vpack.c.b16 %v1206, %v1206
  %v1271 = vpack.c.b16 %v1207, %v1207
  %v1272 = vpack.c.b16 %v1208, %v1208
  %v1273 = vpack.c.b16 %v1209, %v1209
  %v1274 = vpack.c.b16 %v1210, %v1210
  %v1275 = vpack.c.b16 %v1211, %v1211
  %v1276 = vpack.c.b16 %v1212, %v1212
  %v1277 = vpack.c.b16 %v1213, %v1213
  %v1278 = vpack.c.b16 %v1214, %v1214
  %v1279 = vpack.c.b16 %v1215, %v1215
  %v1280 = vpack.c.b16 %v1216, %v1216
  %v1281 = vpack.c.b16 %v1217, %v1217
  %v1282 = vpack.c.b16 %v1218, %v1218
  %v1283 = vpack.c.b16 %v1219, %v1219
  %v1284 = vpack.c.b16 %v1220, %v1220
  %v1285 = vpack.c.b16 %v1221, %v1221
  %v1286 = vpack.c.b16 %v1222, %v1222
  %v1287 = vpack.c.b16 %v1223, %v1223
  %v1288 = vpack.c.b16 %v1224, %v1224
  %v1289 = vpack.c.b16 %v1225, %v1225
  %v1290 = vpack.c.b16 %v1226, %v1226
  %v1291 = vpack.c.b16 %v1227, %v1227
  %v1292 = vpack.c.b16 %v1228, %v1228
  %v1293 = vpack.c.b16 %v1229, %v1229
  %v1294 = vpack.c.b16 %v1230, %v1230
  %v1295 = vpack.c.b16 %v1231, %v1231
  %v1296 = vpack.c.b16 %v1232, %v1232
  %v1297 = vpack.c.b16 %v1233, %v1233
  %v1298 = vpack.c.b16 %v1234, %v1234
  %v1299 = vpack.c.b16 %v1235, %v1235
  %v1300 = vpack.c.b16 %v1236, %v1236
  %1365 = vst [vmem:[%s4] sm:$0xf] %v1237
  %1366 = vst [vmem:[%s4 + $0x4] sm:$0xf] %v1238
  %1367 = vst [vmem:[%s4 + $0x8] sm:$0xf] %v1239
  %1368 = vst [vmem:[%s4 + $0xc] sm:$0xf] %v1240
  %1369 = vst [vmem:[%s4 + $0x10] sm:$0xf] %v1241
  %1370 = vst [vmem:[%s4 + $0x14] sm:$0xf] %v1242
  %1371 = vst [vmem:[%s4 + $0x18] sm:$0xf] %v1243
  %1372 = vst [vmem:[%s4 + $0x1c] sm:$0xf] %v1244
  %1373 = vst [vmem:[%s4 + $0x20] sm:$0xf] %v1245
  %1374 = vst [vmem:[%s4 + $0x24] sm:$0xf] %v1246
  %1375 = vst [vmem:[%s4 + $0x28] sm:$0xf] %v1247
  %1376 = vst [vmem:[%s4 + $0x2c] sm:$0xf] %v1248
  %1377 = vst [vmem:[%s4 + $0x30] sm:$0xf] %v1249
  %1378 = vst [vmem:[%s4 + $0x34] sm:$0xf] %v1250
  %1379 = vst [vmem:[%s4 + $0x38] sm:$0xf] %v1251
  %1380 = vst [vmem:[%s4 + $0x3c] sm:$0xf] %v1252
  %1381 = vst [vmem:[%s4 + $0x40] sm:$0xf] %v1253
  %1382 = vst [vmem:[%s4 + $0x44] sm:$0xf] %v1254
  %1383 = vst [vmem:[%s4 + $0x48] sm:$0xf] %v1255
  %1384 = vst [vmem:[%s4 + $0x4c] sm:$0xf] %v1256
  %1385 = vst [vmem:[%s4 + $0x50] sm:$0xf] %v1257
  %1386 = vst [vmem:[%s4 + $0x54] sm:$0xf] %v1258
  %1387 = vst [vmem:[%s4 + $0x58] sm:$0xf] %v1259
  %1388 = vst [vmem:[%s4 + $0x5c] sm:$0xf] %v1260
  %1389 = vst [vmem:[%s4 + $0x60] sm:$0xf] %v1261
  %1390 = vst [vmem:[%s4 + $0x64] sm:$0xf] %v1262
  %1391 = vst [vmem:[%s4 + $0x68] sm:$0xf] %v1263
  %1392 = vst [vmem:[%s4 + $0x6c] sm:$0xf] %v1264
  %1393 = vst [vmem:[%s4 + $0x70] sm:$0xf] %v1265
  %1394 = vst [vmem:[%s4 + $0x74] sm:$0xf] %v1266
  %1395 = vst [vmem:[%s4 + $0x78] sm:$0xf] %v1267
  %1396 = vst [vmem:[%s4 + $0x7c] sm:$0xf] %v1268
  %1397 = vst [vmem:[%s4 + $0x80] sm:$0xf] %v1269
  %1398 = vst [vmem:[%s4 + $0x84] sm:$0xf] %v1270
  %1399 = vst [vmem:[%s4 + $0x88] sm:$0xf] %v1271
  %1400 = vst [vmem:[%s4 + $0x8c] sm:$0xf] %v1272
  %1401 = vst [vmem:[%s4 + $0x90] sm:$0xf] %v1273
  %1402 = vst [vmem:[%s4 + $0x94] sm:$0xf] %v1274
  %1403 = vst [vmem:[%s4 + $0x98] sm:$0xf] %v1275
  %1404 = vst [vmem:[%s4 + $0x9c] sm:$0xf] %v1276
  %1405 = vst [vmem:[%s4 + $0xa0] sm:$0xf] %v1277
  %1406 = vst [vmem:[%s4 + $0xa4] sm:$0xf] %v1278
  %1407 = vst [vmem:[%s4 + $0xa8] sm:$0xf] %v1279
  %1408 = vst [vmem:[%s4 + $0xac] sm:$0xf] %v1280
  %1409 = vst [vmem:[%s4 + $0xb0] sm:$0xf] %v1281
  %1410 = vst [vmem:[%s4 + $0xb4] sm:$0xf] %v1282
  %1411 = vst [vmem:[%s4 + $0xb8] sm:$0xf] %v1283
  %1412 = vst [vmem:[%s4 + $0xbc] sm:$0xf] %v1284
  %1413 = vst [vmem:[%s4 + $0xc0] sm:$0xf] %v1285
  %1414 = vst [vmem:[%s4 + $0xc4] sm:$0xf] %v1286
  %1415 = vst [vmem:[%s4 + $0xc8] sm:$0xf] %v1287
  %1416 = vst [vmem:[%s4 + $0xcc] sm:$0xf] %v1288
  %1417 = vst [vmem:[%s4 + $0xd0] sm:$0xf] %v1289
  %1418 = vst [vmem:[%s4 + $0xd4] sm:$0xf] %v1290
  %1419 = vst [vmem:[%s4 + $0xd8] sm:$0xf] %v1291
  %1420 = vst [vmem:[%s4 + $0xdc] sm:$0xf] %v1292
  %1421 = vst [vmem:[%s4 + $0xe0] sm:$0xf] %v1293
  %1422 = vst [vmem:[%s4 + $0xe4] sm:$0xf] %v1294
  %1423 = vst [vmem:[%s4 + $0xe8] sm:$0xf] %v1295
  %1424 = vst [vmem:[%s4 + $0xec] sm:$0xf] %v1296
  %1425 = vst [vmem:[%s4 + $0xf0] sm:$0xf] %v1297
  %1426 = vst [vmem:[%s4 + $0xf4] sm:$0xf] %v1298
  %1427 = vst [vmem:[%s4 + $0xf8] sm:$0xf] %v1299
  %1428 = vst [vmem:[%s4 + $0xfc] sm:$0xf] %v1300
  // Predicated region
  $region18: #{_lambda_.5} parent=0 // pred_check
    _
  $region19: #{_lambda_.5} parent=0 // pred_check_branch
    %1430 = sbr.rel (0) target = $region21
  $region20: #{_lambda_.5} parent=0 // pred_region
    _
  $region21: #{_lambda_.5} parent=0 // pred_fallthru
    _
  // Predicated region
  $region22: #{_lambda_.5} parent=0 // pred_check
    _
  $region23: #{_lambda_.5} parent=0 // pred_check_branch
    %1432 = sbr.rel (0) target = $region25
  $region24: #{_lambda_.5} parent=0 // pred_region
    _
  $region25: #{_lambda_.5} parent=0 // pred_fallthru
    _

// kernel: _lambda_.6
$region0: #{_lambda_.6}
  #allocation0 [shape = 'u32[]', space=smem, size = 0x4, offset = 0x4, fixed_abs, tag = 'smem constant byte address 0x4 - core index']
  #allocation1 [shape = 'u32[144,128]{1,0:T(1,128)}', space=vmem, size = 0x12000, scoped, tag = 'internal scratch']
  %s0 = inlined_call_operand.vmem [shape: bf16[128,256], index: 0, kind: input, shape index: {}]
  %s1 = inlined_call_operand.vmem [shape: bf16[256,128], index: 1, kind: input, shape index: {}]
  %s2 = inlined_call_operand.vmem [shape: f32[1,128], index: 2, kind: input, shape index: {}]
  %s3 = inlined_call_operand.vmem [shape: f32[1,128], index: 3, kind: input, shape index: {}]
  %s4 = inlined_call_operand.vmem [shape: bf16[128,128], index: 4, kind: output, shape index: {}]
  %s5 = sld [smem:[#allocation0]]
  $region26: #{_lambda_.6} parent=0
    _
  %s7 = ssub.s32 1, %s5
  %s8 = scalar_select 0, %s7, %s5
  // Predicated region
  $region2: #{_lambda_.6} parent=0 // pred_check
    _
  $region3: #{_lambda_.6} parent=0 // pred_check_branch
    %10 = sbr.rel (0) target = $region5
  $region4: #{_lambda_.6} parent=0 // pred_region
    _
  $region5: #{_lambda_.6} parent=0 // pred_fallthru
    _
  // Predicated region
  $region6: #{_lambda_.6} parent=0 // pred_check
    _
  $region7: #{_lambda_.6} parent=0 // pred_check_branch
    %12 = sbr.rel (0) target = $region9
  $region8: #{_lambda_.6} parent=0 // pred_region
    _
  $region9: #{_lambda_.6} parent=0 // pred_fallthru
    _
  // Predicated region
  $region10: #{_lambda_.6} parent=0 // pred_check
    _
  $region11: #{_lambda_.6} parent=0 // pred_check_branch
    %14 = sbr.rel (0) target = $region13
  $region12: #{_lambda_.6} parent=0 // pred_region
    _
  $region13: #{_lambda_.6} parent=0 // pred_fallthru
    _
  // Predicated region
  $region14: #{_lambda_.6} parent=0 // pred_check
    _
  $region15: #{_lambda_.6} parent=0 // pred_check_branch
    %16 = sbr.rel (0) target = $region17
  $region16: #{_lambda_.6} parent=0 // pred_region
    _
  $region17: #{_lambda_.6} parent=0 // pred_fallthru
    _
  %v18 = vld [vmem:[%s0] sm:$0xff]
  %v19 = vld [vmem:[%s0 + $0x8] sm:$0xff]
  %v20 = vld [vmem:[%s0 + $0x10] sm:$0xff]
  %v21 = vld [vmem:[%s0 + $0x18] sm:$0xff]
  %v22 = vld [vmem:[%s0 + $0x20] sm:$0xff]
  %v23 = vld [vmem:[%s0 + $0x28] sm:$0xff]
  %v24 = vld [vmem:[%s0 + $0x30] sm:$0xff]
  %v25 = vld [vmem:[%s0 + $0x38] sm:$0xff]
  %v26 = vld [vmem:[%s0 + $0x40] sm:$0xff]
  %v27 = vld [vmem:[%s0 + $0x48] sm:$0xff]
  %v28 = vld [vmem:[%s0 + $0x50] sm:$0xff]
  %v29 = vld [vmem:[%s0 + $0x58] sm:$0xff]
  %v30 = vld [vmem:[%s0 + $0x60] sm:$0xff]
  %v31 = vld [vmem:[%s0 + $0x68] sm:$0xff]
  %v32 = vld [vmem:[%s0 + $0x70] sm:$0xff]
  %v33 = vld [vmem:[%s0 + $0x78] sm:$0xff]
  %v34 = vld [vmem:[%s1] sm:$0xf]
  %v35 = vld [vmem:[%s1 + $0x4] sm:$0xf]
  %v36 = vld [vmem:[%s1 + $0x8] sm:$0xf]
  %v37 = vld [vmem:[%s1 + $0xc] sm:$0xf]
  %v38 = vld [vmem:[%s1 + $0x10] sm:$0xf]
  %v39 = vld [vmem:[%s1 + $0x14] sm:$0xf]
  %v40 = vld [vmem:[%s1 + $0x18] sm:$0xf]
  %v41 = vld [vmem:[%s1 + $0x1c] sm:$0xf]
  %v42 = vld [vmem:[%s1 + $0x20] sm:$0xf]
  %v43 = vld [vmem:[%s1 + $0x24] sm:$0xf]
  %v44 = vld [vmem:[%s1 + $0x28] sm:$0xf]
  %v45 = vld [vmem:[%s1 + $0x2c] sm:$0xf]
  %v46 = vld [vmem:[%s1 + $0x30] sm:$0xf]
  %v47 = vld [vmem:[%s1 + $0x34] sm:$0xf]
  %v48 = vld [vmem:[%s1 + $0x38] sm:$0xf]
  %v49 = vld [vmem:[%s1 + $0x3c] sm:$0xf]
  %v50 = vld [vmem:[%s1 + $0x40] sm:$0xf]
  %v51 = vld [vmem:[%s1 + $0x44] sm:$0xf]
  %v52 = vld [vmem:[%s1 + $0x48] sm:$0xf]
  %v53 = vld [vmem:[%s1 + $0x4c] sm:$0xf]
  %v54 = vld [vmem:[%s1 + $0x50] sm:$0xf]
  %v55 = vld [vmem:[%s1 + $0x54] sm:$0xf]
  %v56 = vld [vmem:[%s1 + $0x58] sm:$0xf]
  %v57 = vld [vmem:[%s1 + $0x5c] sm:$0xf]
  %v58 = vld [vmem:[%s1 + $0x60] sm:$0xf]
  %v59 = vld [vmem:[%s1 + $0x64] sm:$0xf]
  %v60 = vld [vmem:[%s1 + $0x68] sm:$0xf]
  %v61 = vld [vmem:[%s1 + $0x6c] sm:$0xf]
  %v62 = vld [vmem:[%s1 + $0x70] sm:$0xf]
  %v63 = vld [vmem:[%s1 + $0x74] sm:$0xf]
  %v64 = vld [vmem:[%s1 + $0x78] sm:$0xf]
  %v65 = vld [vmem:[%s1 + $0x7c] sm:$0xf]
  %v82 = vunpack.c.l.b16 %v18
  %v83 = vunpack.c.h.b16 %v18
  %v84 = vunpack.c.l.b16 %v19
  %v85 = vunpack.c.h.b16 %v19
  %v86 = vunpack.c.l.b16 %v20
  %v87 = vunpack.c.h.b16 %v20
  %v88 = vunpack.c.l.b16 %v21
  %v89 = vunpack.c.h.b16 %v21
  %v90 = vunpack.c.l.b16 %v22
  %v91 = vunpack.c.h.b16 %v22
  %v92 = vunpack.c.l.b16 %v23
  %v93 = vunpack.c.h.b16 %v23
  %v94 = vunpack.c.l.b16 %v24
  %v95 = vunpack.c.h.b16 %v24
  %v96 = vunpack.c.l.b16 %v25
  %v97 = vunpack.c.h.b16 %v25
  %v98 = vunpack.c.l.b16 %v26
  %v99 = vunpack.c.h.b16 %v26
  %v100 = vunpack.c.l.b16 %v27
  %v101 = vunpack.c.h.b16 %v27
  %v102 = vunpack.c.l.b16 %v28
  %v103 = vunpack.c.h.b16 %v28
  %v104 = vunpack.c.l.b16 %v29
  %v105 = vunpack.c.h.b16 %v29
  %v106 = vunpack.c.l.b16 %v30
  %v107 = vunpack.c.h.b16 %v30
  %v108 = vunpack.c.l.b16 %v31
  %v109 = vunpack.c.h.b16 %v31
  %v110 = vunpack.c.l.b16 %v32
  %v111 = vunpack.c.h.b16 %v32
  %v112 = vunpack.c.l.b16 %v33
  %v113 = vunpack.c.h.b16 %v33
  %v114 = vpack.c.b16 %v84, %v82
  %v115 = vpack.c.b16 %v85, %v83
  %v116 = vpack.c.b16 %v88, %v86
  %v117 = vpack.c.b16 %v89, %v87
  %v118 = vpack.c.b16 %v92, %v90
  %v119 = vpack.c.b16 %v93, %v91
  %v120 = vpack.c.b16 %v96, %v94
  %v121 = vpack.c.b16 %v97, %v95
  %v122 = vpack.c.b16 %v100, %v98
  %v123 = vpack.c.b16 %v101, %v99
  %v124 = vpack.c.b16 %v104, %v102
  %v125 = vpack.c.b16 %v105, %v103
  %v126 = vpack.c.b16 %v108, %v106
  %v127 = vpack.c.b16 %v109, %v107
  %v128 = vpack.c.b16 %v112, %v110
  %v129 = vpack.c.b16 %v113, %v111
  %v178 = vunpack.c.l.b16 %v34
  %v179 = vunpack.c.l.b16 %v35
  %v180 = vunpack.c.l.b16 %v36
  %v181 = vunpack.c.l.b16 %v37
  %v182 = vunpack.c.l.b16 %v38
  %v183 = vunpack.c.l.b16 %v39
  %v184 = vunpack.c.l.b16 %v40
  %v185 = vunpack.c.l.b16 %v41
  %v186 = vunpack.c.l.b16 %v42
  %v187 = vunpack.c.l.b16 %v43
  %v188 = vunpack.c.l.b16 %v44
  %v189 = vunpack.c.l.b16 %v45
  %v190 = vunpack.c.l.b16 %v46
  %v191 = vunpack.c.l.b16 %v47
  %v192 = vunpack.c.l.b16 %v48
  %v193 = vunpack.c.l.b16 %v49
  %v194 = vunpack.c.l.b16 %v50
  %v195 = vunpack.c.l.b16 %v51
  %v196 = vunpack.c.l.b16 %v52
  %v197 = vunpack.c.l.b16 %v53
  %v198 = vunpack.c.l.b16 %v54
  %v199 = vunpack.c.l.b16 %v55
  %v200 = vunpack.c.l.b16 %v56
  %v201 = vunpack.c.l.b16 %v57
  %v202 = vunpack.c.l.b16 %v58
  %v203 = vunpack.c.l.b16 %v59
  %v204 = vunpack.c.l.b16 %v60
  %v205 = vunpack.c.l.b16 %v61
  %v206 = vunpack.c.l.b16 %v62
  %v207 = vunpack.c.l.b16 %v63
  %v208 = vunpack.c.l.b16 %v64
  %v209 = vunpack.c.l.b16 %v65
  %v210 = vpack.c.b16 %v179, %v178
  %v211 = vpack.c.b16 %v181, %v180
  %v212 = vpack.c.b16 %v183, %v182
  %v213 = vpack.c.b16 %v185, %v184
  %v214 = vpack.c.b16 %v187, %v186
  %v215 = vpack.c.b16 %v189, %v188
  %v216 = vpack.c.b16 %v191, %v190
  %v217 = vpack.c.b16 %v193, %v192
  %v218 = vpack.c.b16 %v195, %v194
  %v219 = vpack.c.b16 %v197, %v196
  %v220 = vpack.c.b16 %v199, %v198
  %v221 = vpack.c.b16 %v201, %v200
  %v222 = vpack.c.b16 %v203, %v202
  %v223 = vpack.c.b16 %v205, %v204
  %v224 = vpack.c.b16 %v207, %v206
  %v225 = vpack.c.b16 %v209, %v208
  %242 = vmatprep.subr.bf16.mxu0 0
  %243 = vmatpush1.bf16.msra.mxu0 %v210
  %244 = vmatprep.subr.bf16.mxu0 0
  %245 = vmatpush1.bf16.msra.mxu0 %v211
  %246 = vmatprep.subr.bf16.mxu0 0
  %247 = vmatpush1.bf16.msra.mxu0 %v212
  %248 = vmatprep.subr.bf16.mxu0 0
  %249 = vmatpush1.bf16.msra.mxu0 %v213
  %250 = vmatprep.subr.bf16.mxu0 0
  %251 = vmatpush1.bf16.msra.mxu0 %v214
  %252 = vmatprep.subr.bf16.mxu0 0
  %253 = vmatpush1.bf16.msra.mxu0 %v215
  %254 = vmatprep.subr.bf16.mxu0 0
  %255 = vmatpush1.bf16.msra.mxu0 %v216
  %256 = vmatprep.subr.bf16.mxu0 0
  %257 = vmatpush1.bf16.msra.mxu0 %v217
  %258 = vmatprep.subr.bf16.mxu0 0
  %259 = vmatpush1.bf16.msra.mxu0 %v218
  %260 = vmatprep.subr.bf16.mxu0 0
  %261 = vmatpush1.bf16.msra.mxu0 %v219
  %262 = vmatprep.subr.bf16.mxu0 0
  %263 = vmatpush1.bf16.msra.mxu0 %v220
  %264 = vmatprep.subr.bf16.mxu0 0
  %265 = vmatpush1.bf16.msra.mxu0 %v221
  %266 = vmatprep.subr.bf16.mxu0 0
  %267 = vmatpush1.bf16.msra.mxu0 %v222
  %268 = vmatprep.subr.bf16.mxu0 0
  %269 = vmatpush1.bf16.msra.mxu0 %v223
  %270 = vmatprep.subr.bf16.mxu0 0
  %271 = vmatpush1.bf16.msra.mxu0 %v224
  %272 = vmatprep.subr.bf16.mxu0 0
  %273 = vmatpush1.bf16.msra.mxu0 %v225
  %274 = vmatprep.mubr.bf16.mxu0 %v115
  %275 = vmatmul.mubr.bf16.gmra.mrb[0].mxu0 %v114
  %v276 = vpop.f32.mrb[0].mxu0
  %v277 = vadd.f32 0.0, %v276
  %v278 = vpop.f32.mrb[0].mxu0
  %v279 = vpop.f32.mrb[0].mxu0
  %v280 = vadd.f32 0.0, %v279
  %v281 = vpop.f32.mrb[0].mxu0
  %282 = vmatprep.mubr.bf16.mxu0 %v117
  %283 = vmatmul.mubr.bf16.gmra.mrb[0].mxu0 %v116
  %v284 = vpop.f32.mrb[0].mxu0
  %v285 = vadd.f32 0.0, %v284
  %v286 = vpop.f32.mrb[0].mxu0
  %v287 = vpop.f32.mrb[0].mxu0
  %v288 = vadd.f32 0.0, %v287
  %v289 = vpop.f32.mrb[0].mxu0
  %290 = vmatprep.mubr.bf16.mxu0 %v119
  %291 = vmatmul.mubr.bf16.gmra.mrb[0].mxu0 %v118
  %v292 = vpop.f32.mrb[0].mxu0
  %v293 = vadd.f32 0.0, %v292
  %v294 = vpop.f32.mrb[0].mxu0
  %v295 = vpop.f32.mrb[0].mxu0
  %v296 = vadd.f32 0.0, %v295
  %v297 = vpop.f32.mrb[0].mxu0
  %298 = vmatprep.mubr.bf16.mxu0 %v121
  %299 = vmatmul.mubr.bf16.gmra.mrb[0].mxu0 %v120
  %v300 = vpop.f32.mrb[0].mxu0
  %v301 = vadd.f32 0.0, %v300
  %v302 = vpop.f32.mrb[0].mxu0
  %v303 = vpop.f32.mrb[0].mxu0
  %v304 = vadd.f32 0.0, %v303
  %v305 = vpop.f32.mrb[0].mxu0
  %306 = vmatprep.mubr.bf16.mxu0 %v123
  %307 = vmatmul.mubr.bf16.gmra.mrb[0].mxu0 %v122
  %v308 = vpop.f32.mrb[0].mxu0
  %v309 = vadd.f32 0.0, %v308
  %v310 = vpop.f32.mrb[0].mxu0
  %v311 = vpop.f32.mrb[0].mxu0
  %v312 = vadd.f32 0.0, %v311
  %v313 = vpop.f32.mrb[0].mxu0
  %314 = vmatprep.mubr.bf16.mxu0 %v125
  %315 = vmatmul.mubr.bf16.gmra.mrb[0].mxu0 %v124
  %v316 = vpop.f32.mrb[0].mxu0
  %v317 = vadd.f32 0.0, %v316
  %v318 = vpop.f32.mrb[0].mxu0
  %v319 = vpop.f32.mrb[0].mxu0
  %v320 = vadd.f32 0.0, %v319
  %v321 = vpop.f32.mrb[0].mxu0
  %322 = vmatprep.mubr.bf16.mxu0 %v127
  %323 = vmatmul.mubr.bf16.gmra.mrb[0].mxu0 %v126
  %v324 = vpop.f32.mrb[0].mxu0
  %v325 = vadd.f32 0.0, %v324
  %v326 = vpop.f32.mrb[0].mxu0
  %v327 = vpop.f32.mrb[0].mxu0
  %v328 = vadd.f32 0.0, %v327
  %v329 = vpop.f32.mrb[0].mxu0
  %330 = vmatprep.mubr.bf16.mxu0 %v129
  %331 = vmatmul.mubr.bf16.gmra.mrb[0].mxu0 %v128
  %v332 = vpop.f32.mrb[0].mxu0
  %v333 = vadd.f32 0.0, %v332
  %v334 = vpop.f32.mrb[0].mxu0
  %v335 = vpop.f32.mrb[0].mxu0
  %v336 = vadd.f32 0.0, %v335
  %v337 = vpop.f32.mrb[0].mxu0
  %338 = vdwg.mxu0
  %v339 = vadd.f32 %v277, %v280
  %v340 = vadd.f32 %v339, %v285
  %v341 = vadd.f32 %v340, %v288
  %v342 = vadd.f32 %v341, %v293
  %v343 = vadd.f32 %v342, %v296
  %v344 = vadd.f32 %v343, %v301
  %v345 = vadd.f32 %v344, %v304
  %v346 = vadd.f32 %v345, %v309
  %v347 = vadd.f32 %v346, %v312
  %v348 = vadd.f32 %v347, %v317
  %v349 = vadd.f32 %v348, %v320
  %v350 = vadd.f32 %v349, %v325
  %v351 = vadd.f32 %v350, %v328
  %v352 = vadd.f32 %v351, %v333
  %v353 = vadd.f32 %v352, %v336
  %v354 = vrot.slane %v353, 4
  %v355 = vadd.f32 %v353, %v354
  %v356 = vrot.slane %v355, 2
  %v357 = vadd.f32 %v355, %v356
  %v358 = vrot.slane %v357, 1
  %v359 = vadd.f32 %v357, %v358
  %v360 = vmul.f32 %v359, 0.0078125
  %v361 = vmul.f32 %v277, %v277
  %v362 = vmul.f32 %v280, %v280
  %v363 = vmul.f32 %v285, %v285
  %v364 = vmul.f32 %v288, %v288
  %v365 = vmul.f32 %v293, %v293
  %v366 = vmul.f32 %v296, %v296
  %v367 = vmul.f32 %v301, %v301
  %v368 = vmul.f32 %v304, %v304
  %v369 = vmul.f32 %v309, %v309
  %v370 = vmul.f32 %v312, %v312
  %v371 = vmul.f32 %v317, %v317
  %v372 = vmul.f32 %v320, %v320
  %v373 = vmul.f32 %v325, %v325
  %v374 = vmul.f32 %v328, %v328
  %v375 = vmul.f32 %v333, %v333
  %v376 = vmul.f32 %v336, %v336
  %v377 = vadd.f32 %v361, %v362
  %v378 = vadd.f32 %v377, %v363
  %v379 = vadd.f32 %v378, %v364
  %v380 = vadd.f32 %v379, %v365
  %v381 = vadd.f32 %v380, %v366
  %v382 = vadd.f32 %v381, %v367
  %v383 = vadd.f32 %v382, %v368
  %v384 = vadd.f32 %v383, %v369
  %v385 = vadd.f32 %v384, %v370
  %v386 = vadd.f32 %v385, %v371
  %v387 = vadd.f32 %v386, %v372
  %v388 = vadd.f32 %v387, %v373
  %v389 = vadd.f32 %v388, %v374
  %v390 = vadd.f32 %v389, %v375
  %v391 = vadd.f32 %v390, %v376
  %v392 = vrot.slane %v391, 4
  %v393 = vadd.f32 %v391, %v392
  %v394 = vrot.slane %v393, 2
  %v395 = vadd.f32 %v393, %v394
  %v396 = vrot.slane %v395, 1
  %v397 = vadd.f32 %v395, %v396
  %v398 = vmul.f32 %v397, 0.0078125
  %v399 = vmul.f32 %v360, %v360
  %v400 = vsub.f32 %v398, %v399
  %v401 = vmax.f32 %v400, 0.0
  %v402 = vld [vmem:[%s2] sm:$0x1]
  %v403 = vadd.f32 %v401, 1e-05
  %v404 = vrsqrt.pop %v403
  %v405 = vmul.f32 %v402, %v404
  %v406 = vld [vmem:[%s3] sm:$0x1]
  %v407 = vmul.f32 %v360, %v405
  %v408 = vsub.f32 %v406, %v407
  %v410 = vlaneseq
  %v411 = vshrl.u32 %v410, 7
  %v412 = vsub.s32 0, %v411
  %v413 = vrot.slane %v405, %v412
  %v415 = vmul.f32 %v277, %v413
  %v416 = vmul.f32 %v280, %v413
  %v417 = vmul.f32 %v285, %v413
  %v418 = vmul.f32 %v288, %v413
  %v419 = vmul.f32 %v293, %v413
  %v420 = vmul.f32 %v296, %v413
  %v421 = vmul.f32 %v301, %v413
  %v422 = vmul.f32 %v304, %v413
  %v423 = vmul.f32 %v309, %v413
  %v424 = vmul.f32 %v312, %v413
  %v425 = vmul.f32 %v317, %v413
  %v426 = vmul.f32 %v320, %v413
  %v427 = vmul.f32 %v325, %v413
  %v428 = vmul.f32 %v328, %v413
  %v429 = vmul.f32 %v333, %v413
  %v430 = vmul.f32 %v336, %v413
  %v432 = vlaneseq
  %v433 = vshrl.u32 %v432, 7
  %v434 = vsub.s32 0, %v433
  %v435 = vrot.slane %v408, %v434
  %v437 = vadd.f32 %v415, %v435
  %v438 = vadd.f32 %v416, %v435
  %v439 = vadd.f32 %v417, %v435
  %v440 = vadd.f32 %v418, %v435
  %v441 = vadd.f32 %v419, %v435
  %v442 = vadd.f32 %v420, %v435
  %v443 = vadd.f32 %v421, %v435
  %v444 = vadd.f32 %v422, %v435
  %v445 = vadd.f32 %v423, %v435
  %v446 = vadd.f32 %v424, %v435
  %v447 = vadd.f32 %v425, %v435
  %v448 = vadd.f32 %v426, %v435
  %v449 = vadd.f32 %v427, %v435
  %v450 = vadd.f32 %v428, %v435
  %v451 = vadd.f32 %v429, %v435
  %v452 = vadd.f32 %v430, %v435
  %v453 = vmul.f32 %v437, 0.2
  %v454 = vmul.f32 %v438, 0.2
  %v455 = vmul.f32 %v439, 0.2
  %v456 = vmul.f32 %v440, 0.2
  %v457 = vmul.f32 %v441, 0.2
  %v458 = vmul.f32 %v442, 0.2
  %v459 = vmul.f32 %v443, 0.2
  %v460 = vmul.f32 %v444, 0.2
  %v461 = vmul.f32 %v445, 0.2
  %v462 = vmul.f32 %v446, 0.2
  %v463 = vmul.f32 %v447, 0.2
  %v464 = vmul.f32 %v448, 0.2
  %v465 = vmul.f32 %v449, 0.2
  %v466 = vmul.f32 %v450, 0.2
  %v467 = vmul.f32 %v451, 0.2
  %v468 = vmul.f32 %v452, 0.2
  %v469 = vmax.f32 %v437, %v453
  %v470 = vmax.f32 %v438, %v454
  %v471 = vmax.f32 %v439, %v455
  %v472 = vmax.f32 %v440, %v456
  %v473 = vmax.f32 %v441, %v457
  %v474 = vmax.f32 %v442, %v458
  %v475 = vmax.f32 %v443, %v459
  %v476 = vmax.f32 %v444, %v460
  %v477 = vmax.f32 %v445, %v461
  %v478 = vmax.f32 %v446, %v462
  %v479 = vmax.f32 %v447, %v463
  %v480 = vmax.f32 %v448, %v464
  %v481 = vmax.f32 %v449, %v465
  %v482 = vmax.f32 %v450, %v466
  %v483 = vmax.f32 %v451, %v467
  %v484 = vmax.f32 %v452, %v468
  %v485 = vpack.c.bf16 %v470, %v469
  %v486 = vpack.c.bf16 %v472, %v471
  %v487 = vpack.c.bf16 %v474, %v473
  %v488 = vpack.c.bf16 %v476, %v475
  %v489 = vpack.c.bf16 %v478, %v477
  %v490 = vpack.c.bf16 %v480, %v479
  %v491 = vpack.c.bf16 %v482, %v481
  %v492 = vpack.c.bf16 %v484, %v483
  %v501 = vunpack.c.l.b16 %v485
  %v502 = vunpack.c.h.b16 %v485
  %v503 = vunpack.c.l.b16 %v486
  %v504 = vunpack.c.h.b16 %v486
  %v505 = vunpack.c.l.b16 %v487
  %v506 = vunpack.c.h.b16 %v487
  %v507 = vunpack.c.l.b16 %v488
  %v508 = vunpack.c.h.b16 %v488
  %v509 = vunpack.c.l.b16 %v489
  %v510 = vunpack.c.h.b16 %v489
  %v511 = vunpack.c.l.b16 %v490
  %v512 = vunpack.c.h.b16 %v490
  %v513 = vunpack.c.l.b16 %v491
  %v514 = vunpack.c.h.b16 %v491
  %v515 = vunpack.c.l.b16 %v492
  %v516 = vunpack.c.h.b16 %v492
  %v517 = vpack.c.b16 %v501, %v501
  %v518 = vpack.c.b16 %v502, %v502
  %v519 = vpack.c.b16 %v503, %v503
  %v520 = vpack.c.b16 %v504, %v504
  %v521 = vpack.c.b16 %v505, %v505
  %v522 = vpack.c.b16 %v506, %v506
  %v523 = vpack.c.b16 %v507, %v507
  %v524 = vpack.c.b16 %v508, %v508
  %v525 = vpack.c.b16 %v509, %v509
  %v526 = vpack.c.b16 %v510, %v510
  %v527 = vpack.c.b16 %v511, %v511
  %v528 = vpack.c.b16 %v512, %v512
  %v529 = vpack.c.b16 %v513, %v513
  %v530 = vpack.c.b16 %v514, %v514
  %v531 = vpack.c.b16 %v515, %v515
  %v532 = vpack.c.b16 %v516, %v516
  %549 = vst [vmem:[%s4] sm:$0xf] %v517
  %550 = vst [vmem:[%s4 + $0x4] sm:$0xf] %v518
  %551 = vst [vmem:[%s4 + $0x8] sm:$0xf] %v519
  %552 = vst [vmem:[%s4 + $0xc] sm:$0xf] %v520
  %553 = vst [vmem:[%s4 + $0x10] sm:$0xf] %v521
  %554 = vst [vmem:[%s4 + $0x14] sm:$0xf] %v522
  %555 = vst [vmem:[%s4 + $0x18] sm:$0xf] %v523
  %556 = vst [vmem:[%s4 + $0x1c] sm:$0xf] %v524
  %557 = vst [vmem:[%s4 + $0x20] sm:$0xf] %v525
  %558 = vst [vmem:[%s4 + $0x24] sm:$0xf] %v526
  %559 = vst [vmem:[%s4 + $0x28] sm:$0xf] %v527
  %560 = vst [vmem:[%s4 + $0x2c] sm:$0xf] %v528
  %561 = vst [vmem:[%s4 + $0x30] sm:$0xf] %v529
  %562 = vst [vmem:[%s4 + $0x34] sm:$0xf] %v530
  %563 = vst [vmem:[%s4 + $0x38] sm:$0xf] %v531
  %564 = vst [vmem:[%s4 + $0x3c] sm:$0xf] %v532
  // Predicated region
  $region18: #{_lambda_.6} parent=0 // pred_check
    _
  $region19: #{_lambda_.6} parent=0 // pred_check_branch
    %566 = sbr.rel (0) target = $region21
  $region20: #{_lambda_.6} parent=0 // pred_region
    _
  $region21: #{_lambda_.6} parent=0 // pred_fallthru
    _
  // Predicated region
  $region22: #{_lambda_.6} parent=0 // pred_check
    _
  $region23: #{_lambda_.6} parent=0 // pred_check_branch
    %568 = sbr.rel (0) target = $region25
  $region24: #{_lambda_.6} parent=0 // pred_region
    _
  $region25: #{_lambda_.6} parent=0 // pred_fallthru
    _

// kernel: _lambda_.7
$region0: #{_lambda_.7}
  #allocation0 [shape = 'u32[]', space=smem, size = 0x4, offset = 0x4, fixed_abs, tag = 'smem constant byte address 0x4 - core index']
  #allocation1 [shape = 'u32[144,128]{1,0:T(1,128)}', space=vmem, size = 0x12000, scoped, tag = 'internal scratch']
  %s0 = inlined_call_operand.vmem [shape: bf16[32,512], index: 0, kind: input, shape index: {}]
  %s1 = inlined_call_operand.vmem [shape: bf16[512,128], index: 1, kind: input, shape index: {}]
  %s2 = inlined_call_operand.vmem [shape: f32[1,128], index: 2, kind: input, shape index: {}]
  %s3 = inlined_call_operand.vmem [shape: f32[1,128], index: 3, kind: input, shape index: {}]
  %s4 = inlined_call_operand.vmem [shape: f32[32,128], index: 4, kind: input, shape index: {}]
  %s5 = inlined_call_operand.vmem [shape: f32[2,32], index: 5, kind: input, shape index: {}]
  %s6 = inlined_call_operand.vmem [shape: f32[2,1], index: 6, kind: output, shape index: {}]
  %s7 = sld [smem:[#allocation0]]
  $region34: #{_lambda_.7} parent=0
    _
  %s9 = ssub.s32 1, %s7
  %s10 = scalar_select 0, %s9, %s7
  // Predicated region
  $region2: #{_lambda_.7} parent=0 // pred_check
    _
  $region3: #{_lambda_.7} parent=0 // pred_check_branch
    %12 = sbr.rel (0) target = $region5
  $region4: #{_lambda_.7} parent=0 // pred_region
    _
  $region5: #{_lambda_.7} parent=0 // pred_fallthru
    _
  // Predicated region
  $region6: #{_lambda_.7} parent=0 // pred_check
    _
  $region7: #{_lambda_.7} parent=0 // pred_check_branch
    %14 = sbr.rel (0) target = $region9
  $region8: #{_lambda_.7} parent=0 // pred_region
    _
  $region9: #{_lambda_.7} parent=0 // pred_fallthru
    _
  // Predicated region
  $region10: #{_lambda_.7} parent=0 // pred_check
    _
  $region11: #{_lambda_.7} parent=0 // pred_check_branch
    %16 = sbr.rel (0) target = $region13
  $region12: #{_lambda_.7} parent=0 // pred_region
    _
  $region13: #{_lambda_.7} parent=0 // pred_fallthru
    _
  // Predicated region
  $region14: #{_lambda_.7} parent=0 // pred_check
    _
  $region15: #{_lambda_.7} parent=0 // pred_check_branch
    %18 = sbr.rel (0) target = $region17
  $region16: #{_lambda_.7} parent=0 // pred_region
    _
  $region17: #{_lambda_.7} parent=0 // pred_fallthru
    _
  // Predicated region
  $region18: #{_lambda_.7} parent=0 // pred_check
    _
  $region19: #{_lambda_.7} parent=0 // pred_check_branch
    %20 = sbr.rel (0) target = $region21
  $region20: #{_lambda_.7} parent=0 // pred_region
    _
  $region21: #{_lambda_.7} parent=0 // pred_fallthru
    _
  // Predicated region
  $region22: #{_lambda_.7} parent=0 // pred_check
    _
  $region23: #{_lambda_.7} parent=0 // pred_check_branch
    %22 = sbr.rel (0) target = $region25
  $region24: #{_lambda_.7} parent=0 // pred_region
    _
  $region25: #{_lambda_.7} parent=0 // pred_fallthru
    _
  %v24 = vld [vmem:[%s0] sm:$0xff]
  %v25 = vld [vmem:[%s0 + $0x8] sm:$0xff]
  %v26 = vld [vmem:[%s0 + $0x10] sm:$0xff]
  %v27 = vld [vmem:[%s0 + $0x18] sm:$0xff]
  %v28 = vld [vmem:[%s0 + $0x20] sm:$0xff]
  %v29 = vld [vmem:[%s0 + $0x28] sm:$0xff]
  %v30 = vld [vmem:[%s0 + $0x30] sm:$0xff]
  %v31 = vld [vmem:[%s0 + $0x38] sm:$0xff]
  %v32 = vld [vmem:[%s1] sm:$0xf]
  %v33 = vld [vmem:[%s1 + $0x4] sm:$0xf]
  %v34 = vld [vmem:[%s1 + $0x8] sm:$0xf]
  %v35 = vld [vmem:[%s1 + $0xc] sm:$0xf]
  %v36 = vld [vmem:[%s1 + $0x10] sm:$0xf]
  %v37 = vld [vmem:[%s1 + $0x14] sm:$0xf]
  %v38 = vld [vmem:[%s1 + $0x18] sm:$0xf]
  %v39 = vld [vmem:[%s1 + $0x1c] sm:$0xf]
  %v40 = vld [vmem:[%s1 + $0x20] sm:$0xf]
  %v41 = vld [vmem:[%s1 + $0x24] sm:$0xf]
  %v42 = vld [vmem:[%s1 + $0x28] sm:$0xf]
  %v43 = vld [vmem:[%s1 + $0x2c] sm:$0xf]
  %v44 = vld [vmem:[%s1 + $0x30] sm:$0xf]
  %v45 = vld [vmem:[%s1 + $0x34] sm:$0xf]
  %v46 = vld [vmem:[%s1 + $0x38] sm:$0xf]
  %v47 = vld [vmem:[%s1 + $0x3c] sm:$0xf]
  %v48 = vld [vmem:[%s1 + $0x40] sm:$0xf]
  %v49 = vld [vmem:[%s1 + $0x44] sm:$0xf]
  %v50 = vld [vmem:[%s1 + $0x48] sm:$0xf]
  %v51 = vld [vmem:[%s1 + $0x4c] sm:$0xf]
  %v52 = vld [vmem:[%s1 + $0x50] sm:$0xf]
  %v53 = vld [vmem:[%s1 + $0x54] sm:$0xf]
  %v54 = vld [vmem:[%s1 + $0x58] sm:$0xf]
  %v55 = vld [vmem:[%s1 + $0x5c] sm:$0xf]
  %v56 = vld [vmem:[%s1 + $0x60] sm:$0xf]
  %v57 = vld [vmem:[%s1 + $0x64] sm:$0xf]
  %v58 = vld [vmem:[%s1 + $0x68] sm:$0xf]
  %v59 = vld [vmem:[%s1 + $0x6c] sm:$0xf]
  %v60 = vld [vmem:[%s1 + $0x70] sm:$0xf]
  %v61 = vld [vmem:[%s1 + $0x74] sm:$0xf]
  %v62 = vld [vmem:[%s1 + $0x78] sm:$0xf]
  %v63 = vld [vmem:[%s1 + $0x7c] sm:$0xf]
  %v64 = vld [vmem:[%s1 + $0x80] sm:$0xf]
  %v65 = vld [vmem:[%s1 + $0x84] sm:$0xf]
  %v66 = vld [vmem:[%s1 + $0x88] sm:$0xf]
  %v67 = vld [vmem:[%s1 + $0x8c] sm:$0xf]
  %v68 = vld [vmem:[%s1 + $0x90] sm:$0xf]
  %v69 = vld [vmem:[%s1 + $0x94] sm:$0xf]
  %v70 = vld [vmem:[%s1 + $0x98] sm:$0xf]
  %v71 = vld [vmem:[%s1 + $0x9c] sm:$0xf]
  %v72 = vld [vmem:[%s1 + $0xa0] sm:$0xf]
  %v73 = vld [vmem:[%s1 + $0xa4] sm:$0xf]
  %v74 = vld [vmem:[%s1 + $0xa8] sm:$0xf]
  %v75 = vld [vmem:[%s1 + $0xac] sm:$0xf]
  %v76 = vld [vmem:[%s1 + $0xb0] sm:$0xf]
  %v77 = vld [vmem:[%s1 + $0xb4] sm:$0xf]
  %v78 = vld [vmem:[%s1 + $0xb8] sm:$0xf]
  %v79 = vld [vmem:[%s1 + $0xbc] sm:$0xf]
  %v80 = vld [vmem:[%s1 + $0xc0] sm:$0xf]
  %v81 = vld [vmem:[%s1 + $0xc4] sm:$0xf]
  %v82 = vld [vmem:[%s1 + $0xc8] sm:$0xf]
  %v83 = vld [vmem:[%s1 + $0xcc] sm:$0xf]
  %v84 = vld [vmem:[%s1 + $0xd0] sm:$0xf]
  %v85 = vld [vmem:[%s1 + $0xd4] sm:$0xf]
  %v86 = vld [vmem:[%s1 + $0xd8] sm:$0xf]
  %v87 = vld [vmem:[%s1 + $0xdc] sm:$0xf]
  %v88 = vld [vmem:[%s1 + $0xe0] sm:$0xf]
  %v89 = vld [vmem:[%s1 + $0xe4] sm:$0xf]
  %v90 = vld [vmem:[%s1 + $0xe8] sm:$0xf]
  %v91 = vld [vmem:[%s1 + $0xec] sm:$0xf]
  %v92 = vld [vmem:[%s1 + $0xf0] sm:$0xf]
  %v93 = vld [vmem:[%s1 + $0xf4] sm:$0xf]
  %v94 = vld [vmem:[%s1 + $0xf8] sm:$0xf]
  %v95 = vld [vmem:[%s1 + $0xfc] sm:$0xf]
  %v104 = vunpack.c.l.b16 %v24
  %v105 = vunpack.c.h.b16 %v24
  %v106 = vunpack.c.l.b16 %v25
  %v107 = vunpack.c.h.b16 %v25
  %v108 = vunpack.c.l.b16 %v26
  %v109 = vunpack.c.h.b16 %v26
  %v110 = vunpack.c.l.b16 %v27
  %v111 = vunpack.c.h.b16 %v27
  %v112 = vunpack.c.l.b16 %v28
  %v113 = vunpack.c.h.b16 %v28
  %v114 = vunpack.c.l.b16 %v29
  %v115 = vunpack.c.h.b16 %v29
  %v116 = vunpack.c.l.b16 %v30
  %v117 = vunpack.c.h.b16 %v30
  %v118 = vunpack.c.l.b16 %v31
  %v119 = vunpack.c.h.b16 %v31
  %v120 = vpack.c.b16 %v108, %v104
  %v121 = vpack.c.b16 %v109, %v105
  %v122 = vpack.c.b16 %v110, %v106
  %v123 = vpack.c.b16 %v111, %v107
  %v124 = vpack.c.b16 %v116, %v112
  %v125 = vpack.c.b16 %v117, %v113
  %v126 = vpack.c.b16 %v118, %v114
  %v127 = vpack.c.b16 %v119, %v115
  %v200 = vunpack.c.l.b16 %v32
  %v201 = vunpack.c.l.b16 %v33
  %v202 = vunpack.c.l.b16 %v34
  %v203 = vunpack.c.l.b16 %v35
  %v204 = vunpack.c.l.b16 %v36
  %v205 = vunpack.c.l.b16 %v37
  %v206 = vunpack.c.l.b16 %v38
  %v207 = vunpack.c.l.b16 %v39
  %v208 = vunpack.c.l.b16 %v40
  %v209 = vunpack.c.l.b16 %v41
  %v210 = vunpack.c.l.b16 %v42
  %v211 = vunpack.c.l.b16 %v43
  %v212 = vunpack.c.l.b16 %v44
  %v213 = vunpack.c.l.b16 %v45
  %v214 = vunpack.c.l.b16 %v46
  %v215 = vunpack.c.l.b16 %v47
  %v216 = vunpack.c.l.b16 %v48
  %v217 = vunpack.c.l.b16 %v49
  %v218 = vunpack.c.l.b16 %v50
  %v219 = vunpack.c.l.b16 %v51
  %v220 = vunpack.c.l.b16 %v52
  %v221 = vunpack.c.l.b16 %v53
  %v222 = vunpack.c.l.b16 %v54
  %v223 = vunpack.c.l.b16 %v55
  %v224 = vunpack.c.l.b16 %v56
  %v225 = vunpack.c.l.b16 %v57
  %v226 = vunpack.c.l.b16 %v58
  %v227 = vunpack.c.l.b16 %v59
  %v228 = vunpack.c.l.b16 %v60
  %v229 = vunpack.c.l.b16 %v61
  %v230 = vunpack.c.l.b16 %v62
  %v231 = vunpack.c.l.b16 %v63
  %v232 = vunpack.c.l.b16 %v64
  %v233 = vunpack.c.l.b16 %v65
  %v234 = vunpack.c.l.b16 %v66
  %v235 = vunpack.c.l.b16 %v67
  %v236 = vunpack.c.l.b16 %v68
  %v237 = vunpack.c.l.b16 %v69
  %v238 = vunpack.c.l.b16 %v70
  %v239 = vunpack.c.l.b16 %v71
  %v240 = vunpack.c.l.b16 %v72
  %v241 = vunpack.c.l.b16 %v73
  %v242 = vunpack.c.l.b16 %v74
  %v243 = vunpack.c.l.b16 %v75
  %v244 = vunpack.c.l.b16 %v76
  %v245 = vunpack.c.l.b16 %v77
  %v246 = vunpack.c.l.b16 %v78
  %v247 = vunpack.c.l.b16 %v79
  %v248 = vunpack.c.l.b16 %v80
  %v249 = vunpack.c.l.b16 %v81
  %v250 = vunpack.c.l.b16 %v82
  %v251 = vunpack.c.l.b16 %v83
  %v252 = vunpack.c.l.b16 %v84
  %v253 = vunpack.c.l.b16 %v85
  %v254 = vunpack.c.l.b16 %v86
  %v255 = vunpack.c.l.b16 %v87
  %v256 = vunpack.c.l.b16 %v88
  %v257 = vunpack.c.l.b16 %v89
  %v258 = vunpack.c.l.b16 %v90
  %v259 = vunpack.c.l.b16 %v91
  %v260 = vunpack.c.l.b16 %v92
  %v261 = vunpack.c.l.b16 %v93
  %v262 = vunpack.c.l.b16 %v94
  %v263 = vunpack.c.l.b16 %v95
  %v264 = vpack.c.b16 %v201, %v200
  %v265 = vpack.c.b16 %v203, %v202
  %v266 = vpack.c.b16 %v205, %v204
  %v267 = vpack.c.b16 %v207, %v206
  %v268 = vpack.c.b16 %v209, %v208
  %v269 = vpack.c.b16 %v211, %v210
  %v270 = vpack.c.b16 %v213, %v212
  %v271 = vpack.c.b16 %v215, %v214
  %v272 = vpack.c.b16 %v217, %v216
  %v273 = vpack.c.b16 %v219, %v218
  %v274 = vpack.c.b16 %v221, %v220
  %v275 = vpack.c.b16 %v223, %v222
  %v276 = vpack.c.b16 %v225, %v224
  %v277 = vpack.c.b16 %v227, %v226
  %v278 = vpack.c.b16 %v229, %v228
  %v279 = vpack.c.b16 %v231, %v230
  %v280 = vpack.c.b16 %v233, %v232
  %v281 = vpack.c.b16 %v235, %v234
  %v282 = vpack.c.b16 %v237, %v236
  %v283 = vpack.c.b16 %v239, %v238
  %v284 = vpack.c.b16 %v241, %v240
  %v285 = vpack.c.b16 %v243, %v242
  %v286 = vpack.c.b16 %v245, %v244
  %v287 = vpack.c.b16 %v247, %v246
  %v288 = vpack.c.b16 %v249, %v248
  %v289 = vpack.c.b16 %v251, %v250
  %v290 = vpack.c.b16 %v253, %v252
  %v291 = vpack.c.b16 %v255, %v254
  %v292 = vpack.c.b16 %v257, %v256
  %v293 = vpack.c.b16 %v259, %v258
  %v294 = vpack.c.b16 %v261, %v260
  %v295 = vpack.c.b16 %v263, %v262
  %328 = vmatprep.subr.bf16.mxu0 0
  %329 = vmatpush1.bf16.msra.mxu0 %v264
  %330 = vmatprep.subr.bf16.mxu0 0
  %331 = vmatpush1.bf16.msra.mxu0 %v265
  %332 = vmatprep.subr.bf16.mxu0 0
  %333 = vmatpush1.bf16.msra.mxu0 %v266
  %334 = vmatprep.subr.bf16.mxu0 0
  %335 = vmatpush1.bf16.msra.mxu0 %v267
  %336 = vmatprep.subr.bf16.mxu0 0
  %337 = vmatpush1.bf16.msra.mxu0 %v268
  %338 = vmatprep.subr.bf16.mxu0 0
  %339 = vmatpush1.bf16.msra.mxu0 %v269
  %340 = vmatprep.subr.bf16.mxu0 0
  %341 = vmatpush1.bf16.msra.mxu0 %v270
  %342 = vmatprep.subr.bf16.mxu0 0
  %343 = vmatpush1.bf16.msra.mxu0 %v271
  %344 = vmatprep.subr.bf16.mxu0 0
  %345 = vmatpush1.bf16.msra.mxu0 %v272
  %346 = vmatprep.subr.bf16.mxu0 0
  %347 = vmatpush1.bf16.msra.mxu0 %v273
  %348 = vmatprep.subr.bf16.mxu0 0
  %349 = vmatpush1.bf16.msra.mxu0 %v274
  %350 = vmatprep.subr.bf16.mxu0 0
  %351 = vmatpush1.bf16.msra.mxu0 %v275
  %352 = vmatprep.subr.bf16.mxu0 0
  %353 = vmatpush1.bf16.msra.mxu0 %v276
  %354 = vmatprep.subr.bf16.mxu0 0
  %355 = vmatpush1.bf16.msra.mxu0 %v277
  %356 = vmatprep.subr.bf16.mxu0 0
  %357 = vmatpush1.bf16.msra.mxu0 %v278
  %358 = vmatprep.subr.bf16.mxu0 0
  %359 = vmatpush1.bf16.msra.mxu0 %v279
  %360 = vmatprep.mubr.bf16.mxu0 %v121
  %361 = vmatmul.mubr.bf16.gmra.mrb[0].mxu0 %v120
  %v362 = vpop.f32.mrb[0].mxu0
  %v363 = vadd.f32 0.0, %v362
  %v364 = vpop.f32.mrb[0].mxu0
  %v365 = vpop.f32.mrb[0].mxu0
  %v366 = vadd.f32 0.0, %v365
  %v367 = vpop.f32.mrb[0].mxu0
  %368 = vmatprep.mubr.bf16.mxu0 %v125
  %369 = vmatmul.mubr.bf16.gmra.mrb[0].mxu0 %v124
  %v370 = vpop.f32.mrb[0].mxu0
  %v371 = vadd.f32 0.0, %v370
  %v372 = vpop.f32.mrb[0].mxu0
  %v373 = vpop.f32.mrb[0].mxu0
  %v374 = vadd.f32 0.0, %v373
  %v375 = vpop.f32.mrb[0].mxu0
  %376 = vdwg.mxu0
  %377 = vmatprep.subr.bf16.mxu0 0
  %378 = vmatpush1.bf16.msra.mxu0 %v280
  %379 = vmatprep.subr.bf16.mxu0 0
  %380 = vmatpush1.bf16.msra.mxu0 %v281
  %381 = vmatprep.subr.bf16.mxu0 0
  %382 = vmatpush1.bf16.msra.mxu0 %v282
  %383 = vmatprep.subr.bf16.mxu0 0
  %384 = vmatpush1.bf16.msra.mxu0 %v283
  %385 = vmatprep.subr.bf16.mxu0 0
  %386 = vmatpush1.bf16.msra.mxu0 %v284
  %387 = vmatprep.subr.bf16.mxu0 0
  %388 = vmatpush1.bf16.msra.mxu0 %v285
  %389 = vmatprep.subr.bf16.mxu0 0
  %390 = vmatpush1.bf16.msra.mxu0 %v286
  %391 = vmatprep.subr.bf16.mxu0 0
  %392 = vmatpush1.bf16.msra.mxu0 %v287
  %393 = vmatprep.subr.bf16.mxu0 0
  %394 = vmatpush1.bf16.msra.mxu0 %v288
  %395 = vmatprep.subr.bf16.mxu0 0
  %396 = vmatpush1.bf16.msra.mxu0 %v289
  %397 = vmatprep.subr.bf16.mxu0 0
  %398 = vmatpush1.bf16.msra.mxu0 %v290
  %399 = vmatprep.subr.bf16.mxu0 0
  %400 = vmatpush1.bf16.msra.mxu0 %v291
  %401 = vmatprep.subr.bf16.mxu0 0
  %402 = vmatpush1.bf16.msra.mxu0 %v292
  %403 = vmatprep.subr.bf16.mxu0 0
  %404 = vmatpush1.bf16.msra.mxu0 %v293
  %405 = vmatprep.subr.bf16.mxu0 0
  %406 = vmatpush1.bf16.msra.mxu0 %v294
  %407 = vmatprep.subr.bf16.mxu0 0
  %408 = vmatpush1.bf16.msra.mxu0 %v295
  %409 = vmatprep.mubr.bf16.mxu0 %v123
  %410 = vmatmul.mubr.bf16.gmra.mrb[0].mxu0 %v122
  %v411 = vpop.f32.mrb[0].mxu0
  %v412 = vadd.f32 %v363, %v411
  %v413 = vpop.f32.mrb[0].mxu0
  %v414 = vpop.f32.mrb[0].mxu0
  %v415 = vadd.f32 %v366, %v414
  %v416 = vpop.f32.mrb[0].mxu0
  %417 = vmatprep.mubr.bf16.mxu0 %v127
  %418 = vmatmul.mubr.bf16.gmra.mrb[0].mxu0 %v126
  %v419 = vpop.f32.mrb[0].mxu0
  %v420 = vadd.f32 %v371, %v419
  %v421 = vpop.f32.mrb[0].mxu0
  %v422 = vpop.f32.mrb[0].mxu0
  %v423 = vadd.f32 %v374, %v422
  %v424 = vpop.f32.mrb[0].mxu0
  %425 = vdwg.mxu0
  %v426 = vadd.f32 %v412, %v415
  %v427 = vadd.f32 %v426, %v420
  %v428 = vadd.f32 %v427, %v423
  %v429 = vrot.slane %v428, 4
  %v430 = vadd.f32 %v428, %v429
  %v431 = vrot.slane %v430, 2
  %v432 = vadd.f32 %v430, %v431
  %v433 = vrot.slane %v432, 1
  %v434 = vadd.f32 %v432, %v433
  %v435 = vmul.f32 %v434, 0.03125
  %v436 = vmul.f32 %v412, %v412
  %v437 = vmul.f32 %v415, %v415
  %v438 = vmul.f32 %v420, %v420
  %v439 = vmul.f32 %v423, %v423
  %v440 = vadd.f32 %v436, %v437
  %v441 = vadd.f32 %v440, %v438
  %v442 = vadd.f32 %v441, %v439
  %v443 = vrot.slane %v442, 4
  %v444 = vadd.f32 %v442, %v443
  %v445 = vrot.slane %v444, 2
  %v446 = vadd.f32 %v444, %v445
  %v447 = vrot.slane %v446, 1
  %v448 = vadd.f32 %v446, %v447
  %v449 = vmul.f32 %v448, 0.03125
  %v450 = vmul.f32 %v435, %v435
  %v451 = vsub.f32 %v449, %v450
  %v452 = vmax.f32 %v451, 0.0
  %v453 = vld [vmem:[%s2] sm:$0x1]
  %v454 = vadd.f32 %v452, 1e-05
  %v455 = vrsqrt.pop %v454
  %v456 = vmul.f32 %v453, %v455
  %v457 = vld [vmem:[%s3] sm:$0x1]
  %v458 = vmul.f32 %v435, %v456
  %v459 = vsub.f32 %v457, %v458
  %v461 = vlaneseq
  %v462 = vshrl.u32 %v461, 7
  %v463 = vsub.s32 0, %v462
  %v464 = vrot.slane %v456, %v463
  %v466 = vmul.f32 %v412, %v464
  %v467 = vmul.f32 %v415, %v464
  %v468 = vmul.f32 %v420, %v464
  %v469 = vmul.f32 %v423, %v464
  %v471 = vlaneseq
  %v472 = vshrl.u32 %v471, 7
  %v473 = vsub.s32 0, %v472
  %v474 = vrot.slane %v459, %v473
  %v476 = vadd.f32 %v466, %v474
  %v477 = vadd.f32 %v467, %v474
  %v478 = vadd.f32 %v468, %v474
  %v479 = vadd.f32 %v469, %v474
  %v480 = vmul.f32 %v476, 0.2
  %v481 = vmul.f32 %v477, 0.2
  %v482 = vmul.f32 %v478, 0.2
  %v483 = vmul.f32 %v479, 0.2
  %v484 = vmax.f32 %v476, %v480
  %v485 = vmax.f32 %v477, %v481
  %v486 = vmax.f32 %v478, %v482
  %v487 = vmax.f32 %v479, %v483
  %v488 = vld [vmem:[%s4] sm:$0xff]
  %v489 = vld [vmem:[%s4 + $0x8] sm:$0xff]
  %v490 = vld [vmem:[%s4 + $0x10] sm:$0xff]
  %v491 = vld [vmem:[%s4 + $0x18] sm:$0xff]
  %v492 = vmul.f32 %v484, %v488
  %v493 = vmul.f32 %v485, %v489
  %v494 = vmul.f32 %v486, %v490
  %v495 = vmul.f32 %v487, %v491
  %v496 = vld [vmem:[%s5] sm:$0x3]
  %vm497 = vcmask 261120
  %v499 = vsel %vm497, %v496, 0
  %501 = vmatprep.subr.mxu0 0.0
  %502 = vmatpush1.msra.mxu0 %v492
  %503 = vmatprep.subr.mxu0 0.0
  %504 = vmatpush1.msra.mxu0 %v493
  %505 = vmatprep.subr.mxu0 0.0
  %506 = vmatpush1.msra.mxu0 %v494
  %507 = vmatprep.subr.mxu0 0.0
  %508 = vmatpush1.msra.mxu0 %v495
  %509 = vmatprep.subr.mxu0 0.0
  %510 = vmatpush1.msra.mxu0 0.0
  %511 = vmatprep.subr.mxu0 0.0
  %512 = vmatpush1.msra.mxu0 0.0
  %513 = vmatprep.subr.mxu0 0.0
  %514 = vmatpush1.msra.mxu0 0.0
  %515 = vmatprep.subr.mxu0 0.0
  %516 = vmatpush1.msra.mxu0 0.0
  %517 = vmatprep.subr.mxu0 0.0
  %518 = vmatpush1.msra.mxu0 0.0
  %519 = vmatprep.subr.mxu0 0.0
  %520 = vmatpush1.msra.mxu0 0.0
  %521 = vmatprep.subr.mxu0 0.0
  %522 = vmatpush1.msra.mxu0 0.0
  %523 = vmatprep.subr.mxu0 0.0
  %524 = vmatpush1.msra.mxu0 0.0
  %525 = vmatprep.subr.mxu0 0.0
  %526 = vmatpush1.msra.mxu0 0.0
  %527 = vmatprep.subr.mxu0 0.0
  %528 = vmatpush1.msra.mxu0 0.0
  %529 = vmatprep.subr.mxu0 0.0
  %530 = vmatpush1.msra.mxu0 0.0
  %531 = vmatprep.subr.mxu0 0.0
  %532 = vmatpush1.msra.mxu0 0.0
  %533 = vmatprep.subr.mxu0 0.0
  %534 = vmatpush1.msra.mxu0 0.0
  %535 = vmatprep.subr.mxu0 0.0
  %536 = vmatpush1.msra.mxu0 0.0
  %537 = vmatprep.subr.mxu0 0.0
  %538 = vmatpush1.msra.mxu0 0.0
  %539 = vmatprep.subr.mxu0 0.0
  %540 = vmatpush1.msra.mxu0 0.0
  %541 = vmatprep.subr.mxu0 0.0
  %542 = vmatpush1.msra.mxu0 0.0
  %543 = vmatprep.subr.mxu0 0.0
  %544 = vmatpush1.msra.mxu0 0.0
  %545 = vmatprep.subr.mxu0 0.0
  %546 = vmatpush1.msra.mxu0 0.0
  %547 = vmatprep.subr.mxu0 0.0
  %548 = vmatpush1.msra.mxu0 0.0
  %549 = vmatprep.subr.mxu0 0.0
  %550 = vmatpush1.msra.mxu0 0.0
  %551 = vmatprep.subr.mxu0 0.0
  %552 = vmatpush1.msra.mxu0 0.0
  %553 = vmatprep.subr.mxu0 0.0
  %554 = vmatpush1.msra.mxu0 0.0
  %555 = vmatprep.subr.mxu0 0.0
  %556 = vmatpush1.msra.mxu0 0.0
  %557 = vmatprep.subr.mxu0 0.0
  %558 = vmatpush1.msra.mxu0 0.0
  %559 = vmatprep.subr.mxu0 0.0
  %560 = vmatpush1.msra.mxu0 0.0
  %561 = vmatprep.subr.mxu0 0.0
  %562 = vmatpush1.msra.mxu0 0.0
  %563 = vmatprep.subr.mxu0 0.0
  %564 = vmatpush1.msra.mxu0 0.0
  %565 = vmatprep.mubr.f32.mxu0 0.0
  %566 = vmatmul.mubr.f32.gmra.mrb[0].mxu0 %v499
  %v567 = vpop.f32.mrb[0].mxu0
  %v568 = vadd.f32 0.0, %v567
  %v569 = vpop.f32.mrb[0].mxu0
  %570 = vdwg.mxu0
  %vm571 = vcmask 1041408
  %v572 = vsel %vm571, %v568, 0.0
  %573 = vadd.xlane.f32.xlu0 %v572
  %v574 = vpop.xlane.xlu0 %573
  %v575 = vsub.f32 0.0, %v574
  %v576 = vmul.f32 %v575, 1.442695
  %v577 = vpow.pop %v576
  %v578 = vadd.f32 %v577, 1.0
  %v579 = vrcp.pop %v578
  %v580 = vmul.f32 1.0, %v579
  %vm581 = vcmask 1024
  %582 = vst.msk [vmem:[%s6] sm:$0x3] %vm581, %v580
  // Predicated region
  $region26: #{_lambda_.7} parent=0 // pred_check
    _
  $region27: #{_lambda_.7} parent=0 // pred_check_branch
    %584 = sbr.rel (0) target = $region29
  $region28: #{_lambda_.7} parent=0 // pred_region
    _
  $region29: #{_lambda_.7} parent=0 // pred_fallthru
    _
  // Predicated region
  $region30: #{_lambda_.7} parent=0 // pred_check
    _
  $region31: #{_lambda_.7} parent=0 // pred_check_branch
    %586 = sbr.rel (0) target = $region33
  $region32: #{_lambda_.7} parent=0 // pred_region
    _
  $region33: #{_lambda_.7} parent=0 // pred_fallthru
    _

</llo_original>
